<compile_context>
chip_gen: v5e
topology: v5e:2x2
jax: 0.10.0
libtpu: 0.0.40
codegen_flags: <defaults>
</compile_context>

<pallas_src>
import jax
import jax.numpy as jnp
from jax.experimental import pallas as pl
from jax.experimental.pallas import tpu as pltpu


def _round_up(n, m):
    return ((n + m - 1) // m) * m


def _cdiv(a, b):
    return -(-a // b)


def _device_kind():
    try:
        d = jax.devices()[0]
        if d.platform == "tpu":
            return d.device_kind.lower()
    except Exception:
        pass
    return ""


def _has_bf16_vpu(kind):
    # v6e / v7x have a bf16 VALU; v5e and older do not -> keep f32 there.
    return ("v6" in kind) or ("v7" in kind)


def _is_megacore(kind):
    # Chips whose "parallel" grid axes are sharded across >1 TensorCore.
    return ("v4" in kind) or ("v5p" in kind) or ("v7" in kind)


def _make_kernel(T, H, n_rest_hidden, first_has_bias, vpu_final, mxu_dtype):
    """Fused: LocalLayers (combinor folded into w_out/b_out) + first connected
    matmul (K-accumulated over gene tiles) + remaining ConnectedLayers on the
    last K step."""

    def kernel(*refs):
        (x_ref, wi_ref, bi_ref, wo_ref, bo_ref, cb_ref, w1_ref) = refs[:7]
        pos = 7
        b1_ref = None
        if first_has_bias:
            b1_ref = refs[pos]
            pos += 1
        rest_refs = refs[pos:-2]
        o_ref = refs[-2]
        acc_ref = refs[-1]

        k = pl.program_id(1)

        @pl.when(k == 0)
        def _init():
            acc_ref[...] = jnp.zeros_like(acc_ref)

        # ---- LocalLayers: per-(gene, tech) SingleShallow 1 -> H -> 1, with
        #      the combinor weight already folded into w_out / b_out so the
        #      combinor reduces to a sum over T plus comb_b.
        wi = wi_ref[...]                      # (H, T, TK), local dtype
        bi = bi_ref[...]
        wo = wo_ref[...]                      # comb_w folded in
        bo = bo_ref[...]                      # (T, TK), comb_w folded in
        zero = jnp.zeros((), wi.dtype)

        local = None
        for t in range(T):                    # static unroll, T small
            xt = x_ref[t]                     # (TS, TK)
            zt = None
            for h in range(H):                # static unroll, H small
                a = jnp.maximum(xt * wi[h, t] + bi[h, t], zero)
                term = wo[h, t] * a
                zt = term if zt is None else zt + term
            zt = zt + bo[t]
            local = zt if local is None else local + zt
        local = local + cb_ref[0]             # (TS, TK)

        # ---- first connected layer: accumulate over gene (K) tiles on MXU.
        acc_ref[...] += jnp.dot(local.astype(mxu_dtype), w1_ref[...],
                                preferred_element_type=jnp.float32)

        # ---- finalize on the last K step: remaining ConnectedLayers.
        @pl.when(k == pl.num_programs(1) - 1)
        def _finalize():
            y = acc_ref[...]
            if first_has_bias:
                y = jnp.maximum(y + b1_ref[...], 0.0)
                idx = 0
                for _ in range(n_rest_hidden):
                    w = rest_refs[idx][...]
                    b = rest_refs[idx + 1][...]
                    idx += 2
                    y = jnp.maximum(
                        jnp.dot(y, w, preferred_element_type=jnp.float32) + b,
                        0.0)
                wf = rest_refs[idx][...]
                if vpu_final:
                    # final_size == 1: (1, n_last) row -> VPU mul + lane reduce
                    # instead of an N=1 MXU push.
                    y = jnp.sum(y * wf, axis=-1, keepdims=True)
                else:
                    y = jnp.dot(y, wf, preferred_element_type=jnp.float32)
            o_ref[...] = y.astype(o_ref.dtype)

    return kernel


def init_params(key, tech_layers, n_genes, hidden_size=4,
                shrinkage_factor=10, minimum_size=10, final_size=1):
    """Deterministic synthetic parameters matching the module's shapes.

    SingleShallow / combinor params are stacked over (gene, tech):
      w_in, b_in, w_out : (H, T, 1, G)
      b_out, comb_w     : (T, 1, G)
      comb_b            : (1, G)
    Connected layers: list of (W, b) with W pre-transposed to (n_in, n_out);
    last entry is (W_final, None) (bias=False).
    """
    T, G, H = tech_layers, n_genes, hidden_size
    keys = jax.random.split(key, 7)
    w_in = 0.5 * jax.random.normal(keys[0], (H, T, 1, G), jnp.float32)
    b_in = 0.1 * jax.random.normal(keys[1], (H, T, 1, G), jnp.float32)
    w_out = 0.5 * jax.random.normal(keys[2], (H, T, 1, G), jnp.float32)
    b_out = 0.1 * jax.random.normal(keys[3], (T, 1, G), jnp.float32)
    comb_w = 0.5 * jax.random.normal(keys[4], (T, 1, G), jnp.float32)
    comb_b = 0.1 * jax.random.normal(keys[5], (1, G), jnp.float32)

    conn = []
    n = n_genes
    k = keys[6]
    while minimum_size <= (n_out := n // shrinkage_factor):
        k, k1, k2 = jax.random.split(k, 3)
        conn.append((jax.random.normal(k1, (n, n_out), jnp.float32) / jnp.sqrt(n),
                     0.1 * jax.random.normal(k2, (n_out,), jnp.float32)))
        n = n_out
    k, k1 = jax.random.split(k)
    conn.append((jax.random.normal(k1, (n, final_size), jnp.float32) / jnp.sqrt(n),
                 None))
    return (w_in, b_in, w_out, b_out, comb_w, comb_b, conn)


def combined_aml_forward(x, params, *, ts=None, tk=None,
                         local_dtype=None, mxu_dtype=jnp.bfloat16):
    """x: (T, S, G) float32 -> (1, S, final_size) float32.

    local_dtype: dtype of the LocalLayers elementwise math (auto: bf16 on
    v6e/v7x, f32 elsewhere).  mxu_dtype: operand dtype of the first connected
    matmul (bf16 default; use jnp.float32 for accuracy-critical runs).
    """
    w_in, b_in, w_out, b_out, comb_w, comb_b, conn = params
    T, S, G = x.shape
    H = w_in.shape[0]

    kind = _device_kind()
    if local_dtype is None:
        local_dtype = jnp.bfloat16 if _has_bf16_vpu(kind) else jnp.float32

    # --- tile sizes --------------------------------------------------------
    # Sample tile: as large as possible => fewest sample tiles => W1 and the
    # per-gene params are streamed from HBM the fewest times.  On megacore
    # parts keep >= 2 sample tiles so the "parallel" axis feeds both cores.
    s16 = _round_up(S, 16)
    if ts is None:
        ts_eff = min(512, s16)
        if _is_megacore(kind) and s16 >= 32 and _cdiv(s16, ts_eff) < 2:
            ts_eff = min(ts_eff, _round_up(_cdiv(s16, 2), 16))
    else:
        ts_eff = min(_round_up(ts, 16), s16)
    if tk is None:
        tk = 1024
    tk_eff = min(_round_up(tk, 128), _round_up(G, 128))

    Sp = _round_up(S, ts_eff)
    Gp = _round_up(G, tk_eff)

    # --- fold the combinor weight into the SingleShallow output layer ------
    wo_f = w_out * comb_w[None]            # (H, T, 1, G)
    bo_f = b_out * comb_w                  # (T, 1, G)

    # --- dense per-gene param layout (drop the degenerate sublane dim) -----
    wi_d = w_in[:, :, 0, :]                # (H, T, G)
    bi_d = b_in[:, :, 0, :]
    wo_d = wo_f[:, :, 0, :]
    bo_d = bo_f[:, 0, :]                   # (T, G)
    cb_d = comb_b                          # (1, G)

    # --- zero-pad gene axis (exact: padded genes contribute 0) -------------
    pad_g = Gp - G
    if pad_g:
        x_p = jnp.pad(x, ((0, 0), (0, 0), (0, pad_g)))
        wi_d = jnp.pad(wi_d, ((0, 0), (0, 0), (0, pad_g)))
        bi_d = jnp.pad(bi_d, ((0, 0), (0, 0), (0, pad_g)))
        wo_d = jnp.pad(wo_d, ((0, 0), (0, 0), (0, pad_g)))
        bo_d = jnp.pad(bo_d, ((0, 0), (0, pad_g)))
        cb_d = jnp.pad(cb_d, ((0, 0), (0, pad_g)))
    else:
        x_p = x

    # --- zero-pad sample axis (padded rows sliced away afterwards) ---------
    pad_s = Sp - S
    if pad_s:
        x_p = jnp.pad(x_p, ((0, 0), (0, pad_s), (0, 0)))

    # --- elementwise-math dtype (halves the x HBM stream when bf16) --------
    x_p = x_p.astype(local_dtype)
    wi_d = wi_d.astype(local_dtype)
    bi_d = bi_d.astype(local_dtype)
    wo_d = wo_d.astype(local_dtype)
    bo_d = bo_d.astype(local_dtype)
    cb_d = cb_d.astype(local_dtype)

    # --- connected layers: first layer tiled over K, rest resident (tiny) --
    W1, b1 = conn[0]
    n1 = W1.shape[1]
    final_size = conn[-1][0].shape[1]
    first_has_bias = b1 is not None        # False only if conn == [final]

    # Lane-dense widths: pad n1 and downstream widths to multiples of 128
    # (zero cols/bias/rows), so accumulator/bias/ReLU/matmuls are unmasked.
    n1p = _round_up(n1, 128) if first_has_bias else n1
    W1p = jnp.pad(W1, ((0, pad_g), (0, n1p - n1))).astype(mxu_dtype)

    b1_inputs = []
    rest = []
    vpu_final = False
    if first_has_bias:
        b1_inputs.append(jnp.pad(b1, (0, n1p - n1)).reshape(1, n1p))
        prev, prev_p = n1, n1p
        for W, b in conn[1:-1]:
            n_out = W.shape[1]
            n_out_p = _round_up(n_out, 128)
            rest.append(jnp.pad(W, ((0, prev_p - prev), (0, n_out_p - n_out))))
            rest.append(jnp.pad(b, (0, n_out_p - n_out)).reshape(1, n_out_p))
            prev, prev_p = n_out, n_out_p
        Wfp = jnp.pad(conn[-1][0], ((0, prev_p - prev), (0, 0)))
        if final_size == 1:
            rest.append(Wfp.reshape(1, prev_p))   # (1, n_last) row -> VPU reduce
            vpu_final = True
        else:
            rest.append(Wfp)
    n_rest_hidden = max(len(conn) - 2, 0)

    n_s = Sp // ts_eff
    n_k = Gp // tk_eff

    in_specs = [
        pl.BlockSpec((T, ts_eff, tk_eff), lambda i, k: (0, i, k)),   # x
        pl.BlockSpec((H, T, tk_eff), lambda i, k: (0, 0, k)),        # w_in
        pl.BlockSpec((H, T, tk_eff), lambda i, k: (0, 0, k)),        # b_in
        pl.BlockSpec((H, T, tk_eff), lambda i, k: (0, 0, k)),        # w_out*comb_w
        pl.BlockSpec((T, tk_eff), lambda i, k: (0, k)),              # b_out*comb_w
        pl.BlockSpec((1, tk_eff), lambda i, k: (0, k)),              # comb_b
        pl.BlockSpec((tk_eff, n1p), lambda i, k: (k, 0)),            # W1 tile
    ]
    for a in b1_inputs + rest:                                       # tiny, resident
        in_specs.append(pl.BlockSpec(a.shape, lambda i, k: (0, 0)))

    # --- VMEM budget: footprint estimate with generation-aware headroom ----
    lb = jnp.dtype(local_dtype).itemsize
    mb = jnp.dtype(mxu_dtype).itemsize
    need = 2 * T * ts_eff * tk_eff * lb                   # x (double-buffered)
    need += 2 * (3 * H + 2) * 8 * tk_eff * lb             # per-gene params
    need += 2 * tk_eff * n1p * mb                         # W1 tile
    need += ts_eff * n1p * 4                              # f32 accumulator
    need += 2 * sum(int(a.size) * 4 for a in b1_inputs + rest)
    phys = (64 << 20) if ("v7" in kind or not kind) else (128 << 20)
    vmem_limit = int(max(32 << 20,
                         min(phys - (16 << 20), int(need * 1.5) + (8 << 20))))

    kernel = _make_kernel(T, H, n_rest_hidden, first_has_bias, vpu_final,
                          mxu_dtype)

    out = pl.pallas_call(
        kernel,
        out_shape=jax.ShapeDtypeStruct((Sp, final_size), jnp.float32),
        grid_spec=pltpu.PrefetchScalarGridSpec(
            num_scalar_prefetch=0,
            grid=(n_s, n_k),
            in_specs=in_specs,
            out_specs=pl.BlockSpec((ts_eff, final_size), lambda i, k: (i, 0)),
            scratch_shapes=[pltpu.VMEM((ts_eff, n1p), jnp.float32)]),
        compiler_params=pltpu.CompilerParams(
            dimension_semantics=("parallel", "arbitrary"),
            vmem_limit_bytes=vmem_limit),
    )(x_p, wi_d, bi_d, wo_d, bo_d, cb_d, W1p, *b1_inputs, *rest)

    # PyTorch forward on a (T, S, G) input yields shape (1, S, final_size).
    return out[:S].reshape(1, S, final_size)


def reference_forward(x, params, local_dtype=jnp.float32,
                      mxu_dtype=jnp.bfloat16):
    """Pure-JAX reference mirroring the PyTorch forward semantics with the
    same dtype choices the kernel makes (local_dtype elementwise math, first
    connected matmul in mxu_dtype with f32 accumulation)."""
    w_in, b_in, w_out, b_out, comb_w, comb_b, conn = params
    cdt = local_dtype
    xl = x.astype(cdt)
    pre = xl[None] * w_in.astype(cdt) + b_in.astype(cdt)             # (H,T,S,G)
    act = jnp.maximum(pre, jnp.zeros((), cdt))
    z = jnp.sum((w_out * comb_w[None]).astype(cdt) * act, axis=0) \
        + (b_out * comb_w).astype(cdt)                               # (T,S,G)
    local = jnp.sum(z, axis=0) + comb_b.astype(cdt)                  # (S,G)

    W1, b1 = conn[0]
    y = jnp.dot(local.astype(mxu_dtype), W1.astype(mxu_dtype),
                preferred_element_type=jnp.float32)
    if b1 is not None:
        y = jnp.maximum(y + b1, 0.0)
        for W, b in conn[1:-1]:
            y = jnp.maximum(y @ W + b, 0.0)
        y = y @ conn[-1][0]
    return y.reshape(1, x.shape[1], -1)


if __name__ == "__main__":
    # Small shapes consistent with the module, chosen to exercise tiling and
    # padding: tech_layers=3, samples=300 (-> 320 = 2 sample tiles of 160),
    # n_genes=200 (-> 256 = 2 gene/K tiles of 128), hidden_size=4,
    # shrinkage_factor=4, minimum_size=10 -> connected: 200 -> 50 -> 12 -> 1.
    T, S, G, H = 3, 300, 200, 4

    key = jax.random.PRNGKey(0)
    kx, kp = jax.random.split(key)
    x = jax.random.normal(kx, (T, S, G), jnp.float32)

    params = init_params(kp, tech_layers=T, n_genes=G, hidden_size=H,
                         shrinkage_factor=4, minimum_size=10, final_size=1)

    kind = _device_kind()
    local_dtype = jnp.bfloat16 if _has_bf16_vpu(kind) else jnp.float32

    out = combined_aml_forward(x, params, ts=160, tk=128,
                               local_dtype=local_dtype)
    out = jax.block_until_ready(out)

    ref = reference_forward(x, params, local_dtype=local_dtype)
    assert out.shape == (1, S, 1), out.shape
    tol = 3e-2 if local_dtype == jnp.bfloat16 else 2e-3
    err = float(jnp.max(jnp.abs(out - ref)))
    assert jnp.allclose(out, ref, atol=tol, rtol=tol), err

    print("KERNEL_OK")
</pallas_src>

<mosaic_0001>
module attributes {stable_mosaic.version = 11 : i64} {
  func.func @kernel(%arg0: i32, %arg1: i32, %arg2: memref<3x160x128xf32, #tpu.memory_space<vmem>>, %arg3: memref<4x3x128xf32, #tpu.memory_space<vmem>>, %arg4: memref<4x3x128xf32, #tpu.memory_space<vmem>>, %arg5: memref<4x3x128xf32, #tpu.memory_space<vmem>>, %arg6: memref<3x128xf32, #tpu.memory_space<vmem>>, %arg7: memref<1x128xf32, #tpu.memory_space<vmem>>, %arg8: memref<128x128xbf16, #tpu.memory_space<vmem>>, %arg9: memref<1x128xf32, #tpu.memory_space<vmem>>, %arg10: memref<128x128xf32, #tpu.memory_space<vmem>>, %arg11: memref<1x128xf32, #tpu.memory_space<vmem>>, %arg12: memref<1x128xf32, #tpu.memory_space<vmem>>, %arg13: memref<160x1xf32, #tpu.memory_space<vmem>>, %arg14: memref<160x128xf32, #tpu.memory_space<vmem>>) attributes {dimension_semantics = [#tpu.dimension_semantics<parallel>, #tpu.dimension_semantics<arbitrary>], iteration_bounds = array<i64: 2, 2>, scalar_prefetch = 0 : i64, scratch_operands = 1 : i64, tpu.core_type = #tpu.core_type<tc>, window_params = [{transform_indices = @transform_0, window_bounds = array<i64: 3, 160, 128>}, {transform_indices = @transform_1, window_bounds = array<i64: 4, 3, 128>}, {transform_indices = @transform_2, window_bounds = array<i64: 4, 3, 128>}, {transform_indices = @transform_3, window_bounds = array<i64: 4, 3, 128>}, {transform_indices = @transform_4, window_bounds = array<i64: 3, 128>}, {transform_indices = @transform_5, window_bounds = array<i64: 1, 128>}, {transform_indices = @transform_6, window_bounds = array<i64: 128, 128>}, {pipeline_mode = #tpu.pipeline_mode<synchronous>, transform_indices = @transform_7, window_bounds = array<i64: 1, 128>}, {pipeline_mode = #tpu.pipeline_mode<synchronous>, transform_indices = @transform_8, window_bounds = array<i64: 128, 128>}, {pipeline_mode = #tpu.pipeline_mode<synchronous>, transform_indices = @transform_9, window_bounds = array<i64: 1, 128>}, {pipeline_mode = #tpu.pipeline_mode<synchronous>, transform_indices = @transform_10, window_bounds = array<i64: 1, 128>}, {transform_indices = @transform_11, window_bounds = array<i64: 160, 1>}]} {
    %c0_i32 = arith.constant 0 : i32
    %0 = arith.cmpi eq, %arg1, %c0_i32 : i32
    %1 = arith.extui %0 : i1 to i32
    %c0_i32_0 = arith.constant 0 : i32
    %2 = arith.cmpi ne, %1, %c0_i32_0 : i32
    scf.if %2 {
      %cst_39 = arith.constant 0.000000e+00 : f32
      %257 = vector.broadcast %cst_39 : f32 to vector<160x128xf32>
      %c0_40 = arith.constant 0 : index
      %c0_41 = arith.constant 0 : index
      %258 = vector.load %arg14[%c0_40, %c0_41] : memref<160x128xf32, #tpu.memory_space<vmem>>, vector<160x128xf32>
      tpu.vector_store %arg14[%c0_40, %c0_41], %257 {strides = array<i32>} : memref<160x128xf32, #tpu.memory_space<vmem>>, vector<160x128xf32>,
    } else {
    }
    %c0 = arith.constant 0 : index
    %c0_1 = arith.constant 0 : index
    %c0_2 = arith.constant 0 : index
    %3 = vector.load %arg3[%c0, %c0_1, %c0_2] : memref<4x3x128xf32, #tpu.memory_space<vmem>>, vector<4x3x128xf32>
    %c0_3 = arith.constant 0 : index
    %c0_4 = arith.constant 0 : index
    %c0_5 = arith.constant 0 : index
    %4 = vector.load %arg4[%c0_3, %c0_4, %c0_5] : memref<4x3x128xf32, #tpu.memory_space<vmem>>, vector<4x3x128xf32>
    %c0_6 = arith.constant 0 : index
    %c0_7 = arith.constant 0 : index
    %c0_8 = arith.constant 0 : index
    %5 = vector.load %arg5[%c0_6, %c0_7, %c0_8] : memref<4x3x128xf32, #tpu.memory_space<vmem>>, vector<4x3x128xf32>
    %c0_9 = arith.constant 0 : index
    %c0_10 = arith.constant 0 : index
    %6 = vector.load %arg6[%c0_9, %c0_10] : memref<3x128xf32, #tpu.memory_space<vmem>>, vector<3x128xf32>
    %c0_11 = arith.constant 0 : index
    %c0_12 = arith.constant 0 : index
    %c0_13 = arith.constant 0 : index
    %7 = vector.load %arg2[%c0_11, %c0_12, %c0_13] : memref<3x160x128xf32, #tpu.memory_space<vmem>>, vector<1x160x128xf32>
    %8 = vector.shape_cast %7 : vector<1x160x128xf32> to vector<160x128xf32>
    %9 = vector.extract_strided_slice %3 {offsets = [0, 0, 0], sizes = [1, 1, 128], strides = [1, 1, 1]} : vector<4x3x128xf32> to vector<1x1x128xf32>
    %10 = vector.shape_cast %9 : vector<1x1x128xf32> to vector<128xf32>
    %11 = vector.shape_cast %10 : vector<128xf32> to vector<1x128xf32>
    %12 = vector.broadcast %11 : vector<1x128xf32> to vector<160x128xf32>
    %13 = arith.mulf %8, %12 : vector<160x128xf32>
    %14 = vector.extract_strided_slice %4 {offsets = [0, 0, 0], sizes = [1, 1, 128], strides = [1, 1, 1]} : vector<4x3x128xf32> to vector<1x1x128xf32>
    %15 = vector.shape_cast %14 : vector<1x1x128xf32> to vector<128xf32>
    %16 = vector.shape_cast %15 : vector<128xf32> to vector<1x128xf32>
    %17 = vector.broadcast %16 : vector<1x128xf32> to vector<160x128xf32>
    %18 = arith.addf %13, %17 : vector<160x128xf32>
    %cst = arith.constant 0.000000e+00 : f32
    %19 = vector.broadcast %cst : f32 to vector<160x128xf32>
    %20 = arith.maximumf %18, %19 : vector<160x128xf32>
    %21 = vector.extract_strided_slice %5 {offsets = [0, 0, 0], sizes = [1, 1, 128], strides = [1, 1, 1]} : vector<4x3x128xf32> to vector<1x1x128xf32>
    %22 = vector.shape_cast %21 : vector<1x1x128xf32> to vector<128xf32>
    %23 = vector.shape_cast %22 : vector<128xf32> to vector<1x128xf32>
    %24 = vector.broadcast %23 : vector<1x128xf32> to vector<160x128xf32>
    %25 = arith.mulf %24, %20 : vector<160x128xf32>
    %26 = vector.extract_strided_slice %3 {offsets = [1, 0, 0], sizes = [1, 1, 128], strides = [1, 1, 1]} : vector<4x3x128xf32> to vector<1x1x128xf32>
    %27 = vector.shape_cast %26 : vector<1x1x128xf32> to vector<128xf32>
    %28 = vector.shape_cast %27 : vector<128xf32> to vector<1x128xf32>
    %29 = vector.broadcast %28 : vector<1x128xf32> to vector<160x128xf32>
    %30 = arith.mulf %8, %29 : vector<160x128xf32>
    %31 = vector.extract_strided_slice %4 {offsets = [1, 0, 0], sizes = [1, 1, 128], strides = [1, 1, 1]} : vector<4x3x128xf32> to vector<1x1x128xf32>
    %32 = vector.shape_cast %31 : vector<1x1x128xf32> to vector<128xf32>
    %33 = vector.shape_cast %32 : vector<128xf32> to vector<1x128xf32>
    %34 = vector.broadcast %33 : vector<1x128xf32> to vector<160x128xf32>
    %35 = arith.addf %30, %34 : vector<160x128xf32>
    %cst_14 = arith.constant 0.000000e+00 : f32
    %36 = vector.broadcast %cst_14 : f32 to vector<160x128xf32>
    %37 = arith.maximumf %35, %36 : vector<160x128xf32>
    %38 = vector.extract_strided_slice %5 {offsets = [1, 0, 0], sizes = [1, 1, 128], strides = [1, 1, 1]} : vector<4x3x128xf32> to vector<1x1x128xf32>
    %39 = vector.shape_cast %38 : vector<1x1x128xf32> to vector<128xf32>
    %40 = vector.shape_cast %39 : vector<128xf32> to vector<1x128xf32>
    %41 = vector.broadcast %40 : vector<1x128xf32> to vector<160x128xf32>
    %42 = arith.mulf %41, %37 : vector<160x128xf32>
    %43 = arith.addf %25, %42 : vector<160x128xf32>
    %44 = vector.extract_strided_slice %3 {offsets = [2, 0, 0], sizes = [1, 1, 128], strides = [1, 1, 1]} : vector<4x3x128xf32> to vector<1x1x128xf32>
    %45 = vector.shape_cast %44 : vector<1x1x128xf32> to vector<128xf32>
    %46 = vector.shape_cast %45 : vector<128xf32> to vector<1x128xf32>
    %47 = vector.broadcast %46 : vector<1x128xf32> to vector<160x128xf32>
    %48 = arith.mulf %8, %47 : vector<160x128xf32>
    %49 = vector.extract_strided_slice %4 {offsets = [2, 0, 0], sizes = [1, 1, 128], strides = [1, 1, 1]} : vector<4x3x128xf32> to vector<1x1x128xf32>
    %50 = vector.shape_cast %49 : vector<1x1x128xf32> to vector<128xf32>
    %51 = vector.shape_cast %50 : vector<128xf32> to vector<1x128xf32>
    %52 = vector.broadcast %51 : vector<1x128xf32> to vector<160x128xf32>
    %53 = arith.addf %48, %52 : vector<160x128xf32>
    %cst_15 = arith.constant 0.000000e+00 : f32
    %54 = vector.broadcast %cst_15 : f32 to vector<160x128xf32>
    %55 = arith.maximumf %53, %54 : vector<160x128xf32>
    %56 = vector.extract_strided_slice %5 {offsets = [2, 0, 0], sizes = [1, 1, 128], strides = [1, 1, 1]} : vector<4x3x128xf32> to vector<1x1x128xf32>
    %57 = vector.shape_cast %56 : vector<1x1x128xf32> to vector<128xf32>
    %58 = vector.shape_cast %57 : vector<128xf32> to vector<1x128xf32>
    %59 = vector.broadcast %58 : vector<1x128xf32> to vector<160x128xf32>
    %60 = arith.mulf %59, %55 : vector<160x128xf32>
    %61 = arith.addf %43, %60 : vector<160x128xf32>
    %62 = vector.extract_strided_slice %3 {offsets = [3, 0, 0], sizes = [1, 1, 128], strides = [1, 1, 1]} : vector<4x3x128xf32> to vector<1x1x128xf32>
    %63 = vector.shape_cast %62 : vector<1x1x128xf32> to vector<128xf32>
    %64 = vector.shape_cast %63 : vector<128xf32> to vector<1x128xf32>
    %65 = vector.broadcast %64 : vector<1x128xf32> to vector<160x128xf32>
    %66 = arith.mulf %8, %65 : vector<160x128xf32>
    %67 = vector.extract_strided_slice %4 {offsets = [3, 0, 0], sizes = [1, 1, 128], strides = [1, 1, 1]} : vector<4x3x128xf32> to vector<1x1x128xf32>
    %68 = vector.shape_cast %67 : vector<1x1x128xf32> to vector<128xf32>
    %69 = vector.shape_cast %68 : vector<128xf32> to vector<1x128xf32>
    %70 = vector.broadcast %69 : vector<1x128xf32> to vector<160x128xf32>
    %71 = arith.addf %66, %70 : vector<160x128xf32>
    %cst_16 = arith.constant 0.000000e+00 : f32
    %72 = vector.broadcast %cst_16 : f32 to vector<160x128xf32>
    %73 = arith.maximumf %71, %72 : vector<160x128xf32>
    %74 = vector.extract_strided_slice %5 {offsets = [3, 0, 0], sizes = [1, 1, 128], strides = [1, 1, 1]} : vector<4x3x128xf32> to vector<1x1x128xf32>
    %75 = vector.shape_cast %74 : vector<1x1x128xf32> to vector<128xf32>
    %76 = vector.shape_cast %75 : vector<128xf32> to vector<1x128xf32>
    %77 = vector.broadcast %76 : vector<1x128xf32> to vector<160x128xf32>
    %78 = arith.mulf %77, %73 : vector<160x128xf32>
    %79 = arith.addf %61, %78 : vector<160x128xf32>
    %80 = vector.extract_strided_slice %6 {offsets = [0, 0], sizes = [1, 128], strides = [1, 1]} : vector<3x128xf32> to vector<1x128xf32>
    %81 = vector.shape_cast %80 : vector<1x128xf32> to vector<128xf32>
    %82 = vector.shape_cast %81 : vector<128xf32> to vector<1x128xf32>
    %83 = vector.broadcast %82 : vector<1x128xf32> to vector<160x128xf32>
    %84 = arith.addf %79, %83 : vector<160x128xf32>
    %c1 = arith.constant 1 : index
    %c0_17 = arith.constant 0 : index
    %c0_18 = arith.constant 0 : index
    %85 = vector.load %arg2[%c1, %c0_17, %c0_18] : memref<3x160x128xf32, #tpu.memory_space<vmem>>, vector<1x160x128xf32>
    %86 = vector.shape_cast %85 : vector<1x160x128xf32> to vector<160x128xf32>
    %87 = vector.extract_strided_slice %3 {offsets = [0, 1, 0], sizes = [1, 1, 128], strides = [1, 1, 1]} : vector<4x3x128xf32> to vector<1x1x128xf32>
    %88 = vector.shape_cast %87 : vector<1x1x128xf32> to vector<128xf32>
    %89 = vector.shape_cast %88 : vector<128xf32> to vector<1x128xf32>
    %90 = vector.broadcast %89 : vector<1x128xf32> to vector<160x128xf32>
    %91 = arith.mulf %86, %90 : vector<160x128xf32>
    %92 = vector.extract_strided_slice %4 {offsets = [0, 1, 0], sizes = [1, 1, 128], strides = [1, 1, 1]} : vector<4x3x128xf32> to vector<1x1x128xf32>
    %93 = vector.shape_cast %92 : vector<1x1x128xf32> to vector<128xf32>
    %94 = vector.shape_cast %93 : vector<128xf32> to vector<1x128xf32>
    %95 = vector.broadcast %94 : vector<1x128xf32> to vector<160x128xf32>
    %96 = arith.addf %91, %95 : vector<160x128xf32>
    %cst_19 = arith.constant 0.000000e+00 : f32
    %97 = vector.broadcast %cst_19 : f32 to vector<160x128xf32>
    %98 = arith.maximumf %96, %97 : vector<160x128xf32>
    %99 = vector.extract_strided_slice %5 {offsets = [0, 1, 0], sizes = [1, 1, 128], strides = [1, 1, 1]} : vector<4x3x128xf32> to vector<1x1x128xf32>
    %100 = vector.shape_cast %99 : vector<1x1x128xf32> to vector<128xf32>
    %101 = vector.shape_cast %100 : vector<128xf32> to vector<1x128xf32>
    %102 = vector.broadcast %101 : vector<1x128xf32> to vector<160x128xf32>
    %103 = arith.mulf %102, %98 : vector<160x128xf32>
    %104 = vector.extract_strided_slice %3 {offsets = [1, 1, 0], sizes = [1, 1, 128], strides = [1, 1, 1]} : vector<4x3x128xf32> to vector<1x1x128xf32>
    %105 = vector.shape_cast %104 : vector<1x1x128xf32> to vector<128xf32>
    %106 = vector.shape_cast %105 : vector<128xf32> to vector<1x128xf32>
    %107 = vector.broadcast %106 : vector<1x128xf32> to vector<160x128xf32>
    %108 = arith.mulf %86, %107 : vector<160x128xf32>
    %109 = vector.extract_strided_slice %4 {offsets = [1, 1, 0], sizes = [1, 1, 128], strides = [1, 1, 1]} : vector<4x3x128xf32> to vector<1x1x128xf32>
    %110 = vector.shape_cast %109 : vector<1x1x128xf32> to vector<128xf32>
    %111 = vector.shape_cast %110 : vector<128xf32> to vector<1x128xf32>
    %112 = vector.broadcast %111 : vector<1x128xf32> to vector<160x128xf32>
    %113 = arith.addf %108, %112 : vector<160x128xf32>
    %cst_20 = arith.constant 0.000000e+00 : f32
    %114 = vector.broadcast %cst_20 : f32 to vector<160x128xf32>
    %115 = arith.maximumf %113, %114 : vector<160x128xf32>
    %116 = vector.extract_strided_slice %5 {offsets = [1, 1, 0], sizes = [1, 1, 128], strides = [1, 1, 1]} : vector<4x3x128xf32> to vector<1x1x128xf32>
    %117 = vector.shape_cast %116 : vector<1x1x128xf32> to vector<128xf32>
    %118 = vector.shape_cast %117 : vector<128xf32> to vector<1x128xf32>
    %119 = vector.broadcast %118 : vector<1x128xf32> to vector<160x128xf32>
    %120 = arith.mulf %119, %115 : vector<160x128xf32>
    %121 = arith.addf %103, %120 : vector<160x128xf32>
    %122 = vector.extract_strided_slice %3 {offsets = [2, 1, 0], sizes = [1, 1, 128], strides = [1, 1, 1]} : vector<4x3x128xf32> to vector<1x1x128xf32>
    %123 = vector.shape_cast %122 : vector<1x1x128xf32> to vector<128xf32>
    %124 = vector.shape_cast %123 : vector<128xf32> to vector<1x128xf32>
    %125 = vector.broadcast %124 : vector<1x128xf32> to vector<160x128xf32>
    %126 = arith.mulf %86, %125 : vector<160x128xf32>
    %127 = vector.extract_strided_slice %4 {offsets = [2, 1, 0], sizes = [1, 1, 128], strides = [1, 1, 1]} : vector<4x3x128xf32> to vector<1x1x128xf32>
    %128 = vector.shape_cast %127 : vector<1x1x128xf32> to vector<128xf32>
    %129 = vector.shape_cast %128 : vector<128xf32> to vector<1x128xf32>
    %130 = vector.broadcast %129 : vector<1x128xf32> to vector<160x128xf32>
    %131 = arith.addf %126, %130 : vector<160x128xf32>
    %cst_21 = arith.constant 0.000000e+00 : f32
    %132 = vector.broadcast %cst_21 : f32 to vector<160x128xf32>
    %133 = arith.maximumf %131, %132 : vector<160x128xf32>
    %134 = vector.extract_strided_slice %5 {offsets = [2, 1, 0], sizes = [1, 1, 128], strides = [1, 1, 1]} : vector<4x3x128xf32> to vector<1x1x128xf32>
    %135 = vector.shape_cast %134 : vector<1x1x128xf32> to vector<128xf32>
    %136 = vector.shape_cast %135 : vector<128xf32> to vector<1x128xf32>
    %137 = vector.broadcast %136 : vector<1x128xf32> to vector<160x128xf32>
    %138 = arith.mulf %137, %133 : vector<160x128xf32>
    %139 = arith.addf %121, %138 : vector<160x128xf32>
    %140 = vector.extract_strided_slice %3 {offsets = [3, 1, 0], sizes = [1, 1, 128], strides = [1, 1, 1]} : vector<4x3x128xf32> to vector<1x1x128xf32>
    %141 = vector.shape_cast %140 : vector<1x1x128xf32> to vector<128xf32>
    %142 = vector.shape_cast %141 : vector<128xf32> to vector<1x128xf32>
    %143 = vector.broadcast %142 : vector<1x128xf32> to vector<160x128xf32>
    %144 = arith.mulf %86, %143 : vector<160x128xf32>
    %145 = vector.extract_strided_slice %4 {offsets = [3, 1, 0], sizes = [1, 1, 128], strides = [1, 1, 1]} : vector<4x3x128xf32> to vector<1x1x128xf32>
    %146 = vector.shape_cast %145 : vector<1x1x128xf32> to vector<128xf32>
    %147 = vector.shape_cast %146 : vector<128xf32> to vector<1x128xf32>
    %148 = vector.broadcast %147 : vector<1x128xf32> to vector<160x128xf32>
    %149 = arith.addf %144, %148 : vector<160x128xf32>
    %cst_22 = arith.constant 0.000000e+00 : f32
    %150 = vector.broadcast %cst_22 : f32 to vector<160x128xf32>
    %151 = arith.maximumf %149, %150 : vector<160x128xf32>
    %152 = vector.extract_strided_slice %5 {offsets = [3, 1, 0], sizes = [1, 1, 128], strides = [1, 1, 1]} : vector<4x3x128xf32> to vector<1x1x128xf32>
    %153 = vector.shape_cast %152 : vector<1x1x128xf32> to vector<128xf32>
    %154 = vector.shape_cast %153 : vector<128xf32> to vector<1x128xf32>
    %155 = vector.broadcast %154 : vector<1x128xf32> to vector<160x128xf32>
    %156 = arith.mulf %155, %151 : vector<160x128xf32>
    %157 = arith.addf %139, %156 : vector<160x128xf32>
    %158 = vector.extract_strided_slice %6 {offsets = [1, 0], sizes = [1, 128], strides = [1, 1]} : vector<3x128xf32> to vector<1x128xf32>
    %159 = vector.shape_cast %158 : vector<1x128xf32> to vector<128xf32>
    %160 = vector.shape_cast %159 : vector<128xf32> to vector<1x128xf32>
    %161 = vector.broadcast %160 : vector<1x128xf32> to vector<160x128xf32>
    %162 = arith.addf %157, %161 : vector<160x128xf32>
    %163 = arith.addf %84, %162 : vector<160x128xf32>
    %c2 = arith.constant 2 : index
    %c0_23 = arith.constant 0 : index
    %c0_24 = arith.constant 0 : index
    %164 = vector.load %arg2[%c2, %c0_23, %c0_24] : memref<3x160x128xf32, #tpu.memory_space<vmem>>, vector<1x160x128xf32>
    %165 = vector.shape_cast %164 : vector<1x160x128xf32> to vector<160x128xf32>
    %166 = vector.extract_strided_slice %3 {offsets = [0, 2, 0], sizes = [1, 1, 128], strides = [1, 1, 1]} : vector<4x3x128xf32> to vector<1x1x128xf32>
    %167 = vector.shape_cast %166 : vector<1x1x128xf32> to vector<128xf32>
    %168 = vector.shape_cast %167 : vector<128xf32> to vector<1x128xf32>
    %169 = vector.broadcast %168 : vector<1x128xf32> to vector<160x128xf32>
    %170 = arith.mulf %165, %169 : vector<160x128xf32>
    %171 = vector.extract_strided_slice %4 {offsets = [0, 2, 0], sizes = [1, 1, 128], strides = [1, 1, 1]} : vector<4x3x128xf32> to vector<1x1x128xf32>
    %172 = vector.shape_cast %171 : vector<1x1x128xf32> to vector<128xf32>
    %173 = vector.shape_cast %172 : vector<128xf32> to vector<1x128xf32>
    %174 = vector.broadcast %173 : vector<1x128xf32> to vector<160x128xf32>
    %175 = arith.addf %170, %174 : vector<160x128xf32>
    %cst_25 = arith.constant 0.000000e+00 : f32
    %176 = vector.broadcast %cst_25 : f32 to vector<160x128xf32>
    %177 = arith.maximumf %175, %176 : vector<160x128xf32>
    %178 = vector.extract_strided_slice %5 {offsets = [0, 2, 0], sizes = [1, 1, 128], strides = [1, 1, 1]} : vector<4x3x128xf32> to vector<1x1x128xf32>
    %179 = vector.shape_cast %178 : vector<1x1x128xf32> to vector<128xf32>
    %180 = vector.shape_cast %179 : vector<128xf32> to vector<1x128xf32>
    %181 = vector.broadcast %180 : vector<1x128xf32> to vector<160x128xf32>
    %182 = arith.mulf %181, %177 : vector<160x128xf32>
    %183 = vector.extract_strided_slice %3 {offsets = [1, 2, 0], sizes = [1, 1, 128], strides = [1, 1, 1]} : vector<4x3x128xf32> to vector<1x1x128xf32>
    %184 = vector.shape_cast %183 : vector<1x1x128xf32> to vector<128xf32>
    %185 = vector.shape_cast %184 : vector<128xf32> to vector<1x128xf32>
    %186 = vector.broadcast %185 : vector<1x128xf32> to vector<160x128xf32>
    %187 = arith.mulf %165, %186 : vector<160x128xf32>
    %188 = vector.extract_strided_slice %4 {offsets = [1, 2, 0], sizes = [1, 1, 128], strides = [1, 1, 1]} : vector<4x3x128xf32> to vector<1x1x128xf32>
    %189 = vector.shape_cast %188 : vector<1x1x128xf32> to vector<128xf32>
    %190 = vector.shape_cast %189 : vector<128xf32> to vector<1x128xf32>
    %191 = vector.broadcast %190 : vector<1x128xf32> to vector<160x128xf32>
    %192 = arith.addf %187, %191 : vector<160x128xf32>
    %cst_26 = arith.constant 0.000000e+00 : f32
    %193 = vector.broadcast %cst_26 : f32 to vector<160x128xf32>
    %194 = arith.maximumf %192, %193 : vector<160x128xf32>
    %195 = vector.extract_strided_slice %5 {offsets = [1, 2, 0], sizes = [1, 1, 128], strides = [1, 1, 1]} : vector<4x3x128xf32> to vector<1x1x128xf32>
    %196 = vector.shape_cast %195 : vector<1x1x128xf32> to vector<128xf32>
    %197 = vector.shape_cast %196 : vector<128xf32> to vector<1x128xf32>
    %198 = vector.broadcast %197 : vector<1x128xf32> to vector<160x128xf32>
    %199 = arith.mulf %198, %194 : vector<160x128xf32>
    %200 = arith.addf %182, %199 : vector<160x128xf32>
    %201 = vector.extract_strided_slice %3 {offsets = [2, 2, 0], sizes = [1, 1, 128], strides = [1, 1, 1]} : vector<4x3x128xf32> to vector<1x1x128xf32>
    %202 = vector.shape_cast %201 : vector<1x1x128xf32> to vector<128xf32>
    %203 = vector.shape_cast %202 : vector<128xf32> to vector<1x128xf32>
    %204 = vector.broadcast %203 : vector<1x128xf32> to vector<160x128xf32>
    %205 = arith.mulf %165, %204 : vector<160x128xf32>
    %206 = vector.extract_strided_slice %4 {offsets = [2, 2, 0], sizes = [1, 1, 128], strides = [1, 1, 1]} : vector<4x3x128xf32> to vector<1x1x128xf32>
    %207 = vector.shape_cast %206 : vector<1x1x128xf32> to vector<128xf32>
    %208 = vector.shape_cast %207 : vector<128xf32> to vector<1x128xf32>
    %209 = vector.broadcast %208 : vector<1x128xf32> to vector<160x128xf32>
    %210 = arith.addf %205, %209 : vector<160x128xf32>
    %cst_27 = arith.constant 0.000000e+00 : f32
    %211 = vector.broadcast %cst_27 : f32 to vector<160x128xf32>
    %212 = arith.maximumf %210, %211 : vector<160x128xf32>
    %213 = vector.extract_strided_slice %5 {offsets = [2, 2, 0], sizes = [1, 1, 128], strides = [1, 1, 1]} : vector<4x3x128xf32> to vector<1x1x128xf32>
    %214 = vector.shape_cast %213 : vector<1x1x128xf32> to vector<128xf32>
    %215 = vector.shape_cast %214 : vector<128xf32> to vector<1x128xf32>
    %216 = vector.broadcast %215 : vector<1x128xf32> to vector<160x128xf32>
    %217 = arith.mulf %216, %212 : vector<160x128xf32>
    %218 = arith.addf %200, %217 : vector<160x128xf32>
    %219 = vector.extract_strided_slice %3 {offsets = [3, 2, 0], sizes = [1, 1, 128], strides = [1, 1, 1]} : vector<4x3x128xf32> to vector<1x1x128xf32>
    %220 = vector.shape_cast %219 : vector<1x1x128xf32> to vector<128xf32>
    %221 = vector.shape_cast %220 : vector<128xf32> to vector<1x128xf32>
    %222 = vector.broadcast %221 : vector<1x128xf32> to vector<160x128xf32>
    %223 = arith.mulf %165, %222 : vector<160x128xf32>
    %224 = vector.extract_strided_slice %4 {offsets = [3, 2, 0], sizes = [1, 1, 128], strides = [1, 1, 1]} : vector<4x3x128xf32> to vector<1x1x128xf32>
    %225 = vector.shape_cast %224 : vector<1x1x128xf32> to vector<128xf32>
    %226 = vector.shape_cast %225 : vector<128xf32> to vector<1x128xf32>
    %227 = vector.broadcast %226 : vector<1x128xf32> to vector<160x128xf32>
    %228 = arith.addf %223, %227 : vector<160x128xf32>
    %cst_28 = arith.constant 0.000000e+00 : f32
    %229 = vector.broadcast %cst_28 : f32 to vector<160x128xf32>
    %230 = arith.maximumf %228, %229 : vector<160x128xf32>
    %231 = vector.extract_strided_slice %5 {offsets = [3, 2, 0], sizes = [1, 1, 128], strides = [1, 1, 1]} : vector<4x3x128xf32> to vector<1x1x128xf32>
    %232 = vector.shape_cast %231 : vector<1x1x128xf32> to vector<128xf32>
    %233 = vector.shape_cast %232 : vector<128xf32> to vector<1x128xf32>
    %234 = vector.broadcast %233 : vector<1x128xf32> to vector<160x128xf32>
    %235 = arith.mulf %234, %230 : vector<160x128xf32>
    %236 = arith.addf %218, %235 : vector<160x128xf32>
    %237 = vector.extract_strided_slice %6 {offsets = [2, 0], sizes = [1, 128], strides = [1, 1]} : vector<3x128xf32> to vector<1x128xf32>
    %238 = vector.shape_cast %237 : vector<1x128xf32> to vector<128xf32>
    %239 = vector.shape_cast %238 : vector<128xf32> to vector<1x128xf32>
    %240 = vector.broadcast %239 : vector<1x128xf32> to vector<160x128xf32>
    %241 = arith.addf %236, %240 : vector<160x128xf32>
    %242 = arith.addf %163, %241 : vector<160x128xf32>
    %c0_29 = arith.constant 0 : index
    %c0_30 = arith.constant 0 : index
    %243 = vector.load %arg7[%c0_29, %c0_30] : memref<1x128xf32, #tpu.memory_space<vmem>>, vector<1x128xf32>
    %244 = vector.shape_cast %243 : vector<1x128xf32> to vector<128xf32>
    %245 = vector.shape_cast %244 : vector<128xf32> to vector<1x128xf32>
    %246 = vector.broadcast %245 : vector<1x128xf32> to vector<160x128xf32>
    %247 = arith.addf %242, %246 : vector<160x128xf32>
    %c0_31 = arith.constant 0 : index
    %c0_32 = arith.constant 0 : index
    %248 = vector.load %arg14[%c0_31, %c0_32] : memref<160x128xf32, #tpu.memory_space<vmem>>, vector<160x128xf32>
    %249 = arith.truncf %247 : vector<160x128xf32> to vector<160x128xbf16>
    %c0_33 = arith.constant 0 : index
    %c0_34 = arith.constant 0 : index
    %250 = vector.load %arg8[%c0_33, %c0_34] : memref<128x128xbf16, #tpu.memory_space<vmem>>, vector<128x128xbf16>
    %cst_35 = arith.constant dense<0.000000e+00> : vector<160x128xf32>
    %251 = tpu.matmul %249, %250, %cst_35 {dimension_numbers = #tpu.dot_dimension_numbers<[1], [0], [0], [1], [0, 0, 1, 1], [], []>} : vector<160x128xbf16>, vector<128x128xbf16>, vector<160x128xf32> -> vector<160x128xf32>
    %252 = arith.addf %248, %251 : vector<160x128xf32>
    %c0_36 = arith.constant 0 : index
    %c0_37 = arith.constant 0 : index
    %253 = vector.load %arg14[%c0_36, %c0_37] : memref<160x128xf32, #tpu.memory_space<vmem>>, vector<160x128xf32>
    tpu.vector_store %arg14[%c0_36, %c0_37], %252 {strides = array<i32>} : memref<160x128xf32, #tpu.memory_space<vmem>>, vector<160x128xf32>,
    %c1_i32 = arith.constant 1 : i32
    %254 = arith.cmpi eq, %arg1, %c1_i32 : i32
    %255 = arith.extui %254 : i1 to i32
    %c0_i32_38 = arith.constant 0 : i32
    %256 = arith.cmpi ne, %255, %c0_i32_38 : i32
    scf.if %256 {
      %c0_39 = arith.constant 0 : index
      %c0_40 = arith.constant 0 : index
      %257 = vector.load %arg14[%c0_39, %c0_40] : memref<160x128xf32, #tpu.memory_space<vmem>>, vector<160x128xf32>
      %c0_41 = arith.constant 0 : index
      %c0_42 = arith.constant 0 : index
      %258 = vector.load %arg9[%c0_41, %c0_42] : memref<1x128xf32, #tpu.memory_space<vmem>>, vector<1x128xf32>
      %259 = vector.broadcast %258 : vector<1x128xf32> to vector<160x128xf32>
      %260 = arith.addf %257, %259 : vector<160x128xf32>
      %cst_43 = arith.constant 0.000000e+00 : f32
      %261 = vector.broadcast %cst_43 : f32 to vector<160x128xf32>
      %262 = arith.maximumf %260, %261 : vector<160x128xf32>
      %c0_44 = arith.constant 0 : index
      %c0_45 = arith.constant 0 : index
      %263 = vector.load %arg10[%c0_44, %c0_45] : memref<128x128xf32, #tpu.memory_space<vmem>>, vector<128x128xf32>
      %c0_46 = arith.constant 0 : index
      %c0_47 = arith.constant 0 : index
      %264 = vector.load %arg11[%c0_46, %c0_47] : memref<1x128xf32, #tpu.memory_space<vmem>>, vector<1x128xf32>
      %cst_48 = arith.constant dense<0.000000e+00> : vector<160x128xf32>
      %265 = tpu.matmul %262, %263, %cst_48 {dimension_numbers = #tpu.dot_dimension_numbers<[1], [0], [0], [1], [0, 0, 1, 1], [], []>} : vector<160x128xf32>, vector<128x128xf32>, vector<160x128xf32> -> vector<160x128xf32>
      %266 = vector.broadcast %264 : vector<1x128xf32> to vector<160x128xf32>
      %267 = arith.addf %265, %266 : vector<160x128xf32>
      %cst_49 = arith.constant 0.000000e+00 : f32
      %268 = vector.broadcast %cst_49 : f32 to vector<160x128xf32>
      %269 = arith.maximumf %267, %268 : vector<160x128xf32>
      %c0_50 = arith.constant 0 : index
      %c0_51 = arith.constant 0 : index
      %270 = vector.load %arg12[%c0_50, %c0_51] : memref<1x128xf32, #tpu.memory_space<vmem>>, vector<1x128xf32>
      %271 = vector.broadcast %270 : vector<1x128xf32> to vector<160x128xf32>
      %272 = arith.mulf %269, %271 : vector<160x128xf32>
      %cst_52 = arith.constant dense<0.000000e+00> : vector<160xf32>
      %273 = vector.multi_reduction <add>, %272, %cst_52 [1] : vector<160x128xf32> to vector<160xf32>
      %274 = vector.shape_cast %273 : vector<160xf32> to vector<160x1xf32>
      %c0_53 = arith.constant 0 : index
      %c0_54 = arith.constant 0 : index
      %275 = vector.load %arg13[%c0_53, %c0_54] : memref<160x1xf32, #tpu.memory_space<vmem>>, vector<160x1xf32>
      tpu.vector_store %arg13[%c0_53, %c0_54], %274 {strides = array<i32>} : memref<160x1xf32, #tpu.memory_space<vmem>>, vector<160x1xf32>,
    } else {
    }
    return
  }
  func.func @transform_0(%arg0: i32, %arg1: i32) -> (i32, i32, i32) {
    %c0_i32 = arith.constant 0 : i32
    %c0_i32_0 = arith.constant 0 : i32
    return %c0_i32, %arg0, %arg1 : i32, i32, i32
  }
  func.func @transform_1(%arg0: i32, %arg1: i32) -> (i32, i32, i32) {
    %c0_i32 = arith.constant 0 : i32
    %c0_i32_0 = arith.constant 0 : i32
    %c0_i32_1 = arith.constant 0 : i32
    return %c0_i32, %c0_i32_0, %arg1 : i32, i32, i32
  }
  func.func @transform_2(%arg0: i32, %arg1: i32) -> (i32, i32, i32) {
    %c0_i32 = arith.constant 0 : i32
    %c0_i32_0 = arith.constant 0 : i32
    %c0_i32_1 = arith.constant 0 : i32
    return %c0_i32, %c0_i32_0, %arg1 : i32, i32, i32
  }
  func.func @transform_3(%arg0: i32, %arg1: i32) -> (i32, i32, i32) {
    %c0_i32 = arith.constant 0 : i32
    %c0_i32_0 = arith.constant 0 : i32
    %c0_i32_1 = arith.constant 0 : i32
    return %c0_i32, %c0_i32_0, %arg1 : i32, i32, i32
  }
  func.func @transform_4(%arg0: i32, %arg1: i32) -> (i32, i32) {
    %c0_i32 = arith.constant 0 : i32
    %c0_i32_0 = arith.constant 0 : i32
    return %c0_i32, %arg1 : i32, i32
  }
  func.func @transform_5(%arg0: i32, %arg1: i32) -> (i32, i32) {
    %c0_i32 = arith.constant 0 : i32
    %c0_i32_0 = arith.constant 0 : i32
    return %c0_i32, %arg1 : i32, i32
  }
  func.func @transform_6(%arg0: i32, %arg1: i32) -> (i32, i32) {
    %c0_i32 = arith.constant 0 : i32
    %c0_i32_0 = arith.constant 0 : i32
    return %arg1, %c0_i32 : i32, i32
  }
  func.func @transform_7(%arg0: i32, %arg1: i32) -> (i32, i32) {
    %c0_i32 = arith.constant 0 : i32
    %c0_i32_0 = arith.constant 0 : i32
    %c0_i32_1 = arith.constant 0 : i32
    return %c0_i32, %c0_i32_0 : i32, i32
  }
  func.func @transform_8(%arg0: i32, %arg1: i32) -> (i32, i32) {
    %c0_i32 = arith.constant 0 : i32
    %c0_i32_0 = arith.constant 0 : i32
    %c0_i32_1 = arith.constant 0 : i32
    return %c0_i32, %c0_i32_0 : i32, i32
  }
  func.func @transform_9(%arg0: i32, %arg1: i32) -> (i32, i32) {
    %c0_i32 = arith.constant 0 : i32
    %c0_i32_0 = arith.constant 0 : i32
    %c0_i32_1 = arith.constant 0 : i32
    return %c0_i32, %c0_i32_0 : i32, i32
  }
  func.func @transform_10(%arg0: i32, %arg1: i32) -> (i32, i32) {
    %c0_i32 = arith.constant 0 : i32
    %c0_i32_0 = arith.constant 0 : i32
    %c0_i32_1 = arith.constant 0 : i32
    return %c0_i32, %c0_i32_0 : i32, i32
  }
  func.func @transform_11(%arg0: i32, %arg1: i32) -> (i32, i32) {
    %c0_i32 = arith.constant 0 : i32
    %c0_i32_0 = arith.constant 0 : i32
    return %arg0, %c0_i32 : i32, i32
  }
}

</mosaic_0001>

<llo_original>
// kernel: tpu_custom_call.1
$region0: #{tpu_custom_call.1}
  #allocation0 [shape = 'u32[]', space=smem, size = 0x4, offset = 0x4, fixed_abs, tag = 'smem constant byte address 0x4 - core index']
  #allocation1 [shape = 'u32[72,128]{1,0:T(1,128)}', space=vmem, size = 0x9000, scoped, tag = 'internal scratch']
  #allocation2 [shape = 'f32[160,128]{1,0:T(8,128)}', space=vmem, size = 0x14000, scoped, tag = 'scratch operand']
  #allocation11 [shape = 's32[]', space=sflag, size = 0x4, offset = 0, fixed_abs, tag = 'sflag constant byte address 0x0 - dummy sync flag']
  %s0 = inlined_call_operand.hbm [shape: f32[3,320,256], index: 0, kind: input, shape index: {}]
  %s1 = inlined_call_operand.vmem [shape: f32[4,3,256], index: 1, kind: input, shape index: {}]
  %s2 = inlined_call_operand.vmem [shape: f32[4,3,256], index: 2, kind: input, shape index: {}]
  %s3 = inlined_call_operand.vmem [shape: f32[4,3,256], index: 3, kind: input, shape index: {}]
  %s4 = inlined_call_operand.vmem [shape: f32[3,256], index: 4, kind: input, shape index: {}]
  %s5 = inlined_call_operand.vmem [shape: f32[1,256], index: 5, kind: input, shape index: {}]
  %s6 = inlined_call_operand.hbm [shape: bf16[256,128], index: 6, kind: input, shape index: {}]
  %s7 = inlined_call_operand.vmem [shape: f32[1,128], index: 7, kind: input, shape index: {}]
  %s8 = inlined_call_operand.hbm [shape: f32[128,128], index: 8, kind: input, shape index: {}]
  %s9 = inlined_call_operand.vmem [shape: f32[1,128], index: 9, kind: input, shape index: {}]
  %s10 = inlined_call_operand.vmem [shape: f32[1,128], index: 10, kind: input, shape index: {}]
  %s11 = inlined_call_operand.vmem [shape: f32[320,1], index: 11, kind: output, shape index: {}]
  %s12 = sld [smem:[#allocation0]]
  $region220: #{tpu_custom_call.1} parent=0
    _
  %s14 = ssub.s32 1, %s12
  %s15 = scalar_select 0, %s14, %s12
  $region1: #{tpu_custom_call.1} parent=0
    #allocation3 [shape = 'u8[491520]{0}', space=vmem, size = 0x78000, scoped, tag = 'input window, operand 0']
    #allocation4 [shape = 's32[2]{0}', space=sflag, size = 0x8, scoped, tag = 'scoped memory for tpu_custom_call.1']
    #allocation5 [shape = 'u8[16384]{0}', space=vmem, size = 0x4000, scoped, tag = 'input window, operand 1']
    #allocation6 [shape = 'u8[16384]{0}', space=vmem, size = 0x4000, scoped, tag = 'input window, operand 2']
    #allocation7 [shape = 'u8[16384]{0}', space=vmem, size = 0x4000, scoped, tag = 'input window, operand 3']
    #allocation8 [shape = 'u8[65536]{0}', space=vmem, size = 0x10000, scoped, tag = 'input window, operand 6']
    #allocation9 [shape = 's32[2]{0}', space=sflag, size = 0x8, scoped, tag = 'scoped memory for tpu_custom_call.1']
    #allocation10 [shape = 'u8[65536]{0}', space=vmem, size = 0x10000, scoped, tag = 'input window, operand 8, single buffered']
    %16 = vsyncpa [#allocation4], 0
    %s17 = scalar_lea.sflag [#allocation4], 1
    %18 = vsyncpa %s17, 0
    %19 = vsyncpa [#allocation9], 0
    %s20 = scalar_lea.sflag [#allocation9], 1
    %21 = vsyncpa %s20, 0
    loop: start=0, step=1, limit=6
    $region2: #{tpu_custom_call.1} parent=1 // loop_pre_header
      _
    $region3: #{tpu_custom_call.1} parent=1 // loop_header
      %s23 = sphi 0, %s27
      %p24 = scmp.ge.s32.totalorder %s23, 6
      %s30 = sphi 0, %s42
      %s31 = sphi 0, %s38
      %s32 = sphi 0, %s30
      %s33 = sphi 0, %s31
      %s34 = sphi 0, %s32
      %s35 = sphi 0, %s33
      %s47 = sphi 0, %s49
      %s50 = sphi 0, %s47
      %s51 = sphi 0, %s50
      %s67 = sphi 0, %s51
      %s73 = sphi 0, %s75
      %s76 = sphi 0, %s73
      %s77 = sphi 0, %s76
      %s93 = sphi 0, %s77
      %s99 = sphi 0, %s101
      %s102 = sphi 0, %s99
      %s103 = sphi 0, %s102
      %s119 = sphi 0, %s103
      %s125 = sphi 0, %s127
      %s128 = sphi 0, %s125
      %s129 = sphi 0, %s128
      %s145 = sphi 0, %s129
      %s151 = sphi 0, %s153
      %s154 = sphi 0, %s151
      %s155 = sphi 0, %s154
      %s171 = sphi 0, %s155
      %s177 = sphi 0, %s179
      %s180 = sphi 0, %s177
      %s181 = sphi 0, %s180
      %s197 = sphi 0, %s181
      %s203 = sphi 0, %s205
      %s206 = sphi 0, %s203
      %s207 = sphi 0, %s206
      %s223 = sphi 0, %s207
      %s227 = sphi 0, %s227
      %s229 = sphi 0, %s227
      %s230 = sphi 0, %s229
      %s244 = sphi 0, %s230
      %s248 = sphi 0, %s248
      %s250 = sphi 0, %s248
      %s251 = sphi 0, %s250
      %s265 = sphi 0, %s251
      %s269 = sphi 0, %s269
      %s271 = sphi 0, %s269
      %s272 = sphi 0, %s271
      %s286 = sphi 0, %s272
      %s290 = sphi 0, %s290
      %s292 = sphi 0, %s290
      %s293 = sphi 0, %s292
      %s307 = sphi 0, %s293
      %s313 = sphi 0, %s315
      %s316 = sphi 0, %s313
      %s317 = sphi 0, %s316
      %s333 = sphi 0, %s317
    $region4: #{tpu_custom_call.1} parent=1 // loop_header_branch
      %26 = sbr.rel (%p24) target = $region8
    $region5: #{tpu_custom_call.1} parent=1 // loop_body
      %s28 = ssub.s32 %s23, 1
      %s29 = ssub.s32 %s23, 2
      %s36 = sadd.s32 1, %s31
      %p37 = scmp.ge.s32.totalorder %s36, 2
      %s38 = scalar_select %p37, 0, %s36
      %s39 = sadd.s32 1, %s30
      %s40 = scalar_select %p37, %s39, %s30
      %p41 = scmp.ge.s32.totalorder %s40, 2
      %s42 = scalar_select %p41, 0, %s40
      %s43 = ssub.s32 %s30, %s42
      %s44 = ssub.s32 %s31, %s38
      %s45 = sor.u32 %s43, %s44
      %p46 = scmp.eq.s32.totalorder %s45, 0
      %s48 = sadd.s32 %s47, 1
      %s49 = scalar_select %p46, %s47, %s48
      %p52 = pneg %p46
      %p53 = scmp.eq.s32.totalorder %s23, 3
      %p54 = por %p52, %p53
      %p55 = scmp.ne.s32.totalorder %s47, %s50
      %p56 = scmp.eq.s32.totalorder %s23, 0
      %p57 = por %p55, %p56
      %p58 = scmp.ne.s32.totalorder %s47, %s50
      %p59 = scmp.eq.s32.totalorder %s28, 3
      %p60 = por %p58, %p59
      %p61 = scmp.ne.s32.totalorder %s50, %s51
      %p62 = scmp.eq.s32.totalorder %s28, 0
      %p63 = por %p61, %p62
      %p64 = scmp.ne.s32.totalorder %s50, %s51
      %p65 = scmp.eq.s32.totalorder %s29, 3
      %p66 = por %p64, %p65
      %p68 = scmp.ne.s32.totalorder %s51, %s67
      %p69 = scmp.eq.s32.totalorder %s29, 0
      %p70 = por %p68, %p69
      %s71 = ssub.s32 %s31, %s38
      %p72 = scmp.eq.s32.totalorder %s71, 0
      %s74 = sadd.s32 %s73, 1
      %s75 = scalar_select %p72, %s73, %s74
      %p78 = pneg %p72
      %p79 = scmp.eq.s32.totalorder %s23, 3
      %p80 = por %p78, %p79
      %p81 = scmp.ne.s32.totalorder %s73, %s76
      %p82 = scmp.eq.s32.totalorder %s23, 0
      %p83 = por %p81, %p82
      %p84 = scmp.ne.s32.totalorder %s73, %s76
      %p85 = scmp.eq.s32.totalorder %s28, 3
      %p86 = por %p84, %p85
      %p87 = scmp.ne.s32.totalorder %s76, %s77
      %p88 = scmp.eq.s32.totalorder %s28, 0
      %p89 = por %p87, %p88
      %p90 = scmp.ne.s32.totalorder %s76, %s77
      %p91 = scmp.eq.s32.totalorder %s29, 3
      %p92 = por %p90, %p91
      %p94 = scmp.ne.s32.totalorder %s77, %s93
      %p95 = scmp.eq.s32.totalorder %s29, 0
      %p96 = por %p94, %p95
      %s97 = ssub.s32 %s31, %s38
      %p98 = scmp.eq.s32.totalorder %s97, 0
      %s100 = sadd.s32 %s99, 1
      %s101 = scalar_select %p98, %s99, %s100
      %p104 = pneg %p98
      %p105 = scmp.eq.s32.totalorder %s23, 3
      %p106 = por %p104, %p105
      %p107 = scmp.ne.s32.totalorder %s99, %s102
      %p108 = scmp.eq.s32.totalorder %s23, 0
      %p109 = por %p107, %p108
      %p110 = scmp.ne.s32.totalorder %s99, %s102
      %p111 = scmp.eq.s32.totalorder %s28, 3
      %p112 = por %p110, %p111
      %p113 = scmp.ne.s32.totalorder %s102, %s103
      %p114 = scmp.eq.s32.totalorder %s28, 0
      %p115 = por %p113, %p114
      %p116 = scmp.ne.s32.totalorder %s102, %s103
      %p117 = scmp.eq.s32.totalorder %s29, 3
      %p118 = por %p116, %p117
      %p120 = scmp.ne.s32.totalorder %s103, %s119
      %p121 = scmp.eq.s32.totalorder %s29, 0
      %p122 = por %p120, %p121
      %s123 = ssub.s32 %s31, %s38
      %p124 = scmp.eq.s32.totalorder %s123, 0
      %s126 = sadd.s32 %s125, 1
      %s127 = scalar_select %p124, %s125, %s126
      %p130 = pneg %p124
      %p131 = scmp.eq.s32.totalorder %s23, 3
      %p132 = por %p130, %p131
      %p133 = scmp.ne.s32.totalorder %s125, %s128
      %p134 = scmp.eq.s32.totalorder %s23, 0
      %p135 = por %p133, %p134
      %p136 = scmp.ne.s32.totalorder %s125, %s128
      %p137 = scmp.eq.s32.totalorder %s28, 3
      %p138 = por %p136, %p137
      %p139 = scmp.ne.s32.totalorder %s128, %s129
      %p140 = scmp.eq.s32.totalorder %s28, 0
      %p141 = por %p139, %p140
      %p142 = scmp.ne.s32.totalorder %s128, %s129
      %p143 = scmp.eq.s32.totalorder %s29, 3
      %p144 = por %p142, %p143
      %p146 = scmp.ne.s32.totalorder %s129, %s145
      %p147 = scmp.eq.s32.totalorder %s29, 0
      %p148 = por %p146, %p147
      %s149 = ssub.s32 %s31, %s38
      %p150 = scmp.eq.s32.totalorder %s149, 0
      %s152 = sadd.s32 %s151, 1
      %s153 = scalar_select %p150, %s151, %s152
      %p156 = pneg %p150
      %p157 = scmp.eq.s32.totalorder %s23, 3
      %p158 = por %p156, %p157
      %p159 = scmp.ne.s32.totalorder %s151, %s154
      %p160 = scmp.eq.s32.totalorder %s23, 0
      %p161 = por %p159, %p160
      %p162 = scmp.ne.s32.totalorder %s151, %s154
      %p163 = scmp.eq.s32.totalorder %s28, 3
      %p164 = por %p162, %p163
      %p165 = scmp.ne.s32.totalorder %s154, %s155
      %p166 = scmp.eq.s32.totalorder %s28, 0
      %p167 = por %p165, %p166
      %p168 = scmp.ne.s32.totalorder %s154, %s155
      %p169 = scmp.eq.s32.totalorder %s29, 3
      %p170 = por %p168, %p169
      %p172 = scmp.ne.s32.totalorder %s155, %s171
      %p173 = scmp.eq.s32.totalorder %s29, 0
      %p174 = por %p172, %p173
      %s175 = ssub.s32 %s31, %s38
      %p176 = scmp.eq.s32.totalorder %s175, 0
      %s178 = sadd.s32 %s177, 1
      %s179 = scalar_select %p176, %s177, %s178
      %p182 = pneg %p176
      %p183 = scmp.eq.s32.totalorder %s23, 3
      %p184 = por %p182, %p183
      %p185 = scmp.ne.s32.totalorder %s177, %s180
      %p186 = scmp.eq.s32.totalorder %s23, 0
      %p187 = por %p185, %p186
      %p188 = scmp.ne.s32.totalorder %s177, %s180
      %p189 = scmp.eq.s32.totalorder %s28, 3
      %p190 = por %p188, %p189
      %p191 = scmp.ne.s32.totalorder %s180, %s181
      %p192 = scmp.eq.s32.totalorder %s28, 0
      %p193 = por %p191, %p192
      %p194 = scmp.ne.s32.totalorder %s180, %s181
      %p195 = scmp.eq.s32.totalorder %s29, 3
      %p196 = por %p194, %p195
      %p198 = scmp.ne.s32.totalorder %s181, %s197
      %p199 = scmp.eq.s32.totalorder %s29, 0
      %p200 = por %p198, %p199
      %s201 = ssub.s32 %s31, %s38
      %p202 = scmp.eq.s32.totalorder %s201, 0
      %s204 = sadd.s32 %s203, 1
      %s205 = scalar_select %p202, %s203, %s204
      %p208 = pneg %p202
      %p209 = scmp.eq.s32.totalorder %s23, 3
      %p210 = por %p208, %p209
      %p211 = scmp.ne.s32.totalorder %s203, %s206
      %p212 = scmp.eq.s32.totalorder %s23, 0
      %p213 = por %p211, %p212
      %p214 = scmp.ne.s32.totalorder %s203, %s206
      %p215 = scmp.eq.s32.totalorder %s28, 3
      %p216 = por %p214, %p215
      %p217 = scmp.ne.s32.totalorder %s206, %s207
      %p218 = scmp.eq.s32.totalorder %s28, 0
      %p219 = por %p217, %p218
      %p220 = scmp.ne.s32.totalorder %s206, %s207
      %p221 = scmp.eq.s32.totalorder %s29, 3
      %p222 = por %p220, %p221
      %p224 = scmp.ne.s32.totalorder %s207, %s223
      %p225 = scmp.eq.s32.totalorder %s29, 0
      %p226 = por %p224, %p225
      %s228 = sadd.s32 %s227, 1
      %p231 = scmp.eq.s32.totalorder %s23, 3
      %p232 = scmp.ne.s32.totalorder %s227, %s229
      %p233 = scmp.eq.s32.totalorder %s23, 0
      %p234 = por %p232, %p233
      %p235 = scmp.ne.s32.totalorder %s227, %s229
      %p236 = scmp.eq.s32.totalorder %s28, 3
      %p237 = por %p235, %p236
      %p238 = scmp.ne.s32.totalorder %s229, %s230
      %p239 = scmp.eq.s32.totalorder %s28, 0
      %p240 = por %p238, %p239
      %p241 = scmp.ne.s32.totalorder %s229, %s230
      %p242 = scmp.eq.s32.totalorder %s29, 3
      %p243 = por %p241, %p242
      %p245 = scmp.ne.s32.totalorder %s230, %s244
      %p246 = scmp.eq.s32.totalorder %s29, 0
      %p247 = por %p245, %p246
      %s249 = sadd.s32 %s248, 1
      %p252 = scmp.eq.s32.totalorder %s23, 3
      %p253 = scmp.ne.s32.totalorder %s248, %s250
      %p254 = scmp.eq.s32.totalorder %s23, 0
      %p255 = por %p253, %p254
      %p256 = scmp.ne.s32.totalorder %s248, %s250
      %p257 = scmp.eq.s32.totalorder %s28, 3
      %p258 = por %p256, %p257
      %p259 = scmp.ne.s32.totalorder %s250, %s251
      %p260 = scmp.eq.s32.totalorder %s28, 0
      %p261 = por %p259, %p260
      %p262 = scmp.ne.s32.totalorder %s250, %s251
      %p263 = scmp.eq.s32.totalorder %s29, 3
      %p264 = por %p262, %p263
      %p266 = scmp.ne.s32.totalorder %s251, %s265
      %p267 = scmp.eq.s32.totalorder %s29, 0
      %p268 = por %p266, %p267
      %s270 = sadd.s32 %s269, 1
      %p273 = scmp.eq.s32.totalorder %s23, 3
      %p274 = scmp.ne.s32.totalorder %s269, %s271
      %p275 = scmp.eq.s32.totalorder %s23, 0
      %p276 = por %p274, %p275
      %p277 = scmp.ne.s32.totalorder %s269, %s271
      %p278 = scmp.eq.s32.totalorder %s28, 3
      %p279 = por %p277, %p278
      %p280 = scmp.ne.s32.totalorder %s271, %s272
      %p281 = scmp.eq.s32.totalorder %s28, 0
      %p282 = por %p280, %p281
      %p283 = scmp.ne.s32.totalorder %s271, %s272
      %p284 = scmp.eq.s32.totalorder %s29, 3
      %p285 = por %p283, %p284
      %p287 = scmp.ne.s32.totalorder %s272, %s286
      %p288 = scmp.eq.s32.totalorder %s29, 0
      %p289 = por %p287, %p288
      %s291 = sadd.s32 %s290, 1
      %p294 = scmp.eq.s32.totalorder %s23, 3
      %p295 = scmp.ne.s32.totalorder %s290, %s292
      %p296 = scmp.eq.s32.totalorder %s23, 0
      %p297 = por %p295, %p296
      %p298 = scmp.ne.s32.totalorder %s290, %s292
      %p299 = scmp.eq.s32.totalorder %s28, 3
      %p300 = por %p298, %p299
      %p301 = scmp.ne.s32.totalorder %s292, %s293
      %p302 = scmp.eq.s32.totalorder %s28, 0
      %p303 = por %p301, %p302
      %p304 = scmp.ne.s32.totalorder %s292, %s293
      %p305 = scmp.eq.s32.totalorder %s29, 3
      %p306 = por %p304, %p305
      %p308 = scmp.ne.s32.totalorder %s293, %s307
      %p309 = scmp.eq.s32.totalorder %s29, 0
      %p310 = por %p308, %p309
      %s311 = ssub.s32 %s30, %s42
      %p312 = scmp.eq.s32.totalorder %s311, 0
      %s314 = sadd.s32 %s313, 1
      %s315 = scalar_select %p312, %s313, %s314
      %p318 = pneg %p312
      %p319 = scmp.eq.s32.totalorder %s23, 3
      %p320 = por %p318, %p319
      %p321 = scmp.ne.s32.totalorder %s313, %s316
      %p322 = scmp.eq.s32.totalorder %s23, 0
      %p323 = por %p321, %p322
      %p324 = scmp.ne.s32.totalorder %s313, %s316
      %p325 = scmp.eq.s32.totalorder %s28, 3
      %p326 = por %p324, %p325
      %p327 = scmp.ne.s32.totalorder %s316, %s317
      %p328 = scmp.eq.s32.totalorder %s28, 0
      %p329 = por %p327, %p328
      %p330 = scmp.ne.s32.totalorder %s316, %s317
      %p331 = scmp.eq.s32.totalorder %s29, 3
      %p332 = por %p330, %p331
      %p334 = scmp.ne.s32.totalorder %s317, %s333
      %p335 = scmp.eq.s32.totalorder %s29, 0
      %p336 = por %p334, %p335
      %p337 = scmp.le.s32.totalorder 1, %s23
      %p338 = scmp.lt.s32.totalorder %s23, 5
      %p339 = pnand %p337, %p338
      %p340 = pneg %p339
      // Predicated region
      $region9: #{tpu_custom_call.1} parent=5 // pred_check
        _
      $region10: #{tpu_custom_call.1} parent=5 // pred_check_branch
        %342 = sbr.rel (%p339) target = $region12
      $region11: #{tpu_custom_call.1} parent=5 // pred_region
        %s343 = ssub.s32 %s23, 1
        // Predicated region
        $region13: #{tpu_custom_call.1} parent=11 // pred_check
          %p344 = pneg %p240
        $region14: #{tpu_custom_call.1} parent=11 // pred_check_branch
          %346 = sbr.rel (%p344) target = $region16
        $region15: #{tpu_custom_call.1} parent=11 // pred_region
          _
        $region16: #{tpu_custom_call.1} parent=11 // pred_fallthru
          _
        // Predicated region
        $region17: #{tpu_custom_call.1} parent=11 // pred_check
          %p347 = pneg %p261
        $region18: #{tpu_custom_call.1} parent=11 // pred_check_branch
          %349 = sbr.rel (%p347) target = $region20
        $region19: #{tpu_custom_call.1} parent=11 // pred_region
          %351 = vsyncadd [#allocation9], 0
          %s352 = sshll.u32 %s8, 4
          %s353 = int_to_ptr.hbm [resolvable:$true] %s352
          %s354 = sshll.u32 [#allocation10], 4
          %s355 = int_to_ptr.vmem [resolvable:$true] %s354
          %360 = dma.hbm_to_vmem [thread:$0]  %s353, 2048, %s355, [#allocation9], 128, 128, 8
        $region20: #{tpu_custom_call.1} parent=11 // pred_fallthru
          _
        // Predicated region
        $region21: #{tpu_custom_call.1} parent=11 // pred_check
          %p361 = pneg %p282
        $region22: #{tpu_custom_call.1} parent=11 // pred_check_branch
          %363 = sbr.rel (%p361) target = $region24
        $region23: #{tpu_custom_call.1} parent=11 // pred_region
          _
        $region24: #{tpu_custom_call.1} parent=11 // pred_fallthru
          _
        // Predicated region
        $region25: #{tpu_custom_call.1} parent=11 // pred_check
          %p364 = pneg %p303
        $region26: #{tpu_custom_call.1} parent=11 // pred_check_branch
          %366 = sbr.rel (%p364) target = $region28
        $region27: #{tpu_custom_call.1} parent=11 // pred_region
          _
        $region28: #{tpu_custom_call.1} parent=11 // pred_fallthru
          _
      $region12: #{tpu_custom_call.1} parent=5 // pred_fallthru
        _
      %p367 = scmp.lt.s32.totalorder %s23, 4
      // Predicated region
      $region29: #{tpu_custom_call.1} parent=5 // pred_check
        %p368 = pneg %p367
      $region30: #{tpu_custom_call.1} parent=5 // pred_check_branch
        %370 = sbr.rel (%p368) target = $region32
      $region31: #{tpu_custom_call.1} parent=5 // pred_region
        // Predicated region
        $region33: #{tpu_custom_call.1} parent=31 // pred_check
          %p371 = pneg %p57
        $region34: #{tpu_custom_call.1} parent=31 // pred_check_branch
          %373 = sbr.rel (%p371) target = $region36
        $region35: #{tpu_custom_call.1} parent=31 // pred_region
          #allocation12 [shape = 'u32[6]{0}', space=smem, size = 0x18, scoped, tag = 'DMA stride descriptor']
          %s374 = sand.u32 %s47, 1
          %s375 = scalar_lea.sflag [#allocation4], %s374
          %s376 = sand.u32 %s47, 1
          %s377 = smul.addr %s376, 480
          %s378 = scalar_lea.vmem [#allocation3], %s377
          %s379 = smul.u32 20, %s30
          %381 = vsyncadd %s375, 0
          %s382 = smul.addr %s379, 2
          %s383 = sadd.s32 %s31, %s382
          %s384 = smul.addr %s383, 8
          %s385 = scalar_lea.hbm %s0, %s384
          %s387 = sshll.u32 1, 14
          %s388 = sxor.u32 4294967295, %s387
          %s390 = sld [smem:[#allocation0]]
          %s391 = sadd.s32 2, %s390
          %s393 = sshll.u32 7, 26
          %s394 = sxor.u32 4294967295, %s393
          %s395 = sand.u32 0, %s394
          %s396 = sshll.u32 %s391, 26
          %s397 = sor.u32 %s395, %s396
          %s398 = sshll.u32 %s385, 4
          %s399 = int_to_ptr.hbm [resolvable:$true] %s398
          %s400 = sshll.u32 %s378, 4
          %s401 = int_to_ptr.vmem [resolvable:$true] %s400
          %407 = sst [smem:[#allocation12]] 10240
          %s408 = scalar_lea.smem [#allocation12], 1
          %409 = sst [smem:[%s408]] 2560
          %s410 = scalar_lea.smem [#allocation12], 2
          %411 = sst [smem:[%s410]] 20
          %s412 = scalar_lea.smem [#allocation12], 3
          %413 = sst [smem:[%s412]] 256
          %s414 = scalar_lea.smem [#allocation12], 4
          %415 = sst [smem:[%s414]] 128
          %s416 = scalar_lea.smem [#allocation12], 5
          %417 = sst [smem:[%s416]] 8
          %419 = dma.general %s399, 7680, %s401, %s375, [#allocation11], [#allocation12], %s397, 0
        $region36: #{tpu_custom_call.1} parent=31 // pred_fallthru
          _
        // Predicated region
        $region37: #{tpu_custom_call.1} parent=31 // pred_check
          %p420 = pneg %p83
        $region38: #{tpu_custom_call.1} parent=31 // pred_check_branch
          %422 = sbr.rel (%p420) target = $region40
        $region39: #{tpu_custom_call.1} parent=31 // pred_region
          %s423 = sand.u32 %s73, 1
          %s424 = sand.u32 %s73, 1
          %s425 = smul.addr %s424, 16
          %s426 = scalar_lea.vmem [#allocation5], %s425
          %s427 = smul.addr %s31, 4
          %s428 = scalar_lea.vmem %s1, %s427
          // Predicated region
          $region41: #{tpu_custom_call.1} parent=39 // pred_check
            _
          $region42: #{tpu_custom_call.1} parent=39 // pred_check_branch
            %430 = sbr.rel (0) target = $region44
          $region43: #{tpu_custom_call.1} parent=39 // pred_region
            // Predicated region
            $region45: #{tpu_custom_call.1} parent=43 // pred_check
              _
            $region46: #{tpu_custom_call.1} parent=43 // pred_check_branch
              %432 = sbr.rel target = $region48
            $region47: #{tpu_custom_call.1} parent=43 // pred_region
              // Predicated region
              $region60: #{tpu_custom_call.1} parent=47 // pred_check
                _
              $region61: #{tpu_custom_call.1} parent=47 // pred_check_branch
                %454 = sbr.rel (0) target = $region63
              $region62: #{tpu_custom_call.1} parent=47 // pred_region
                loop: start=0, step=1, limit=1
                $region64: #{tpu_custom_call.1} parent=62 // loop_pre_header
                  _
                $region65: #{tpu_custom_call.1} parent=62 // loop_header
                  %s456 = sphi 0, %s460
                  %p457 = scmp.ge.s32.totalorder %s456, 1
                  %s461 = sphi %s428, %s428
                  %s462 = sphi %s426, %s426
                $region66: #{tpu_custom_call.1} parent=62 // loop_header_branch
                  %459 = sbr.rel (%p457) target = $region70
                $region67: #{tpu_custom_call.1} parent=62 // loop_body
                  _
                $region68: #{tpu_custom_call.1} parent=62 // loop_footer
                  %s460 = sadd.s32 1, %s456
                $region69: #{tpu_custom_call.1} parent=62 // loop_footer_branch
                  %455 = sbr.rel target = $region65
                $region70: #{tpu_custom_call.1} parent=62 // loop_exit
                  _
                %s464 = ssub.s32 16, 1
                loop: start=0, step=1, limit=1
                $region71: #{tpu_custom_call.1} parent=62 // loop_pre_header
                  _
                $region72: #{tpu_custom_call.1} parent=62 // loop_header
                  %s466 = sphi 0, %s470
                  %p467 = scmp.ge.s32.totalorder %s466, 1
                  %s471 = sphi %s428, %s428
                  %s472 = sphi %s426, %s426
                $region73: #{tpu_custom_call.1} parent=62 // loop_header_branch
                  %469 = sbr.rel (%p467) target = $region77
                $region74: #{tpu_custom_call.1} parent=62 // loop_body
                  %v473 = vld [vmem:[%s471] sm:%s464]
                  %474 = vst [vmem:[%s472] sm:%s464] %v473
                  %v475 = vld [vmem:[%s471 + $0x8] sm:%s464]
                  %476 = vst [vmem:[%s472 + $0x4] sm:%s464] %v475
                  %v477 = vld [vmem:[%s471 + $0x10] sm:%s464]
                  %478 = vst [vmem:[%s472 + $0x8] sm:%s464] %v477
                  %v479 = vld [vmem:[%s471 + $0x18] sm:%s464]
                  %480 = vst [vmem:[%s472 + $0xc] sm:%s464] %v479
                $region75: #{tpu_custom_call.1} parent=62 // loop_footer
                  %s470 = sadd.s32 1, %s466
                $region76: #{tpu_custom_call.1} parent=62 // loop_footer_branch
                  %465 = sbr.rel target = $region72
                $region77: #{tpu_custom_call.1} parent=62 // loop_exit
                  _
              $region63: #{tpu_custom_call.1} parent=47 // pred_fallthru
                _
            $region48: #{tpu_custom_call.1} parent=43 // pred_fallthru
              _
            // Predicated region
            $region49: #{tpu_custom_call.1} parent=43 // pred_check
              _
            $region50: #{tpu_custom_call.1} parent=43 // pred_check_branch
              %434 = sbr.rel (0) target = $region52
            $region51: #{tpu_custom_call.1} parent=43 // pred_region
              %s436 = ssub.s32 16, 1
              loop: start=0, step=1, limit=1
              $region53: #{tpu_custom_call.1} parent=51 // loop_pre_header
                _
              $region54: #{tpu_custom_call.1} parent=51 // loop_header
                %s438 = sphi 0, %s442
                %p439 = scmp.ge.s32.totalorder %s438, 1
                %s443 = sphi %s428, %s428
                %s444 = sphi %s426, %s426
              $region55: #{tpu_custom_call.1} parent=51 // loop_header_branch
                %441 = sbr.rel (%p439) target = $region59
              $region56: #{tpu_custom_call.1} parent=51 // loop_body
                %v445 = vld [vmem:[%s443] sm:%s436]
                %446 = vst [vmem:[%s444] sm:%s436] %v445
                %v447 = vld [vmem:[%s443 + $0x8] sm:%s436]
                %448 = vst [vmem:[%s444 + $0x4] sm:%s436] %v447
                %v449 = vld [vmem:[%s443 + $0x10] sm:%s436]
                %450 = vst [vmem:[%s444 + $0x8] sm:%s436] %v449
                %v451 = vld [vmem:[%s443 + $0x18] sm:%s436]
                %452 = vst [vmem:[%s444 + $0xc] sm:%s436] %v451
              $region57: #{tpu_custom_call.1} parent=51 // loop_footer
                %s442 = sadd.s32 1, %s438
              $region58: #{tpu_custom_call.1} parent=51 // loop_footer_branch
                %437 = sbr.rel target = $region54
              $region59: #{tpu_custom_call.1} parent=51 // loop_exit
                _
            $region52: #{tpu_custom_call.1} parent=43 // pred_fallthru
              _
          $region44: #{tpu_custom_call.1} parent=39 // pred_fallthru
            _
          %481 = vnop
        $region40: #{tpu_custom_call.1} parent=31 // pred_fallthru
          _
        // Predicated region
        $region78: #{tpu_custom_call.1} parent=31 // pred_check
          %p482 = pneg %p109
        $region79: #{tpu_custom_call.1} parent=31 // pred_check_branch
          %484 = sbr.rel (%p482) target = $region81
        $region80: #{tpu_custom_call.1} parent=31 // pred_region
          %s485 = sand.u32 %s99, 1
          %s486 = sand.u32 %s99, 1
          %s487 = smul.addr %s486, 16
          %s488 = scalar_lea.vmem [#allocation6], %s487
          %s489 = smul.addr %s31, 4
          %s490 = scalar_lea.vmem %s2, %s489
          // Predicated region
          $region82: #{tpu_custom_call.1} parent=80 // pred_check
            _
          $region83: #{tpu_custom_call.1} parent=80 // pred_check_branch
            %492 = sbr.rel (0) target = $region85
          $region84: #{tpu_custom_call.1} parent=80 // pred_region
            // Predicated region
            $region86: #{tpu_custom_call.1} parent=84 // pred_check
              _
            $region87: #{tpu_custom_call.1} parent=84 // pred_check_branch
              %494 = sbr.rel target = $region89
            $region88: #{tpu_custom_call.1} parent=84 // pred_region
              // Predicated region
              $region101: #{tpu_custom_call.1} parent=88 // pred_check
                _
              $region102: #{tpu_custom_call.1} parent=88 // pred_check_branch
                %516 = sbr.rel (0) target = $region104
              $region103: #{tpu_custom_call.1} parent=88 // pred_region
                loop: start=0, step=1, limit=1
                $region105: #{tpu_custom_call.1} parent=103 // loop_pre_header
                  _
                $region106: #{tpu_custom_call.1} parent=103 // loop_header
                  %s518 = sphi 0, %s522
                  %p519 = scmp.ge.s32.totalorder %s518, 1
                  %s523 = sphi %s490, %s490
                  %s524 = sphi %s488, %s488
                $region107: #{tpu_custom_call.1} parent=103 // loop_header_branch
                  %521 = sbr.rel (%p519) target = $region111
                $region108: #{tpu_custom_call.1} parent=103 // loop_body
                  _
                $region109: #{tpu_custom_call.1} parent=103 // loop_footer
                  %s522 = sadd.s32 1, %s518
                $region110: #{tpu_custom_call.1} parent=103 // loop_footer_branch
                  %517 = sbr.rel target = $region106
                $region111: #{tpu_custom_call.1} parent=103 // loop_exit
                  _
                %s526 = ssub.s32 16, 1
                loop: start=0, step=1, limit=1
                $region112: #{tpu_custom_call.1} parent=103 // loop_pre_header
                  _
                $region113: #{tpu_custom_call.1} parent=103 // loop_header
                  %s528 = sphi 0, %s532
                  %p529 = scmp.ge.s32.totalorder %s528, 1
                  %s533 = sphi %s490, %s490
                  %s534 = sphi %s488, %s488
                $region114: #{tpu_custom_call.1} parent=103 // loop_header_branch
                  %531 = sbr.rel (%p529) target = $region118
                $region115: #{tpu_custom_call.1} parent=103 // loop_body
                  %v535 = vld [vmem:[%s533] sm:%s526]
                  %536 = vst [vmem:[%s534] sm:%s526] %v535
                  %v537 = vld [vmem:[%s533 + $0x8] sm:%s526]
                  %538 = vst [vmem:[%s534 + $0x4] sm:%s526] %v537
                  %v539 = vld [vmem:[%s533 + $0x10] sm:%s526]
                  %540 = vst [vmem:[%s534 + $0x8] sm:%s526] %v539
                  %v541 = vld [vmem:[%s533 + $0x18] sm:%s526]
                  %542 = vst [vmem:[%s534 + $0xc] sm:%s526] %v541
                $region116: #{tpu_custom_call.1} parent=103 // loop_footer
                  %s532 = sadd.s32 1, %s528
                $region117: #{tpu_custom_call.1} parent=103 // loop_footer_branch
                  %527 = sbr.rel target = $region113
                $region118: #{tpu_custom_call.1} parent=103 // loop_exit
                  _
              $region104: #{tpu_custom_call.1} parent=88 // pred_fallthru
                _
            $region89: #{tpu_custom_call.1} parent=84 // pred_fallthru
              _
            // Predicated region
            $region90: #{tpu_custom_call.1} parent=84 // pred_check
              _
            $region91: #{tpu_custom_call.1} parent=84 // pred_check_branch
              %496 = sbr.rel (0) target = $region93
            $region92: #{tpu_custom_call.1} parent=84 // pred_region
              %s498 = ssub.s32 16, 1
              loop: start=0, step=1, limit=1
              $region94: #{tpu_custom_call.1} parent=92 // loop_pre_header
                _
              $region95: #{tpu_custom_call.1} parent=92 // loop_header
                %s500 = sphi 0, %s504
                %p501 = scmp.ge.s32.totalorder %s500, 1
                %s505 = sphi %s490, %s490
                %s506 = sphi %s488, %s488
              $region96: #{tpu_custom_call.1} parent=92 // loop_header_branch
                %503 = sbr.rel (%p501) target = $region100
              $region97: #{tpu_custom_call.1} parent=92 // loop_body
                %v507 = vld [vmem:[%s505] sm:%s498]
                %508 = vst [vmem:[%s506] sm:%s498] %v507
                %v509 = vld [vmem:[%s505 + $0x8] sm:%s498]
                %510 = vst [vmem:[%s506 + $0x4] sm:%s498] %v509
                %v511 = vld [vmem:[%s505 + $0x10] sm:%s498]
                %512 = vst [vmem:[%s506 + $0x8] sm:%s498] %v511
                %v513 = vld [vmem:[%s505 + $0x18] sm:%s498]
                %514 = vst [vmem:[%s506 + $0xc] sm:%s498] %v513
              $region98: #{tpu_custom_call.1} parent=92 // loop_footer
                %s504 = sadd.s32 1, %s500
              $region99: #{tpu_custom_call.1} parent=92 // loop_footer_branch
                %499 = sbr.rel target = $region95
              $region100: #{tpu_custom_call.1} parent=92 // loop_exit
                _
            $region93: #{tpu_custom_call.1} parent=84 // pred_fallthru
              _
          $region85: #{tpu_custom_call.1} parent=80 // pred_fallthru
            _
          %543 = vnop
        $region81: #{tpu_custom_call.1} parent=31 // pred_fallthru
          _
        // Predicated region
        $region119: #{tpu_custom_call.1} parent=31 // pred_check
          %p544 = pneg %p135
        $region120: #{tpu_custom_call.1} parent=31 // pred_check_branch
          %546 = sbr.rel (%p544) target = $region122
        $region121: #{tpu_custom_call.1} parent=31 // pred_region
          %s547 = sand.u32 %s125, 1
          %s548 = sand.u32 %s125, 1
          %s549 = smul.addr %s548, 16
          %s550 = scalar_lea.vmem [#allocation7], %s549
          %s551 = smul.addr %s31, 4
          %s552 = scalar_lea.vmem %s3, %s551
          // Predicated region
          $region123: #{tpu_custom_call.1} parent=121 // pred_check
            _
          $region124: #{tpu_custom_call.1} parent=121 // pred_check_branch
            %554 = sbr.rel (0) target = $region126
          $region125: #{tpu_custom_call.1} parent=121 // pred_region
            // Predicated region
            $region127: #{tpu_custom_call.1} parent=125 // pred_check
              _
            $region128: #{tpu_custom_call.1} parent=125 // pred_check_branch
              %556 = sbr.rel target = $region130
            $region129: #{tpu_custom_call.1} parent=125 // pred_region
              // Predicated region
              $region142: #{tpu_custom_call.1} parent=129 // pred_check
                _
              $region143: #{tpu_custom_call.1} parent=129 // pred_check_branch
                %578 = sbr.rel (0) target = $region145
              $region144: #{tpu_custom_call.1} parent=129 // pred_region
                loop: start=0, step=1, limit=1
                $region146: #{tpu_custom_call.1} parent=144 // loop_pre_header
                  _
                $region147: #{tpu_custom_call.1} parent=144 // loop_header
                  %s580 = sphi 0, %s584
                  %p581 = scmp.ge.s32.totalorder %s580, 1
                  %s585 = sphi %s552, %s552
                  %s586 = sphi %s550, %s550
                $region148: #{tpu_custom_call.1} parent=144 // loop_header_branch
                  %583 = sbr.rel (%p581) target = $region152
                $region149: #{tpu_custom_call.1} parent=144 // loop_body
                  _
                $region150: #{tpu_custom_call.1} parent=144 // loop_footer
                  %s584 = sadd.s32 1, %s580
                $region151: #{tpu_custom_call.1} parent=144 // loop_footer_branch
                  %579 = sbr.rel target = $region147
                $region152: #{tpu_custom_call.1} parent=144 // loop_exit
                  _
                %s588 = ssub.s32 16, 1
                loop: start=0, step=1, limit=1
                $region153: #{tpu_custom_call.1} parent=144 // loop_pre_header
                  _
                $region154: #{tpu_custom_call.1} parent=144 // loop_header
                  %s590 = sphi 0, %s594
                  %p591 = scmp.ge.s32.totalorder %s590, 1
                  %s595 = sphi %s552, %s552
                  %s596 = sphi %s550, %s550
                $region155: #{tpu_custom_call.1} parent=144 // loop_header_branch
                  %593 = sbr.rel (%p591) target = $region159
                $region156: #{tpu_custom_call.1} parent=144 // loop_body
                  %v597 = vld [vmem:[%s595] sm:%s588]
                  %598 = vst [vmem:[%s596] sm:%s588] %v597
                  %v599 = vld [vmem:[%s595 + $0x8] sm:%s588]
                  %600 = vst [vmem:[%s596 + $0x4] sm:%s588] %v599
                  %v601 = vld [vmem:[%s595 + $0x10] sm:%s588]
                  %602 = vst [vmem:[%s596 + $0x8] sm:%s588] %v601
                  %v603 = vld [vmem:[%s595 + $0x18] sm:%s588]
                  %604 = vst [vmem:[%s596 + $0xc] sm:%s588] %v603
                $region157: #{tpu_custom_call.1} parent=144 // loop_footer
                  %s594 = sadd.s32 1, %s590
                $region158: #{tpu_custom_call.1} parent=144 // loop_footer_branch
                  %589 = sbr.rel target = $region154
                $region159: #{tpu_custom_call.1} parent=144 // loop_exit
                  _
              $region145: #{tpu_custom_call.1} parent=129 // pred_fallthru
                _
            $region130: #{tpu_custom_call.1} parent=125 // pred_fallthru
              _
            // Predicated region
            $region131: #{tpu_custom_call.1} parent=125 // pred_check
              _
            $region132: #{tpu_custom_call.1} parent=125 // pred_check_branch
              %558 = sbr.rel (0) target = $region134
            $region133: #{tpu_custom_call.1} parent=125 // pred_region
              %s560 = ssub.s32 16, 1
              loop: start=0, step=1, limit=1
              $region135: #{tpu_custom_call.1} parent=133 // loop_pre_header
                _
              $region136: #{tpu_custom_call.1} parent=133 // loop_header
                %s562 = sphi 0, %s566
                %p563 = scmp.ge.s32.totalorder %s562, 1
                %s567 = sphi %s552, %s552
                %s568 = sphi %s550, %s550
              $region137: #{tpu_custom_call.1} parent=133 // loop_header_branch
                %565 = sbr.rel (%p563) target = $region141
              $region138: #{tpu_custom_call.1} parent=133 // loop_body
                %v569 = vld [vmem:[%s567] sm:%s560]
                %570 = vst [vmem:[%s568] sm:%s560] %v569
                %v571 = vld [vmem:[%s567 + $0x8] sm:%s560]
                %572 = vst [vmem:[%s568 + $0x4] sm:%s560] %v571
                %v573 = vld [vmem:[%s567 + $0x10] sm:%s560]
                %574 = vst [vmem:[%s568 + $0x8] sm:%s560] %v573
                %v575 = vld [vmem:[%s567 + $0x18] sm:%s560]
                %576 = vst [vmem:[%s568 + $0xc] sm:%s560] %v575
              $region139: #{tpu_custom_call.1} parent=133 // loop_footer
                %s566 = sadd.s32 1, %s562
              $region140: #{tpu_custom_call.1} parent=133 // loop_footer_branch
                %561 = sbr.rel target = $region136
              $region141: #{tpu_custom_call.1} parent=133 // loop_exit
                _
            $region134: #{tpu_custom_call.1} parent=125 // pred_fallthru
              _
          $region126: #{tpu_custom_call.1} parent=121 // pred_fallthru
            _
          %605 = vnop
        $region122: #{tpu_custom_call.1} parent=31 // pred_fallthru
          _
        // Predicated region
        $region160: #{tpu_custom_call.1} parent=31 // pred_check
          %p606 = pneg %p161
        $region161: #{tpu_custom_call.1} parent=31 // pred_check_branch
          %608 = sbr.rel (%p606) target = $region163
        $region162: #{tpu_custom_call.1} parent=31 // pred_region
          %p609 = scmp.lt.s32.totalorder %s31, 1
          %s610 = scalar_select %p609, %s31, 1
          %s611 = smul.addr %s610, 4
          %s612 = scalar_lea.vmem %s4, %s611
        $region163: #{tpu_custom_call.1} parent=31 // pred_fallthru
          _
        // Predicated region
        $region164: #{tpu_custom_call.1} parent=31 // pred_check
          %p613 = pneg %p187
        $region165: #{tpu_custom_call.1} parent=31 // pred_check_branch
          %615 = sbr.rel (%p613) target = $region167
        $region166: #{tpu_custom_call.1} parent=31 // pred_region
          %p616 = scmp.lt.s32.totalorder %s31, 1
          %s617 = scalar_select %p616, %s31, 1
          %s618 = scalar_lea.vmem %s5, %s617
        $region167: #{tpu_custom_call.1} parent=31 // pred_fallthru
          _
        // Predicated region
        $region168: #{tpu_custom_call.1} parent=31 // pred_check
          %p619 = pneg %p213
        $region169: #{tpu_custom_call.1} parent=31 // pred_check_branch
          %621 = sbr.rel (%p619) target = $region171
        $region170: #{tpu_custom_call.1} parent=31 // pred_region
          %s622 = sand.u32 %s23, 1
          %s623 = scalar_lea.sflag [#allocation9], %s622
          %s624 = sand.u32 %s203, 1
          %s625 = smul.addr %s624, 64
          %s626 = scalar_lea.vmem [#allocation8], %s625
          %s627 = smul.u32 16, %s31
          %629 = vsyncadd %s623, 0
          %s630 = smul.addr %s627, 4
          %s631 = scalar_lea.hbm %s6, %s630
          %s632 = sshll.u32 %s631, 4
          %s633 = int_to_ptr.hbm [resolvable:$true] %s632
          %s634 = sshll.u32 %s626, 4
          %s635 = int_to_ptr.vmem [resolvable:$true] %s634
          %640 = dma.hbm_to_vmem [thread:$0]  %s633, 1024, %s635, %s623, 64, 64, 4
        $region171: #{tpu_custom_call.1} parent=31 // pred_fallthru
          _
      $region32: #{tpu_custom_call.1} parent=5 // pred_fallthru
        _
      %p641 = scmp.le.s32.totalorder 1, %s23
      %p642 = scmp.lt.s32.totalorder %s23, 5
      %p643 = pnand %p641, %p642
      %p644 = pneg %p643
      // Predicated region
      $region172: #{tpu_custom_call.1} parent=5 // pred_check
        _
      $region173: #{tpu_custom_call.1} parent=5 // pred_check_branch
        %646 = sbr.rel (%p643) target = $region175
      $region174: #{tpu_custom_call.1} parent=5 // pred_region
        %s647 = ssub.s32 %s23, 1
        %s648 = sand.u32 %s50, 1
        %s649 = scalar_lea.sflag [#allocation4], %s648
        %s650 = sand.u32 %s50, 1
        %s651 = smul.addr %s650, 480
        %s652 = scalar_lea.vmem [#allocation3], %s651
        // Predicated region
        $region176: #{tpu_custom_call.1} parent=174 // pred_check
          %p653 = pneg %p63
        $region177: #{tpu_custom_call.1} parent=174 // pred_check_branch
          %655 = sbr.rel (%p653) target = $region179
        $region178: #{tpu_custom_call.1} parent=174 // pred_region
          %657 = dma.done %s649, 7680
        $region179: #{tpu_custom_call.1} parent=174 // pred_fallthru
          _
        %s658 = sand.u32 %s76, 1
        %s659 = sand.u32 %s76, 1
        %s660 = smul.addr %s659, 16
        %s661 = scalar_lea.vmem [#allocation5], %s660
        // Predicated region
        $region180: #{tpu_custom_call.1} parent=174 // pred_check
          %p662 = pneg %p89
        $region181: #{tpu_custom_call.1} parent=174 // pred_check_branch
          %664 = sbr.rel (%p662) target = $region183
        $region182: #{tpu_custom_call.1} parent=174 // pred_region
          _
        $region183: #{tpu_custom_call.1} parent=174 // pred_fallthru
          _
        %s665 = sand.u32 %s102, 1
        %s666 = sand.u32 %s102, 1
        %s667 = smul.addr %s666, 16
        %s668 = scalar_lea.vmem [#allocation6], %s667
        // Predicated region
        $region184: #{tpu_custom_call.1} parent=174 // pred_check
          %p669 = pneg %p115
        $region185: #{tpu_custom_call.1} parent=174 // pred_check_branch
          %671 = sbr.rel (%p669) target = $region187
        $region186: #{tpu_custom_call.1} parent=174 // pred_region
          _
        $region187: #{tpu_custom_call.1} parent=174 // pred_fallthru
          _
        %s672 = sand.u32 %s128, 1
        %s673 = sand.u32 %s128, 1
        %s674 = smul.addr %s673, 16
        %s675 = scalar_lea.vmem [#allocation7], %s674
        // Predicated region
        $region188: #{tpu_custom_call.1} parent=174 // pred_check
          %p676 = pneg %p141
        $region189: #{tpu_custom_call.1} parent=174 // pred_check_branch
          %678 = sbr.rel (%p676) target = $region191
        $region190: #{tpu_custom_call.1} parent=174 // pred_region
          _
        $region191: #{tpu_custom_call.1} parent=174 // pred_fallthru
          _
        %s679 = sand.u32 %s28, 1
        %s680 = scalar_lea.sflag [#allocation9], %s679
        %s681 = sand.u32 %s206, 1
        %s682 = smul.addr %s681, 64
        %s683 = scalar_lea.vmem [#allocation8], %s682
        // Predicated region
        $region192: #{tpu_custom_call.1} parent=174 // pred_check
          %p684 = pneg %p219
        $region193: #{tpu_custom_call.1} parent=174 // pred_check_branch
          %686 = sbr.rel (%p684) target = $region195
        $region194: #{tpu_custom_call.1} parent=174 // pred_region
          %688 = dma.done %s680, 1024
        $region195: #{tpu_custom_call.1} parent=174 // pred_fallthru
          _
        // Predicated region
        $region196: #{tpu_custom_call.1} parent=174 // pred_check
          %p689 = pneg %p261
        $region197: #{tpu_custom_call.1} parent=174 // pred_check_branch
          %691 = sbr.rel (%p689) target = $region199
        $region198: #{tpu_custom_call.1} parent=174 // pred_region
          %693 = dma.done [#allocation9], 2048
        $region199: #{tpu_custom_call.1} parent=174 // pred_fallthru
          _
        %s694 = sand.u32 %s50, 1
        %s695 = scalar_lea.sflag [#allocation4], %s694
        %s696 = sand.u32 %s50, 1
        %s697 = smul.addr %s696, 480
        %s698 = scalar_lea.vmem [#allocation3], %s697
        %p699 = pneg %p63
        %p700 = pneg %p60
        %s701 = sand.u32 %s76, 1
        %s702 = sand.u32 %s76, 1
        %s703 = smul.addr %s702, 16
        %s704 = scalar_lea.vmem [#allocation5], %s703
        %p705 = pneg %p89
        %p706 = pneg %p86
        %s707 = sand.u32 %s102, 1
        %s708 = sand.u32 %s102, 1
        %s709 = smul.addr %s708, 16
        %s710 = scalar_lea.vmem [#allocation6], %s709
        %p711 = pneg %p115
        %p712 = pneg %p112
        %s713 = sand.u32 %s128, 1
        %s714 = sand.u32 %s128, 1
        %s715 = smul.addr %s714, 16
        %s716 = scalar_lea.vmem [#allocation7], %s715
        %p717 = pneg %p141
        %p718 = pneg %p138
        %p719 = scmp.lt.s32.totalorder %s33, 1
        %s720 = scalar_select %p719, %s33, 1
        %s721 = smul.addr %s720, 4
        %s722 = scalar_lea.vmem %s4, %s721
        %p723 = pneg %p167
        %p724 = pneg %p164
        %p725 = scmp.lt.s32.totalorder %s33, 1
        %s726 = scalar_select %p725, %s33, 1
        %s727 = scalar_lea.vmem %s5, %s726
        %p728 = pneg %p193
        %p729 = pneg %p190
        %s730 = sand.u32 %s28, 1
        %s731 = scalar_lea.sflag [#allocation9], %s730
        %s732 = sand.u32 %s206, 1
        %s733 = smul.addr %s732, 64
        %s734 = scalar_lea.vmem [#allocation8], %s733
        %p735 = pneg %p219
        %p736 = pneg %p216
        %p737 = pneg %p240
        %p738 = pneg %p237
        %p739 = pneg %p261
        %p740 = pneg %p258
        %p741 = pneg %p282
        %p742 = pneg %p279
        %p743 = pneg %p303
        %p744 = pneg %p300
        %p745 = pneg %p329
        %p746 = pneg %p326
        %s747 = smul.u32 20, %s32
        %p748 = scmp.lt.s32.totalorder %s747, 39
        %s749 = scalar_select %p748, %s747, 39
        %s750 = smul.addr %s749, 8
        %s751 = scalar_lea.vmem %s11, %s750
        %s752 = smul.u32 20, %s32
        %p753 = scmp.lt.s32.totalorder %s33, 1
        %s754 = scalar_select %p753, %s33, 1
        %s755 = smul.addr %s754, 4
        %s756 = scalar_lea.vmem %s4, %s755
        %p757 = scmp.lt.s32.totalorder %s33, 1
        %s758 = scalar_select %p757, %s33, 1
        %s759 = scalar_lea.vmem %s5, %s758
        %s760 = smul.u32 16, %s33
        %s761 = smul.u32 20, %s32
        %p762 = scmp.lt.s32.totalorder %s761, 39
        %s763 = scalar_select %p762, %s761, 39
        %s764 = smul.addr %s763, 8
        %s765 = scalar_lea.vmem %s11, %s764
        %s766 = smul.u32 20, %s32
        %p767 = scmp.eq.s32.totalorder %s33, 0
        // Predicated region
        $region200: #{tpu_custom_call.1} parent=174 // pred_check
          %p768 = pneg %p767
        $region201: #{tpu_custom_call.1} parent=174 // pred_check_branch
          %770 = sbr.rel (%p768) target = $region203
        $region202: #{tpu_custom_call.1} parent=174 // pred_region
          %771 = vst [vmem:[#allocation2] sm:$0xff] 0.0
          %772 = vst [vmem:[#allocation2 + $0x8] sm:$0xff] 0.0
          %773 = vst [vmem:[#allocation2 + $0x10] sm:$0xff] 0.0
          %774 = vst [vmem:[#allocation2 + $0x18] sm:$0xff] 0.0
          %775 = vst [vmem:[#allocation2 + $0x20] sm:$0xff] 0.0
          %776 = vst [vmem:[#allocation2 + $0x28] sm:$0xff] 0.0
          %777 = vst [vmem:[#allocation2 + $0x30] sm:$0xff] 0.0
          %778 = vst [vmem:[#allocation2 + $0x38] sm:$0xff] 0.0
          %779 = vst [vmem:[#allocation2 + $0x40] sm:$0xff] 0.0
          %780 = vst [vmem:[#allocation2 + $0x48] sm:$0xff] 0.0
          %781 = vst [vmem:[#allocation2 + $0x50] sm:$0xff] 0.0
          %782 = vst [vmem:[#allocation2 + $0x58] sm:$0xff] 0.0
          %783 = vst [vmem:[#allocation2 + $0x60] sm:$0xff] 0.0
          %784 = vst [vmem:[#allocation2 + $0x68] sm:$0xff] 0.0
          %785 = vst [vmem:[#allocation2 + $0x70] sm:$0xff] 0.0
          %786 = vst [vmem:[#allocation2 + $0x78] sm:$0xff] 0.0
          %787 = vst [vmem:[#allocation2 + $0x80] sm:$0xff] 0.0
          %788 = vst [vmem:[#allocation2 + $0x88] sm:$0xff] 0.0
          %789 = vst [vmem:[#allocation2 + $0x90] sm:$0xff] 0.0
          %790 = vst [vmem:[#allocation2 + $0x98] sm:$0xff] 0.0
        $region203: #{tpu_custom_call.1} parent=174 // pred_fallthru
          _
        %v791 = vld [vmem:[%s661] sm:$0x7]
        %v792 = vld [vmem:[%s661 + $0x4] sm:$0x7]
        %v793 = vld [vmem:[%s661 + $0x8] sm:$0x7]
        %v794 = vld [vmem:[%s661 + $0xc] sm:$0x7]
        %v795 = vld [vmem:[%s668] sm:$0x7]
        %v796 = vld [vmem:[%s668 + $0x4] sm:$0x7]
        %v797 = vld [vmem:[%s668 + $0x8] sm:$0x7]
        %v798 = vld [vmem:[%s668 + $0xc] sm:$0x7]
        %v799 = vld [vmem:[%s675] sm:$0x7]
        %v800 = vld [vmem:[%s675 + $0x4] sm:$0x7]
        %v801 = vld [vmem:[%s675 + $0x8] sm:$0x7]
        %v802 = vld [vmem:[%s675 + $0xc] sm:$0x7]
        %v803 = vld [vmem:[%s756] sm:$0x7]
        %v804 = vld [vmem:[%s652] sm:$0xff]
        %v805 = vld [vmem:[%s652 + $0x8] sm:$0xff]
        %v806 = vld [vmem:[%s652 + $0x10] sm:$0xff]
        %v807 = vld [vmem:[%s652 + $0x18] sm:$0xff]
        %v808 = vld [vmem:[%s652 + $0x20] sm:$0xff]
        %v809 = vld [vmem:[%s652 + $0x28] sm:$0xff]
        %v810 = vld [vmem:[%s652 + $0x30] sm:$0xff]
        %v811 = vld [vmem:[%s652 + $0x38] sm:$0xff]
        %v812 = vld [vmem:[%s652 + $0x40] sm:$0xff]
        %v813 = vld [vmem:[%s652 + $0x48] sm:$0xff]
        %v814 = vld [vmem:[%s652 + $0x50] sm:$0xff]
        %v815 = vld [vmem:[%s652 + $0x58] sm:$0xff]
        %v816 = vld [vmem:[%s652 + $0x60] sm:$0xff]
        %v817 = vld [vmem:[%s652 + $0x68] sm:$0xff]
        %v818 = vld [vmem:[%s652 + $0x70] sm:$0xff]
        %v819 = vld [vmem:[%s652 + $0x78] sm:$0xff]
        %v820 = vld [vmem:[%s652 + $0x80] sm:$0xff]
        %v821 = vld [vmem:[%s652 + $0x88] sm:$0xff]
        %v822 = vld [vmem:[%s652 + $0x90] sm:$0xff]
        %v823 = vld [vmem:[%s652 + $0x98] sm:$0xff]
        %v824 = vperm.slane %v791, 0
        %v825 = vmul.f32 %v804, %v824
        %v826 = vmul.f32 %v805, %v824
        %v827 = vmul.f32 %v806, %v824
        %v828 = vmul.f32 %v807, %v824
        %v829 = vmul.f32 %v808, %v824
        %v830 = vmul.f32 %v809, %v824
        %v831 = vmul.f32 %v810, %v824
        %v832 = vmul.f32 %v811, %v824
        %v833 = vmul.f32 %v812, %v824
        %v834 = vmul.f32 %v813, %v824
        %v835 = vmul.f32 %v814, %v824
        %v836 = vmul.f32 %v815, %v824
        %v837 = vmul.f32 %v816, %v824
        %v838 = vmul.f32 %v817, %v824
        %v839 = vmul.f32 %v818, %v824
        %v840 = vmul.f32 %v819, %v824
        %v841 = vmul.f32 %v820, %v824
        %v842 = vmul.f32 %v821, %v824
        %v843 = vmul.f32 %v822, %v824
        %v844 = vmul.f32 %v823, %v824
        %v845 = vperm.slane %v795, 0
        %v846 = vadd.f32 %v825, %v845
        %v847 = vadd.f32 %v826, %v845
        %v848 = vadd.f32 %v827, %v845
        %v849 = vadd.f32 %v828, %v845
        %v850 = vadd.f32 %v829, %v845
        %v851 = vadd.f32 %v830, %v845
        %v852 = vadd.f32 %v831, %v845
        %v853 = vadd.f32 %v832, %v845
        %v854 = vadd.f32 %v833, %v845
        %v855 = vadd.f32 %v834, %v845
        %v856 = vadd.f32 %v835, %v845
        %v857 = vadd.f32 %v836, %v845
        %v858 = vadd.f32 %v837, %v845
        %v859 = vadd.f32 %v838, %v845
        %v860 = vadd.f32 %v839, %v845
        %v861 = vadd.f32 %v840, %v845
        %v862 = vadd.f32 %v841, %v845
        %v863 = vadd.f32 %v842, %v845
        %v864 = vadd.f32 %v843, %v845
        %v865 = vadd.f32 %v844, %v845
        %v866 = vmax.f32 %v846, 0.0
        %v867 = vmax.f32 %v847, 0.0
        %v868 = vmax.f32 %v848, 0.0
        %v869 = vmax.f32 %v849, 0.0
        %v870 = vmax.f32 %v850, 0.0
        %v871 = vmax.f32 %v851, 0.0
        %v872 = vmax.f32 %v852, 0.0
        %v873 = vmax.f32 %v853, 0.0
        %v874 = vmax.f32 %v854, 0.0
        %v875 = vmax.f32 %v855, 0.0
        %v876 = vmax.f32 %v856, 0.0
        %v877 = vmax.f32 %v857, 0.0
        %v878 = vmax.f32 %v858, 0.0
        %v879 = vmax.f32 %v859, 0.0
        %v880 = vmax.f32 %v860, 0.0
        %v881 = vmax.f32 %v861, 0.0
        %v882 = vmax.f32 %v862, 0.0
        %v883 = vmax.f32 %v863, 0.0
        %v884 = vmax.f32 %v864, 0.0
        %v885 = vmax.f32 %v865, 0.0
        %v886 = vperm.slane %v799, 0
        %v887 = vmul.f32 %v886, %v866
        %v888 = vmul.f32 %v886, %v867
        %v889 = vmul.f32 %v886, %v868
        %v890 = vmul.f32 %v886, %v869
        %v891 = vmul.f32 %v886, %v870
        %v892 = vmul.f32 %v886, %v871
        %v893 = vmul.f32 %v886, %v872
        %v894 = vmul.f32 %v886, %v873
        %v895 = vmul.f32 %v886, %v874
        %v896 = vmul.f32 %v886, %v875
        %v897 = vmul.f32 %v886, %v876
        %v898 = vmul.f32 %v886, %v877
        %v899 = vmul.f32 %v886, %v878
        %v900 = vmul.f32 %v886, %v879
        %v901 = vmul.f32 %v886, %v880
        %v902 = vmul.f32 %v886, %v881
        %v903 = vmul.f32 %v886, %v882
        %v904 = vmul.f32 %v886, %v883
        %v905 = vmul.f32 %v886, %v884
        %v906 = vmul.f32 %v886, %v885
        %v907 = vperm.slane %v792, 0
        %v908 = vmul.f32 %v804, %v907
        %v909 = vmul.f32 %v805, %v907
        %v910 = vmul.f32 %v806, %v907
        %v911 = vmul.f32 %v807, %v907
        %v912 = vmul.f32 %v808, %v907
        %v913 = vmul.f32 %v809, %v907
        %v914 = vmul.f32 %v810, %v907
        %v915 = vmul.f32 %v811, %v907
        %v916 = vmul.f32 %v812, %v907
        %v917 = vmul.f32 %v813, %v907
        %v918 = vmul.f32 %v814, %v907
        %v919 = vmul.f32 %v815, %v907
        %v920 = vmul.f32 %v816, %v907
        %v921 = vmul.f32 %v817, %v907
        %v922 = vmul.f32 %v818, %v907
        %v923 = vmul.f32 %v819, %v907
        %v924 = vmul.f32 %v820, %v907
        %v925 = vmul.f32 %v821, %v907
        %v926 = vmul.f32 %v822, %v907
        %v927 = vmul.f32 %v823, %v907
        %v928 = vperm.slane %v796, 0
        %v929 = vadd.f32 %v908, %v928
        %v930 = vadd.f32 %v909, %v928
        %v931 = vadd.f32 %v910, %v928
        %v932 = vadd.f32 %v911, %v928
        %v933 = vadd.f32 %v912, %v928
        %v934 = vadd.f32 %v913, %v928
        %v935 = vadd.f32 %v914, %v928
        %v936 = vadd.f32 %v915, %v928
        %v937 = vadd.f32 %v916, %v928
        %v938 = vadd.f32 %v917, %v928
        %v939 = vadd.f32 %v918, %v928
        %v940 = vadd.f32 %v919, %v928
        %v941 = vadd.f32 %v920, %v928
        %v942 = vadd.f32 %v921, %v928
        %v943 = vadd.f32 %v922, %v928
        %v944 = vadd.f32 %v923, %v928
        %v945 = vadd.f32 %v924, %v928
        %v946 = vadd.f32 %v925, %v928
        %v947 = vadd.f32 %v926, %v928
        %v948 = vadd.f32 %v927, %v928
        %v949 = vmax.f32 %v929, 0.0
        %v950 = vmax.f32 %v930, 0.0
        %v951 = vmax.f32 %v931, 0.0
        %v952 = vmax.f32 %v932, 0.0
        %v953 = vmax.f32 %v933, 0.0
        %v954 = vmax.f32 %v934, 0.0
        %v955 = vmax.f32 %v935, 0.0
        %v956 = vmax.f32 %v936, 0.0
        %v957 = vmax.f32 %v937, 0.0
        %v958 = vmax.f32 %v938, 0.0
        %v959 = vmax.f32 %v939, 0.0
        %v960 = vmax.f32 %v940, 0.0
        %v961 = vmax.f32 %v941, 0.0
        %v962 = vmax.f32 %v942, 0.0
        %v963 = vmax.f32 %v943, 0.0
        %v964 = vmax.f32 %v944, 0.0
        %v965 = vmax.f32 %v945, 0.0
        %v966 = vmax.f32 %v946, 0.0
        %v967 = vmax.f32 %v947, 0.0
        %v968 = vmax.f32 %v948, 0.0
        %v969 = vperm.slane %v800, 0
        %v970 = vmul.f32 %v969, %v949
        %v971 = vmul.f32 %v969, %v950
        %v972 = vmul.f32 %v969, %v951
        %v973 = vmul.f32 %v969, %v952
        %v974 = vmul.f32 %v969, %v953
        %v975 = vmul.f32 %v969, %v954
        %v976 = vmul.f32 %v969, %v955
        %v977 = vmul.f32 %v969, %v956
        %v978 = vmul.f32 %v969, %v957
        %v979 = vmul.f32 %v969, %v958
        %v980 = vmul.f32 %v969, %v959
        %v981 = vmul.f32 %v969, %v960
        %v982 = vmul.f32 %v969, %v961
        %v983 = vmul.f32 %v969, %v962
        %v984 = vmul.f32 %v969, %v963
        %v985 = vmul.f32 %v969, %v964
        %v986 = vmul.f32 %v969, %v965
        %v987 = vmul.f32 %v969, %v966
        %v988 = vmul.f32 %v969, %v967
        %v989 = vmul.f32 %v969, %v968
        %v990 = vadd.f32 %v887, %v970
        %v991 = vadd.f32 %v888, %v971
        %v992 = vadd.f32 %v889, %v972
        %v993 = vadd.f32 %v890, %v973
        %v994 = vadd.f32 %v891, %v974
        %v995 = vadd.f32 %v892, %v975
        %v996 = vadd.f32 %v893, %v976
        %v997 = vadd.f32 %v894, %v977
        %v998 = vadd.f32 %v895, %v978
        %v999 = vadd.f32 %v896, %v979
        %v1000 = vadd.f32 %v897, %v980
        %v1001 = vadd.f32 %v898, %v981
        %v1002 = vadd.f32 %v899, %v982
        %v1003 = vadd.f32 %v900, %v983
        %v1004 = vadd.f32 %v901, %v984
        %v1005 = vadd.f32 %v902, %v985
        %v1006 = vadd.f32 %v903, %v986
        %v1007 = vadd.f32 %v904, %v987
        %v1008 = vadd.f32 %v905, %v988
        %v1009 = vadd.f32 %v906, %v989
        %v1010 = vperm.slane %v793, 0
        %v1011 = vmul.f32 %v804, %v1010
        %v1012 = vmul.f32 %v805, %v1010
        %v1013 = vmul.f32 %v806, %v1010
        %v1014 = vmul.f32 %v807, %v1010
        %v1015 = vmul.f32 %v808, %v1010
        %v1016 = vmul.f32 %v809, %v1010
        %v1017 = vmul.f32 %v810, %v1010
        %v1018 = vmul.f32 %v811, %v1010
        %v1019 = vmul.f32 %v812, %v1010
        %v1020 = vmul.f32 %v813, %v1010
        %v1021 = vmul.f32 %v814, %v1010
        %v1022 = vmul.f32 %v815, %v1010
        %v1023 = vmul.f32 %v816, %v1010
        %v1024 = vmul.f32 %v817, %v1010
        %v1025 = vmul.f32 %v818, %v1010
        %v1026 = vmul.f32 %v819, %v1010
        %v1027 = vmul.f32 %v820, %v1010
        %v1028 = vmul.f32 %v821, %v1010
        %v1029 = vmul.f32 %v822, %v1010
        %v1030 = vmul.f32 %v823, %v1010
        %v1031 = vperm.slane %v797, 0
        %v1032 = vadd.f32 %v1011, %v1031
        %v1033 = vadd.f32 %v1012, %v1031
        %v1034 = vadd.f32 %v1013, %v1031
        %v1035 = vadd.f32 %v1014, %v1031
        %v1036 = vadd.f32 %v1015, %v1031
        %v1037 = vadd.f32 %v1016, %v1031
        %v1038 = vadd.f32 %v1017, %v1031
        %v1039 = vadd.f32 %v1018, %v1031
        %v1040 = vadd.f32 %v1019, %v1031
        %v1041 = vadd.f32 %v1020, %v1031
        %v1042 = vadd.f32 %v1021, %v1031
        %v1043 = vadd.f32 %v1022, %v1031
        %v1044 = vadd.f32 %v1023, %v1031
        %v1045 = vadd.f32 %v1024, %v1031
        %v1046 = vadd.f32 %v1025, %v1031
        %v1047 = vadd.f32 %v1026, %v1031
        %v1048 = vadd.f32 %v1027, %v1031
        %v1049 = vadd.f32 %v1028, %v1031
        %v1050 = vadd.f32 %v1029, %v1031
        %v1051 = vadd.f32 %v1030, %v1031
        %v1052 = vmax.f32 %v1032, 0.0
        %v1053 = vmax.f32 %v1033, 0.0
        %v1054 = vmax.f32 %v1034, 0.0
        %v1055 = vmax.f32 %v1035, 0.0
        %v1056 = vmax.f32 %v1036, 0.0
        %v1057 = vmax.f32 %v1037, 0.0
        %v1058 = vmax.f32 %v1038, 0.0
        %v1059 = vmax.f32 %v1039, 0.0
        %v1060 = vmax.f32 %v1040, 0.0
        %v1061 = vmax.f32 %v1041, 0.0
        %v1062 = vmax.f32 %v1042, 0.0
        %v1063 = vmax.f32 %v1043, 0.0
        %v1064 = vmax.f32 %v1044, 0.0
        %v1065 = vmax.f32 %v1045, 0.0
        %v1066 = vmax.f32 %v1046, 0.0
        %v1067 = vmax.f32 %v1047, 0.0
        %v1068 = vmax.f32 %v1048, 0.0
        %v1069 = vmax.f32 %v1049, 0.0
        %v1070 = vmax.f32 %v1050, 0.0
        %v1071 = vmax.f32 %v1051, 0.0
        %v1072 = vperm.slane %v801, 0
        %v1073 = vmul.f32 %v1072, %v1052
        %v1074 = vmul.f32 %v1072, %v1053
        %v1075 = vmul.f32 %v1072, %v1054
        %v1076 = vmul.f32 %v1072, %v1055
        %v1077 = vmul.f32 %v1072, %v1056
        %v1078 = vmul.f32 %v1072, %v1057
        %v1079 = vmul.f32 %v1072, %v1058
        %v1080 = vmul.f32 %v1072, %v1059
        %v1081 = vmul.f32 %v1072, %v1060
        %v1082 = vmul.f32 %v1072, %v1061
        %v1083 = vmul.f32 %v1072, %v1062
        %v1084 = vmul.f32 %v1072, %v1063
        %v1085 = vmul.f32 %v1072, %v1064
        %v1086 = vmul.f32 %v1072, %v1065
        %v1087 = vmul.f32 %v1072, %v1066
        %v1088 = vmul.f32 %v1072, %v1067
        %v1089 = vmul.f32 %v1072, %v1068
        %v1090 = vmul.f32 %v1072, %v1069
        %v1091 = vmul.f32 %v1072, %v1070
        %v1092 = vmul.f32 %v1072, %v1071
        %v1093 = vadd.f32 %v990, %v1073
        %v1094 = vadd.f32 %v991, %v1074
        %v1095 = vadd.f32 %v992, %v1075
        %v1096 = vadd.f32 %v993, %v1076
        %v1097 = vadd.f32 %v994, %v1077
        %v1098 = vadd.f32 %v995, %v1078
        %v1099 = vadd.f32 %v996, %v1079
        %v1100 = vadd.f32 %v997, %v1080
        %v1101 = vadd.f32 %v998, %v1081
        %v1102 = vadd.f32 %v999, %v1082
        %v1103 = vadd.f32 %v1000, %v1083
        %v1104 = vadd.f32 %v1001, %v1084
        %v1105 = vadd.f32 %v1002, %v1085
        %v1106 = vadd.f32 %v1003, %v1086
        %v1107 = vadd.f32 %v1004, %v1087
        %v1108 = vadd.f32 %v1005, %v1088
        %v1109 = vadd.f32 %v1006, %v1089
        %v1110 = vadd.f32 %v1007, %v1090
        %v1111 = vadd.f32 %v1008, %v1091
        %v1112 = vadd.f32 %v1009, %v1092
        %v1113 = vperm.slane %v794, 0
        %v1114 = vmul.f32 %v804, %v1113
        %v1115 = vmul.f32 %v805, %v1113
        %v1116 = vmul.f32 %v806, %v1113
        %v1117 = vmul.f32 %v807, %v1113
        %v1118 = vmul.f32 %v808, %v1113
        %v1119 = vmul.f32 %v809, %v1113
        %v1120 = vmul.f32 %v810, %v1113
        %v1121 = vmul.f32 %v811, %v1113
        %v1122 = vmul.f32 %v812, %v1113
        %v1123 = vmul.f32 %v813, %v1113
        %v1124 = vmul.f32 %v814, %v1113
        %v1125 = vmul.f32 %v815, %v1113
        %v1126 = vmul.f32 %v816, %v1113
        %v1127 = vmul.f32 %v817, %v1113
        %v1128 = vmul.f32 %v818, %v1113
        %v1129 = vmul.f32 %v819, %v1113
        %v1130 = vmul.f32 %v820, %v1113
        %v1131 = vmul.f32 %v821, %v1113
        %v1132 = vmul.f32 %v822, %v1113
        %v1133 = vmul.f32 %v823, %v1113
        %v1134 = vperm.slane %v798, 0
        %v1135 = vadd.f32 %v1114, %v1134
        %v1136 = vadd.f32 %v1115, %v1134
        %v1137 = vadd.f32 %v1116, %v1134
        %v1138 = vadd.f32 %v1117, %v1134
        %v1139 = vadd.f32 %v1118, %v1134
        %v1140 = vadd.f32 %v1119, %v1134
        %v1141 = vadd.f32 %v1120, %v1134
        %v1142 = vadd.f32 %v1121, %v1134
        %v1143 = vadd.f32 %v1122, %v1134
        %v1144 = vadd.f32 %v1123, %v1134
        %v1145 = vadd.f32 %v1124, %v1134
        %v1146 = vadd.f32 %v1125, %v1134
        %v1147 = vadd.f32 %v1126, %v1134
        %v1148 = vadd.f32 %v1127, %v1134
        %v1149 = vadd.f32 %v1128, %v1134
        %v1150 = vadd.f32 %v1129, %v1134
        %v1151 = vadd.f32 %v1130, %v1134
        %v1152 = vadd.f32 %v1131, %v1134
        %v1153 = vadd.f32 %v1132, %v1134
        %v1154 = vadd.f32 %v1133, %v1134
        %v1155 = vmax.f32 %v1135, 0.0
        %v1156 = vmax.f32 %v1136, 0.0
        %v1157 = vmax.f32 %v1137, 0.0
        %v1158 = vmax.f32 %v1138, 0.0
        %v1159 = vmax.f32 %v1139, 0.0
        %v1160 = vmax.f32 %v1140, 0.0
        %v1161 = vmax.f32 %v1141, 0.0
        %v1162 = vmax.f32 %v1142, 0.0
        %v1163 = vmax.f32 %v1143, 0.0
        %v1164 = vmax.f32 %v1144, 0.0
        %v1165 = vmax.f32 %v1145, 0.0
        %v1166 = vmax.f32 %v1146, 0.0
        %v1167 = vmax.f32 %v1147, 0.0
        %v1168 = vmax.f32 %v1148, 0.0
        %v1169 = vmax.f32 %v1149, 0.0
        %v1170 = vmax.f32 %v1150, 0.0
        %v1171 = vmax.f32 %v1151, 0.0
        %v1172 = vmax.f32 %v1152, 0.0
        %v1173 = vmax.f32 %v1153, 0.0
        %v1174 = vmax.f32 %v1154, 0.0
        %v1175 = vperm.slane %v802, 0
        %v1176 = vmul.f32 %v1175, %v1155
        %v1177 = vmul.f32 %v1175, %v1156
        %v1178 = vmul.f32 %v1175, %v1157
        %v1179 = vmul.f32 %v1175, %v1158
        %v1180 = vmul.f32 %v1175, %v1159
        %v1181 = vmul.f32 %v1175, %v1160
        %v1182 = vmul.f32 %v1175, %v1161
        %v1183 = vmul.f32 %v1175, %v1162
        %v1184 = vmul.f32 %v1175, %v1163
        %v1185 = vmul.f32 %v1175, %v1164
        %v1186 = vmul.f32 %v1175, %v1165
        %v1187 = vmul.f32 %v1175, %v1166
        %v1188 = vmul.f32 %v1175, %v1167
        %v1189 = vmul.f32 %v1175, %v1168
        %v1190 = vmul.f32 %v1175, %v1169
        %v1191 = vmul.f32 %v1175, %v1170
        %v1192 = vmul.f32 %v1175, %v1171
        %v1193 = vmul.f32 %v1175, %v1172
        %v1194 = vmul.f32 %v1175, %v1173
        %v1195 = vmul.f32 %v1175, %v1174
        %v1196 = vadd.f32 %v1093, %v1176
        %v1197 = vadd.f32 %v1094, %v1177
        %v1198 = vadd.f32 %v1095, %v1178
        %v1199 = vadd.f32 %v1096, %v1179
        %v1200 = vadd.f32 %v1097, %v1180
        %v1201 = vadd.f32 %v1098, %v1181
        %v1202 = vadd.f32 %v1099, %v1182
        %v1203 = vadd.f32 %v1100, %v1183
        %v1204 = vadd.f32 %v1101, %v1184
        %v1205 = vadd.f32 %v1102, %v1185
        %v1206 = vadd.f32 %v1103, %v1186
        %v1207 = vadd.f32 %v1104, %v1187
        %v1208 = vadd.f32 %v1105, %v1188
        %v1209 = vadd.f32 %v1106, %v1189
        %v1210 = vadd.f32 %v1107, %v1190
        %v1211 = vadd.f32 %v1108, %v1191
        %v1212 = vadd.f32 %v1109, %v1192
        %v1213 = vadd.f32 %v1110, %v1193
        %v1214 = vadd.f32 %v1111, %v1194
        %v1215 = vadd.f32 %v1112, %v1195
        %v1216 = vperm.slane %v803, 0
        %v1217 = vadd.f32 %v1196, %v1216
        %v1218 = vadd.f32 %v1197, %v1216
        %v1219 = vadd.f32 %v1198, %v1216
        %v1220 = vadd.f32 %v1199, %v1216
        %v1221 = vadd.f32 %v1200, %v1216
        %v1222 = vadd.f32 %v1201, %v1216
        %v1223 = vadd.f32 %v1202, %v1216
        %v1224 = vadd.f32 %v1203, %v1216
        %v1225 = vadd.f32 %v1204, %v1216
        %v1226 = vadd.f32 %v1205, %v1216
        %v1227 = vadd.f32 %v1206, %v1216
        %v1228 = vadd.f32 %v1207, %v1216
        %v1229 = vadd.f32 %v1208, %v1216
        %v1230 = vadd.f32 %v1209, %v1216
        %v1231 = vadd.f32 %v1210, %v1216
        %v1232 = vadd.f32 %v1211, %v1216
        %v1233 = vadd.f32 %v1212, %v1216
        %v1234 = vadd.f32 %v1213, %v1216
        %v1235 = vadd.f32 %v1214, %v1216
        %v1236 = vadd.f32 %v1215, %v1216
        %s1237 = scalar_lea.vmem %s652, 160 [#allocation3]
        %v1238 = vld [vmem:[%s1237] sm:$0xff]
        %v1239 = vld [vmem:[%s1237 + $0x8] sm:$0xff]
        %v1240 = vld [vmem:[%s1237 + $0x10] sm:$0xff]
        %v1241 = vld [vmem:[%s1237 + $0x18] sm:$0xff]
        %v1242 = vld [vmem:[%s1237 + $0x20] sm:$0xff]
        %v1243 = vld [vmem:[%s1237 + $0x28] sm:$0xff]
        %v1244 = vld [vmem:[%s1237 + $0x30] sm:$0xff]
        %v1245 = vld [vmem:[%s1237 + $0x38] sm:$0xff]
        %v1246 = vld [vmem:[%s1237 + $0x40] sm:$0xff]
        %v1247 = vld [vmem:[%s1237 + $0x48] sm:$0xff]
        %v1248 = vld [vmem:[%s1237 + $0x50] sm:$0xff]
        %v1249 = vld [vmem:[%s1237 + $0x58] sm:$0xff]
        %v1250 = vld [vmem:[%s1237 + $0x60] sm:$0xff]
        %v1251 = vld [vmem:[%s1237 + $0x68] sm:$0xff]
        %v1252 = vld [vmem:[%s1237 + $0x70] sm:$0xff]
        %v1253 = vld [vmem:[%s1237 + $0x78] sm:$0xff]
        %v1254 = vld [vmem:[%s1237 + $0x80] sm:$0xff]
        %v1255 = vld [vmem:[%s1237 + $0x88] sm:$0xff]
        %v1256 = vld [vmem:[%s1237 + $0x90] sm:$0xff]
        %v1257 = vld [vmem:[%s1237 + $0x98] sm:$0xff]
        %v1258 = vperm.slane %v791, 1
        %v1259 = vmul.f32 %v1238, %v1258
        %v1260 = vmul.f32 %v1239, %v1258
        %v1261 = vmul.f32 %v1240, %v1258
        %v1262 = vmul.f32 %v1241, %v1258
        %v1263 = vmul.f32 %v1242, %v1258
        %v1264 = vmul.f32 %v1243, %v1258
        %v1265 = vmul.f32 %v1244, %v1258
        %v1266 = vmul.f32 %v1245, %v1258
        %v1267 = vmul.f32 %v1246, %v1258
        %v1268 = vmul.f32 %v1247, %v1258
        %v1269 = vmul.f32 %v1248, %v1258
        %v1270 = vmul.f32 %v1249, %v1258
        %v1271 = vmul.f32 %v1250, %v1258
        %v1272 = vmul.f32 %v1251, %v1258
        %v1273 = vmul.f32 %v1252, %v1258
        %v1274 = vmul.f32 %v1253, %v1258
        %v1275 = vmul.f32 %v1254, %v1258
        %v1276 = vmul.f32 %v1255, %v1258
        %v1277 = vmul.f32 %v1256, %v1258
        %v1278 = vmul.f32 %v1257, %v1258
        %v1279 = vperm.slane %v795, 1
        %v1280 = vadd.f32 %v1259, %v1279
        %v1281 = vadd.f32 %v1260, %v1279
        %v1282 = vadd.f32 %v1261, %v1279
        %v1283 = vadd.f32 %v1262, %v1279
        %v1284 = vadd.f32 %v1263, %v1279
        %v1285 = vadd.f32 %v1264, %v1279
        %v1286 = vadd.f32 %v1265, %v1279
        %v1287 = vadd.f32 %v1266, %v1279
        %v1288 = vadd.f32 %v1267, %v1279
        %v1289 = vadd.f32 %v1268, %v1279
        %v1290 = vadd.f32 %v1269, %v1279
        %v1291 = vadd.f32 %v1270, %v1279
        %v1292 = vadd.f32 %v1271, %v1279
        %v1293 = vadd.f32 %v1272, %v1279
        %v1294 = vadd.f32 %v1273, %v1279
        %v1295 = vadd.f32 %v1274, %v1279
        %v1296 = vadd.f32 %v1275, %v1279
        %v1297 = vadd.f32 %v1276, %v1279
        %v1298 = vadd.f32 %v1277, %v1279
        %v1299 = vadd.f32 %v1278, %v1279
        %v1300 = vmax.f32 %v1280, 0.0
        %v1301 = vmax.f32 %v1281, 0.0
        %v1302 = vmax.f32 %v1282, 0.0
        %v1303 = vmax.f32 %v1283, 0.0
        %v1304 = vmax.f32 %v1284, 0.0
        %v1305 = vmax.f32 %v1285, 0.0
        %v1306 = vmax.f32 %v1286, 0.0
        %v1307 = vmax.f32 %v1287, 0.0
        %v1308 = vmax.f32 %v1288, 0.0
        %v1309 = vmax.f32 %v1289, 0.0
        %v1310 = vmax.f32 %v1290, 0.0
        %v1311 = vmax.f32 %v1291, 0.0
        %v1312 = vmax.f32 %v1292, 0.0
        %v1313 = vmax.f32 %v1293, 0.0
        %v1314 = vmax.f32 %v1294, 0.0
        %v1315 = vmax.f32 %v1295, 0.0
        %v1316 = vmax.f32 %v1296, 0.0
        %v1317 = vmax.f32 %v1297, 0.0
        %v1318 = vmax.f32 %v1298, 0.0
        %v1319 = vmax.f32 %v1299, 0.0
        %v1320 = vperm.slane %v799, 1
        %v1321 = vmul.f32 %v1320, %v1300
        %v1322 = vmul.f32 %v1320, %v1301
        %v1323 = vmul.f32 %v1320, %v1302
        %v1324 = vmul.f32 %v1320, %v1303
        %v1325 = vmul.f32 %v1320, %v1304
        %v1326 = vmul.f32 %v1320, %v1305
        %v1327 = vmul.f32 %v1320, %v1306
        %v1328 = vmul.f32 %v1320, %v1307
        %v1329 = vmul.f32 %v1320, %v1308
        %v1330 = vmul.f32 %v1320, %v1309
        %v1331 = vmul.f32 %v1320, %v1310
        %v1332 = vmul.f32 %v1320, %v1311
        %v1333 = vmul.f32 %v1320, %v1312
        %v1334 = vmul.f32 %v1320, %v1313
        %v1335 = vmul.f32 %v1320, %v1314
        %v1336 = vmul.f32 %v1320, %v1315
        %v1337 = vmul.f32 %v1320, %v1316
        %v1338 = vmul.f32 %v1320, %v1317
        %v1339 = vmul.f32 %v1320, %v1318
        %v1340 = vmul.f32 %v1320, %v1319
        %v1341 = vperm.slane %v792, 1
        %v1342 = vmul.f32 %v1238, %v1341
        %v1343 = vmul.f32 %v1239, %v1341
        %v1344 = vmul.f32 %v1240, %v1341
        %v1345 = vmul.f32 %v1241, %v1341
        %v1346 = vmul.f32 %v1242, %v1341
        %v1347 = vmul.f32 %v1243, %v1341
        %v1348 = vmul.f32 %v1244, %v1341
        %v1349 = vmul.f32 %v1245, %v1341
        %v1350 = vmul.f32 %v1246, %v1341
        %v1351 = vmul.f32 %v1247, %v1341
        %v1352 = vmul.f32 %v1248, %v1341
        %v1353 = vmul.f32 %v1249, %v1341
        %v1354 = vmul.f32 %v1250, %v1341
        %v1355 = vmul.f32 %v1251, %v1341
        %v1356 = vmul.f32 %v1252, %v1341
        %v1357 = vmul.f32 %v1253, %v1341
        %v1358 = vmul.f32 %v1254, %v1341
        %v1359 = vmul.f32 %v1255, %v1341
        %v1360 = vmul.f32 %v1256, %v1341
        %v1361 = vmul.f32 %v1257, %v1341
        %v1362 = vperm.slane %v796, 1
        %v1363 = vadd.f32 %v1342, %v1362
        %v1364 = vadd.f32 %v1343, %v1362
        %v1365 = vadd.f32 %v1344, %v1362
        %v1366 = vadd.f32 %v1345, %v1362
        %v1367 = vadd.f32 %v1346, %v1362
        %v1368 = vadd.f32 %v1347, %v1362
        %v1369 = vadd.f32 %v1348, %v1362
        %v1370 = vadd.f32 %v1349, %v1362
        %v1371 = vadd.f32 %v1350, %v1362
        %v1372 = vadd.f32 %v1351, %v1362
        %v1373 = vadd.f32 %v1352, %v1362
        %v1374 = vadd.f32 %v1353, %v1362
        %v1375 = vadd.f32 %v1354, %v1362
        %v1376 = vadd.f32 %v1355, %v1362
        %v1377 = vadd.f32 %v1356, %v1362
        %v1378 = vadd.f32 %v1357, %v1362
        %v1379 = vadd.f32 %v1358, %v1362
        %v1380 = vadd.f32 %v1359, %v1362
        %v1381 = vadd.f32 %v1360, %v1362
        %v1382 = vadd.f32 %v1361, %v1362
        %v1383 = vmax.f32 %v1363, 0.0
        %v1384 = vmax.f32 %v1364, 0.0
        %v1385 = vmax.f32 %v1365, 0.0
        %v1386 = vmax.f32 %v1366, 0.0
        %v1387 = vmax.f32 %v1367, 0.0
        %v1388 = vmax.f32 %v1368, 0.0
        %v1389 = vmax.f32 %v1369, 0.0
        %v1390 = vmax.f32 %v1370, 0.0
        %v1391 = vmax.f32 %v1371, 0.0
        %v1392 = vmax.f32 %v1372, 0.0
        %v1393 = vmax.f32 %v1373, 0.0
        %v1394 = vmax.f32 %v1374, 0.0
        %v1395 = vmax.f32 %v1375, 0.0
        %v1396 = vmax.f32 %v1376, 0.0
        %v1397 = vmax.f32 %v1377, 0.0
        %v1398 = vmax.f32 %v1378, 0.0
        %v1399 = vmax.f32 %v1379, 0.0
        %v1400 = vmax.f32 %v1380, 0.0
        %v1401 = vmax.f32 %v1381, 0.0
        %v1402 = vmax.f32 %v1382, 0.0
        %v1403 = vperm.slane %v800, 1
        %v1404 = vmul.f32 %v1403, %v1383
        %v1405 = vmul.f32 %v1403, %v1384
        %v1406 = vmul.f32 %v1403, %v1385
        %v1407 = vmul.f32 %v1403, %v1386
        %v1408 = vmul.f32 %v1403, %v1387
        %v1409 = vmul.f32 %v1403, %v1388
        %v1410 = vmul.f32 %v1403, %v1389
        %v1411 = vmul.f32 %v1403, %v1390
        %v1412 = vmul.f32 %v1403, %v1391
        %v1413 = vmul.f32 %v1403, %v1392
        %v1414 = vmul.f32 %v1403, %v1393
        %v1415 = vmul.f32 %v1403, %v1394
        %v1416 = vmul.f32 %v1403, %v1395
        %v1417 = vmul.f32 %v1403, %v1396
        %v1418 = vmul.f32 %v1403, %v1397
        %v1419 = vmul.f32 %v1403, %v1398
        %v1420 = vmul.f32 %v1403, %v1399
        %v1421 = vmul.f32 %v1403, %v1400
        %v1422 = vmul.f32 %v1403, %v1401
        %v1423 = vmul.f32 %v1403, %v1402
        %v1424 = vadd.f32 %v1321, %v1404
        %v1425 = vadd.f32 %v1322, %v1405
        %v1426 = vadd.f32 %v1323, %v1406
        %v1427 = vadd.f32 %v1324, %v1407
        %v1428 = vadd.f32 %v1325, %v1408
        %v1429 = vadd.f32 %v1326, %v1409
        %v1430 = vadd.f32 %v1327, %v1410
        %v1431 = vadd.f32 %v1328, %v1411
        %v1432 = vadd.f32 %v1329, %v1412
        %v1433 = vadd.f32 %v1330, %v1413
        %v1434 = vadd.f32 %v1331, %v1414
        %v1435 = vadd.f32 %v1332, %v1415
        %v1436 = vadd.f32 %v1333, %v1416
        %v1437 = vadd.f32 %v1334, %v1417
        %v1438 = vadd.f32 %v1335, %v1418
        %v1439 = vadd.f32 %v1336, %v1419
        %v1440 = vadd.f32 %v1337, %v1420
        %v1441 = vadd.f32 %v1338, %v1421
        %v1442 = vadd.f32 %v1339, %v1422
        %v1443 = vadd.f32 %v1340, %v1423
        %v1444 = vperm.slane %v793, 1
        %v1445 = vmul.f32 %v1238, %v1444
        %v1446 = vmul.f32 %v1239, %v1444
        %v1447 = vmul.f32 %v1240, %v1444
        %v1448 = vmul.f32 %v1241, %v1444
        %v1449 = vmul.f32 %v1242, %v1444
        %v1450 = vmul.f32 %v1243, %v1444
        %v1451 = vmul.f32 %v1244, %v1444
        %v1452 = vmul.f32 %v1245, %v1444
        %v1453 = vmul.f32 %v1246, %v1444
        %v1454 = vmul.f32 %v1247, %v1444
        %v1455 = vmul.f32 %v1248, %v1444
        %v1456 = vmul.f32 %v1249, %v1444
        %v1457 = vmul.f32 %v1250, %v1444
        %v1458 = vmul.f32 %v1251, %v1444
        %v1459 = vmul.f32 %v1252, %v1444
        %v1460 = vmul.f32 %v1253, %v1444
        %v1461 = vmul.f32 %v1254, %v1444
        %v1462 = vmul.f32 %v1255, %v1444
        %v1463 = vmul.f32 %v1256, %v1444
        %v1464 = vmul.f32 %v1257, %v1444
        %v1465 = vperm.slane %v797, 1
        %v1466 = vadd.f32 %v1445, %v1465
        %v1467 = vadd.f32 %v1446, %v1465
        %v1468 = vadd.f32 %v1447, %v1465
        %v1469 = vadd.f32 %v1448, %v1465
        %v1470 = vadd.f32 %v1449, %v1465
        %v1471 = vadd.f32 %v1450, %v1465
        %v1472 = vadd.f32 %v1451, %v1465
        %v1473 = vadd.f32 %v1452, %v1465
        %v1474 = vadd.f32 %v1453, %v1465
        %v1475 = vadd.f32 %v1454, %v1465
        %v1476 = vadd.f32 %v1455, %v1465
        %v1477 = vadd.f32 %v1456, %v1465
        %v1478 = vadd.f32 %v1457, %v1465
        %v1479 = vadd.f32 %v1458, %v1465
        %v1480 = vadd.f32 %v1459, %v1465
        %v1481 = vadd.f32 %v1460, %v1465
        %v1482 = vadd.f32 %v1461, %v1465
        %v1483 = vadd.f32 %v1462, %v1465
        %v1484 = vadd.f32 %v1463, %v1465
        %v1485 = vadd.f32 %v1464, %v1465
        %v1486 = vmax.f32 %v1466, 0.0
        %v1487 = vmax.f32 %v1467, 0.0
        %v1488 = vmax.f32 %v1468, 0.0
        %v1489 = vmax.f32 %v1469, 0.0
        %v1490 = vmax.f32 %v1470, 0.0
        %v1491 = vmax.f32 %v1471, 0.0
        %v1492 = vmax.f32 %v1472, 0.0
        %v1493 = vmax.f32 %v1473, 0.0
        %v1494 = vmax.f32 %v1474, 0.0
        %v1495 = vmax.f32 %v1475, 0.0
        %v1496 = vmax.f32 %v1476, 0.0
        %v1497 = vmax.f32 %v1477, 0.0
        %v1498 = vmax.f32 %v1478, 0.0
        %v1499 = vmax.f32 %v1479, 0.0
        %v1500 = vmax.f32 %v1480, 0.0
        %v1501 = vmax.f32 %v1481, 0.0
        %v1502 = vmax.f32 %v1482, 0.0
        %v1503 = vmax.f32 %v1483, 0.0
        %v1504 = vmax.f32 %v1484, 0.0
        %v1505 = vmax.f32 %v1485, 0.0
        %v1506 = vperm.slane %v801, 1
        %v1507 = vmul.f32 %v1506, %v1486
        %v1508 = vmul.f32 %v1506, %v1487
        %v1509 = vmul.f32 %v1506, %v1488
        %v1510 = vmul.f32 %v1506, %v1489
        %v1511 = vmul.f32 %v1506, %v1490
        %v1512 = vmul.f32 %v1506, %v1491
        %v1513 = vmul.f32 %v1506, %v1492
        %v1514 = vmul.f32 %v1506, %v1493
        %v1515 = vmul.f32 %v1506, %v1494
        %v1516 = vmul.f32 %v1506, %v1495
        %v1517 = vmul.f32 %v1506, %v1496
        %v1518 = vmul.f32 %v1506, %v1497
        %v1519 = vmul.f32 %v1506, %v1498
        %v1520 = vmul.f32 %v1506, %v1499
        %v1521 = vmul.f32 %v1506, %v1500
        %v1522 = vmul.f32 %v1506, %v1501
        %v1523 = vmul.f32 %v1506, %v1502
        %v1524 = vmul.f32 %v1506, %v1503
        %v1525 = vmul.f32 %v1506, %v1504
        %v1526 = vmul.f32 %v1506, %v1505
        %v1527 = vadd.f32 %v1424, %v1507
        %v1528 = vadd.f32 %v1425, %v1508
        %v1529 = vadd.f32 %v1426, %v1509
        %v1530 = vadd.f32 %v1427, %v1510
        %v1531 = vadd.f32 %v1428, %v1511
        %v1532 = vadd.f32 %v1429, %v1512
        %v1533 = vadd.f32 %v1430, %v1513
        %v1534 = vadd.f32 %v1431, %v1514
        %v1535 = vadd.f32 %v1432, %v1515
        %v1536 = vadd.f32 %v1433, %v1516
        %v1537 = vadd.f32 %v1434, %v1517
        %v1538 = vadd.f32 %v1435, %v1518
        %v1539 = vadd.f32 %v1436, %v1519
        %v1540 = vadd.f32 %v1437, %v1520
        %v1541 = vadd.f32 %v1438, %v1521
        %v1542 = vadd.f32 %v1439, %v1522
        %v1543 = vadd.f32 %v1440, %v1523
        %v1544 = vadd.f32 %v1441, %v1524
        %v1545 = vadd.f32 %v1442, %v1525
        %v1546 = vadd.f32 %v1443, %v1526
        %v1547 = vperm.slane %v794, 1
        %v1548 = vmul.f32 %v1238, %v1547
        %v1549 = vmul.f32 %v1239, %v1547
        %v1550 = vmul.f32 %v1240, %v1547
        %v1551 = vmul.f32 %v1241, %v1547
        %v1552 = vmul.f32 %v1242, %v1547
        %v1553 = vmul.f32 %v1243, %v1547
        %v1554 = vmul.f32 %v1244, %v1547
        %v1555 = vmul.f32 %v1245, %v1547
        %v1556 = vmul.f32 %v1246, %v1547
        %v1557 = vmul.f32 %v1247, %v1547
        %v1558 = vmul.f32 %v1248, %v1547
        %v1559 = vmul.f32 %v1249, %v1547
        %v1560 = vmul.f32 %v1250, %v1547
        %v1561 = vmul.f32 %v1251, %v1547
        %v1562 = vmul.f32 %v1252, %v1547
        %v1563 = vmul.f32 %v1253, %v1547
        %v1564 = vmul.f32 %v1254, %v1547
        %v1565 = vmul.f32 %v1255, %v1547
        %v1566 = vmul.f32 %v1256, %v1547
        %v1567 = vmul.f32 %v1257, %v1547
        %v1568 = vperm.slane %v798, 1
        %v1569 = vadd.f32 %v1548, %v1568
        %v1570 = vadd.f32 %v1549, %v1568
        %v1571 = vadd.f32 %v1550, %v1568
        %v1572 = vadd.f32 %v1551, %v1568
        %v1573 = vadd.f32 %v1552, %v1568
        %v1574 = vadd.f32 %v1553, %v1568
        %v1575 = vadd.f32 %v1554, %v1568
        %v1576 = vadd.f32 %v1555, %v1568
        %v1577 = vadd.f32 %v1556, %v1568
        %v1578 = vadd.f32 %v1557, %v1568
        %v1579 = vadd.f32 %v1558, %v1568
        %v1580 = vadd.f32 %v1559, %v1568
        %v1581 = vadd.f32 %v1560, %v1568
        %v1582 = vadd.f32 %v1561, %v1568
        %v1583 = vadd.f32 %v1562, %v1568
        %v1584 = vadd.f32 %v1563, %v1568
        %v1585 = vadd.f32 %v1564, %v1568
        %v1586 = vadd.f32 %v1565, %v1568
        %v1587 = vadd.f32 %v1566, %v1568
        %v1588 = vadd.f32 %v1567, %v1568
        %v1589 = vmax.f32 %v1569, 0.0
        %v1590 = vmax.f32 %v1570, 0.0
        %v1591 = vmax.f32 %v1571, 0.0
        %v1592 = vmax.f32 %v1572, 0.0
        %v1593 = vmax.f32 %v1573, 0.0
        %v1594 = vmax.f32 %v1574, 0.0
        %v1595 = vmax.f32 %v1575, 0.0
        %v1596 = vmax.f32 %v1576, 0.0
        %v1597 = vmax.f32 %v1577, 0.0
        %v1598 = vmax.f32 %v1578, 0.0
        %v1599 = vmax.f32 %v1579, 0.0
        %v1600 = vmax.f32 %v1580, 0.0
        %v1601 = vmax.f32 %v1581, 0.0
        %v1602 = vmax.f32 %v1582, 0.0
        %v1603 = vmax.f32 %v1583, 0.0
        %v1604 = vmax.f32 %v1584, 0.0
        %v1605 = vmax.f32 %v1585, 0.0
        %v1606 = vmax.f32 %v1586, 0.0
        %v1607 = vmax.f32 %v1587, 0.0
        %v1608 = vmax.f32 %v1588, 0.0
        %v1609 = vperm.slane %v802, 1
        %v1610 = vmul.f32 %v1609, %v1589
        %v1611 = vmul.f32 %v1609, %v1590
        %v1612 = vmul.f32 %v1609, %v1591
        %v1613 = vmul.f32 %v1609, %v1592
        %v1614 = vmul.f32 %v1609, %v1593
        %v1615 = vmul.f32 %v1609, %v1594
        %v1616 = vmul.f32 %v1609, %v1595
        %v1617 = vmul.f32 %v1609, %v1596
        %v1618 = vmul.f32 %v1609, %v1597
        %v1619 = vmul.f32 %v1609, %v1598
        %v1620 = vmul.f32 %v1609, %v1599
        %v1621 = vmul.f32 %v1609, %v1600
        %v1622 = vmul.f32 %v1609, %v1601
        %v1623 = vmul.f32 %v1609, %v1602
        %v1624 = vmul.f32 %v1609, %v1603
        %v1625 = vmul.f32 %v1609, %v1604
        %v1626 = vmul.f32 %v1609, %v1605
        %v1627 = vmul.f32 %v1609, %v1606
        %v1628 = vmul.f32 %v1609, %v1607
        %v1629 = vmul.f32 %v1609, %v1608
        %v1630 = vadd.f32 %v1527, %v1610
        %v1631 = vadd.f32 %v1528, %v1611
        %v1632 = vadd.f32 %v1529, %v1612
        %v1633 = vadd.f32 %v1530, %v1613
        %v1634 = vadd.f32 %v1531, %v1614
        %v1635 = vadd.f32 %v1532, %v1615
        %v1636 = vadd.f32 %v1533, %v1616
        %v1637 = vadd.f32 %v1534, %v1617
        %v1638 = vadd.f32 %v1535, %v1618
        %v1639 = vadd.f32 %v1536, %v1619
        %v1640 = vadd.f32 %v1537, %v1620
        %v1641 = vadd.f32 %v1538, %v1621
        %v1642 = vadd.f32 %v1539, %v1622
        %v1643 = vadd.f32 %v1540, %v1623
        %v1644 = vadd.f32 %v1541, %v1624
        %v1645 = vadd.f32 %v1542, %v1625
        %v1646 = vadd.f32 %v1543, %v1626
        %v1647 = vadd.f32 %v1544, %v1627
        %v1648 = vadd.f32 %v1545, %v1628
        %v1649 = vadd.f32 %v1546, %v1629
        %v1650 = vperm.slane %v803, 1
        %v1651 = vadd.f32 %v1630, %v1650
        %v1652 = vadd.f32 %v1631, %v1650
        %v1653 = vadd.f32 %v1632, %v1650
        %v1654 = vadd.f32 %v1633, %v1650
        %v1655 = vadd.f32 %v1634, %v1650
        %v1656 = vadd.f32 %v1635, %v1650
        %v1657 = vadd.f32 %v1636, %v1650
        %v1658 = vadd.f32 %v1637, %v1650
        %v1659 = vadd.f32 %v1638, %v1650
        %v1660 = vadd.f32 %v1639, %v1650
        %v1661 = vadd.f32 %v1640, %v1650
        %v1662 = vadd.f32 %v1641, %v1650
        %v1663 = vadd.f32 %v1642, %v1650
        %v1664 = vadd.f32 %v1643, %v1650
        %v1665 = vadd.f32 %v1644, %v1650
        %v1666 = vadd.f32 %v1645, %v1650
        %v1667 = vadd.f32 %v1646, %v1650
        %v1668 = vadd.f32 %v1647, %v1650
        %v1669 = vadd.f32 %v1648, %v1650
        %v1670 = vadd.f32 %v1649, %v1650
        %v1671 = vadd.f32 %v1217, %v1651
        %v1672 = vadd.f32 %v1218, %v1652
        %v1673 = vadd.f32 %v1219, %v1653
        %v1674 = vadd.f32 %v1220, %v1654
        %v1675 = vadd.f32 %v1221, %v1655
        %v1676 = vadd.f32 %v1222, %v1656
        %v1677 = vadd.f32 %v1223, %v1657
        %v1678 = vadd.f32 %v1224, %v1658
        %v1679 = vadd.f32 %v1225, %v1659
        %v1680 = vadd.f32 %v1226, %v1660
        %v1681 = vadd.f32 %v1227, %v1661
        %v1682 = vadd.f32 %v1228, %v1662
        %v1683 = vadd.f32 %v1229, %v1663
        %v1684 = vadd.f32 %v1230, %v1664
        %v1685 = vadd.f32 %v1231, %v1665
        %v1686 = vadd.f32 %v1232, %v1666
        %v1687 = vadd.f32 %v1233, %v1667
        %v1688 = vadd.f32 %v1234, %v1668
        %v1689 = vadd.f32 %v1235, %v1669
        %v1690 = vadd.f32 %v1236, %v1670
        %s1691 = scalar_lea.vmem %s652, 320 [#allocation3]
        %v1692 = vld [vmem:[%s1691] sm:$0xff]
        %v1693 = vld [vmem:[%s1691 + $0x8] sm:$0xff]
        %v1694 = vld [vmem:[%s1691 + $0x10] sm:$0xff]
        %v1695 = vld [vmem:[%s1691 + $0x18] sm:$0xff]
        %v1696 = vld [vmem:[%s1691 + $0x20] sm:$0xff]
        %v1697 = vld [vmem:[%s1691 + $0x28] sm:$0xff]
        %v1698 = vld [vmem:[%s1691 + $0x30] sm:$0xff]
        %v1699 = vld [vmem:[%s1691 + $0x38] sm:$0xff]
        %v1700 = vld [vmem:[%s1691 + $0x40] sm:$0xff]
        %v1701 = vld [vmem:[%s1691 + $0x48] sm:$0xff]
        %v1702 = vld [vmem:[%s1691 + $0x50] sm:$0xff]
        %v1703 = vld [vmem:[%s1691 + $0x58] sm:$0xff]
        %v1704 = vld [vmem:[%s1691 + $0x60] sm:$0xff]
        %v1705 = vld [vmem:[%s1691 + $0x68] sm:$0xff]
        %v1706 = vld [vmem:[%s1691 + $0x70] sm:$0xff]
        %v1707 = vld [vmem:[%s1691 + $0x78] sm:$0xff]
        %v1708 = vld [vmem:[%s1691 + $0x80] sm:$0xff]
        %v1709 = vld [vmem:[%s1691 + $0x88] sm:$0xff]
        %v1710 = vld [vmem:[%s1691 + $0x90] sm:$0xff]
        %v1711 = vld [vmem:[%s1691 + $0x98] sm:$0xff]
        %v1712 = vperm.slane %v791, 2
        %v1713 = vmul.f32 %v1692, %v1712
        %v1714 = vmul.f32 %v1693, %v1712
        %v1715 = vmul.f32 %v1694, %v1712
        %v1716 = vmul.f32 %v1695, %v1712
        %v1717 = vmul.f32 %v1696, %v1712
        %v1718 = vmul.f32 %v1697, %v1712
        %v1719 = vmul.f32 %v1698, %v1712
        %v1720 = vmul.f32 %v1699, %v1712
        %v1721 = vmul.f32 %v1700, %v1712
        %v1722 = vmul.f32 %v1701, %v1712
        %v1723 = vmul.f32 %v1702, %v1712
        %v1724 = vmul.f32 %v1703, %v1712
        %v1725 = vmul.f32 %v1704, %v1712
        %v1726 = vmul.f32 %v1705, %v1712
        %v1727 = vmul.f32 %v1706, %v1712
        %v1728 = vmul.f32 %v1707, %v1712
        %v1729 = vmul.f32 %v1708, %v1712
        %v1730 = vmul.f32 %v1709, %v1712
        %v1731 = vmul.f32 %v1710, %v1712
        %v1732 = vmul.f32 %v1711, %v1712
        %v1733 = vperm.slane %v795, 2
        %v1734 = vadd.f32 %v1713, %v1733
        %v1735 = vadd.f32 %v1714, %v1733
        %v1736 = vadd.f32 %v1715, %v1733
        %v1737 = vadd.f32 %v1716, %v1733
        %v1738 = vadd.f32 %v1717, %v1733
        %v1739 = vadd.f32 %v1718, %v1733
        %v1740 = vadd.f32 %v1719, %v1733
        %v1741 = vadd.f32 %v1720, %v1733
        %v1742 = vadd.f32 %v1721, %v1733
        %v1743 = vadd.f32 %v1722, %v1733
        %v1744 = vadd.f32 %v1723, %v1733
        %v1745 = vadd.f32 %v1724, %v1733
        %v1746 = vadd.f32 %v1725, %v1733
        %v1747 = vadd.f32 %v1726, %v1733
        %v1748 = vadd.f32 %v1727, %v1733
        %v1749 = vadd.f32 %v1728, %v1733
        %v1750 = vadd.f32 %v1729, %v1733
        %v1751 = vadd.f32 %v1730, %v1733
        %v1752 = vadd.f32 %v1731, %v1733
        %v1753 = vadd.f32 %v1732, %v1733
        %v1754 = vmax.f32 %v1734, 0.0
        %v1755 = vmax.f32 %v1735, 0.0
        %v1756 = vmax.f32 %v1736, 0.0
        %v1757 = vmax.f32 %v1737, 0.0
        %v1758 = vmax.f32 %v1738, 0.0
        %v1759 = vmax.f32 %v1739, 0.0
        %v1760 = vmax.f32 %v1740, 0.0
        %v1761 = vmax.f32 %v1741, 0.0
        %v1762 = vmax.f32 %v1742, 0.0
        %v1763 = vmax.f32 %v1743, 0.0
        %v1764 = vmax.f32 %v1744, 0.0
        %v1765 = vmax.f32 %v1745, 0.0
        %v1766 = vmax.f32 %v1746, 0.0
        %v1767 = vmax.f32 %v1747, 0.0
        %v1768 = vmax.f32 %v1748, 0.0
        %v1769 = vmax.f32 %v1749, 0.0
        %v1770 = vmax.f32 %v1750, 0.0
        %v1771 = vmax.f32 %v1751, 0.0
        %v1772 = vmax.f32 %v1752, 0.0
        %v1773 = vmax.f32 %v1753, 0.0
        %v1774 = vperm.slane %v799, 2
        %v1775 = vmul.f32 %v1774, %v1754
        %v1776 = vmul.f32 %v1774, %v1755
        %v1777 = vmul.f32 %v1774, %v1756
        %v1778 = vmul.f32 %v1774, %v1757
        %v1779 = vmul.f32 %v1774, %v1758
        %v1780 = vmul.f32 %v1774, %v1759
        %v1781 = vmul.f32 %v1774, %v1760
        %v1782 = vmul.f32 %v1774, %v1761
        %v1783 = vmul.f32 %v1774, %v1762
        %v1784 = vmul.f32 %v1774, %v1763
        %v1785 = vmul.f32 %v1774, %v1764
        %v1786 = vmul.f32 %v1774, %v1765
        %v1787 = vmul.f32 %v1774, %v1766
        %v1788 = vmul.f32 %v1774, %v1767
        %v1789 = vmul.f32 %v1774, %v1768
        %v1790 = vmul.f32 %v1774, %v1769
        %v1791 = vmul.f32 %v1774, %v1770
        %v1792 = vmul.f32 %v1774, %v1771
        %v1793 = vmul.f32 %v1774, %v1772
        %v1794 = vmul.f32 %v1774, %v1773
        %v1795 = vperm.slane %v792, 2
        %v1796 = vmul.f32 %v1692, %v1795
        %v1797 = vmul.f32 %v1693, %v1795
        %v1798 = vmul.f32 %v1694, %v1795
        %v1799 = vmul.f32 %v1695, %v1795
        %v1800 = vmul.f32 %v1696, %v1795
        %v1801 = vmul.f32 %v1697, %v1795
        %v1802 = vmul.f32 %v1698, %v1795
        %v1803 = vmul.f32 %v1699, %v1795
        %v1804 = vmul.f32 %v1700, %v1795
        %v1805 = vmul.f32 %v1701, %v1795
        %v1806 = vmul.f32 %v1702, %v1795
        %v1807 = vmul.f32 %v1703, %v1795
        %v1808 = vmul.f32 %v1704, %v1795
        %v1809 = vmul.f32 %v1705, %v1795
        %v1810 = vmul.f32 %v1706, %v1795
        %v1811 = vmul.f32 %v1707, %v1795
        %v1812 = vmul.f32 %v1708, %v1795
        %v1813 = vmul.f32 %v1709, %v1795
        %v1814 = vmul.f32 %v1710, %v1795
        %v1815 = vmul.f32 %v1711, %v1795
        %v1816 = vperm.slane %v796, 2
        %v1817 = vadd.f32 %v1796, %v1816
        %v1818 = vadd.f32 %v1797, %v1816
        %v1819 = vadd.f32 %v1798, %v1816
        %v1820 = vadd.f32 %v1799, %v1816
        %v1821 = vadd.f32 %v1800, %v1816
        %v1822 = vadd.f32 %v1801, %v1816
        %v1823 = vadd.f32 %v1802, %v1816
        %v1824 = vadd.f32 %v1803, %v1816
        %v1825 = vadd.f32 %v1804, %v1816
        %v1826 = vadd.f32 %v1805, %v1816
        %v1827 = vadd.f32 %v1806, %v1816
        %v1828 = vadd.f32 %v1807, %v1816
        %v1829 = vadd.f32 %v1808, %v1816
        %v1830 = vadd.f32 %v1809, %v1816
        %v1831 = vadd.f32 %v1810, %v1816
        %v1832 = vadd.f32 %v1811, %v1816
        %v1833 = vadd.f32 %v1812, %v1816
        %v1834 = vadd.f32 %v1813, %v1816
        %v1835 = vadd.f32 %v1814, %v1816
        %v1836 = vadd.f32 %v1815, %v1816
        %v1837 = vmax.f32 %v1817, 0.0
        %v1838 = vmax.f32 %v1818, 0.0
        %v1839 = vmax.f32 %v1819, 0.0
        %v1840 = vmax.f32 %v1820, 0.0
        %v1841 = vmax.f32 %v1821, 0.0
        %v1842 = vmax.f32 %v1822, 0.0
        %v1843 = vmax.f32 %v1823, 0.0
        %v1844 = vmax.f32 %v1824, 0.0
        %v1845 = vmax.f32 %v1825, 0.0
        %v1846 = vmax.f32 %v1826, 0.0
        %v1847 = vmax.f32 %v1827, 0.0
        %v1848 = vmax.f32 %v1828, 0.0
        %v1849 = vmax.f32 %v1829, 0.0
        %v1850 = vmax.f32 %v1830, 0.0
        %v1851 = vmax.f32 %v1831, 0.0
        %v1852 = vmax.f32 %v1832, 0.0
        %v1853 = vmax.f32 %v1833, 0.0
        %v1854 = vmax.f32 %v1834, 0.0
        %v1855 = vmax.f32 %v1835, 0.0
        %v1856 = vmax.f32 %v1836, 0.0
        %v1857 = vperm.slane %v800, 2
        %v1858 = vmul.f32 %v1857, %v1837
        %v1859 = vmul.f32 %v1857, %v1838
        %v1860 = vmul.f32 %v1857, %v1839
        %v1861 = vmul.f32 %v1857, %v1840
        %v1862 = vmul.f32 %v1857, %v1841
        %v1863 = vmul.f32 %v1857, %v1842
        %v1864 = vmul.f32 %v1857, %v1843
        %v1865 = vmul.f32 %v1857, %v1844
        %v1866 = vmul.f32 %v1857, %v1845
        %v1867 = vmul.f32 %v1857, %v1846
        %v1868 = vmul.f32 %v1857, %v1847
        %v1869 = vmul.f32 %v1857, %v1848
        %v1870 = vmul.f32 %v1857, %v1849
        %v1871 = vmul.f32 %v1857, %v1850
        %v1872 = vmul.f32 %v1857, %v1851
        %v1873 = vmul.f32 %v1857, %v1852
        %v1874 = vmul.f32 %v1857, %v1853
        %v1875 = vmul.f32 %v1857, %v1854
        %v1876 = vmul.f32 %v1857, %v1855
        %v1877 = vmul.f32 %v1857, %v1856
        %v1878 = vadd.f32 %v1775, %v1858
        %v1879 = vadd.f32 %v1776, %v1859
        %v1880 = vadd.f32 %v1777, %v1860
        %v1881 = vadd.f32 %v1778, %v1861
        %v1882 = vadd.f32 %v1779, %v1862
        %v1883 = vadd.f32 %v1780, %v1863
        %v1884 = vadd.f32 %v1781, %v1864
        %v1885 = vadd.f32 %v1782, %v1865
        %v1886 = vadd.f32 %v1783, %v1866
        %v1887 = vadd.f32 %v1784, %v1867
        %v1888 = vadd.f32 %v1785, %v1868
        %v1889 = vadd.f32 %v1786, %v1869
        %v1890 = vadd.f32 %v1787, %v1870
        %v1891 = vadd.f32 %v1788, %v1871
        %v1892 = vadd.f32 %v1789, %v1872
        %v1893 = vadd.f32 %v1790, %v1873
        %v1894 = vadd.f32 %v1791, %v1874
        %v1895 = vadd.f32 %v1792, %v1875
        %v1896 = vadd.f32 %v1793, %v1876
        %v1897 = vadd.f32 %v1794, %v1877
        %v1898 = vperm.slane %v793, 2
        %v1899 = vmul.f32 %v1692, %v1898
        %v1900 = vmul.f32 %v1693, %v1898
        %v1901 = vmul.f32 %v1694, %v1898
        %v1902 = vmul.f32 %v1695, %v1898
        %v1903 = vmul.f32 %v1696, %v1898
        %v1904 = vmul.f32 %v1697, %v1898
        %v1905 = vmul.f32 %v1698, %v1898
        %v1906 = vmul.f32 %v1699, %v1898
        %v1907 = vmul.f32 %v1700, %v1898
        %v1908 = vmul.f32 %v1701, %v1898
        %v1909 = vmul.f32 %v1702, %v1898
        %v1910 = vmul.f32 %v1703, %v1898
        %v1911 = vmul.f32 %v1704, %v1898
        %v1912 = vmul.f32 %v1705, %v1898
        %v1913 = vmul.f32 %v1706, %v1898
        %v1914 = vmul.f32 %v1707, %v1898
        %v1915 = vmul.f32 %v1708, %v1898
        %v1916 = vmul.f32 %v1709, %v1898
        %v1917 = vmul.f32 %v1710, %v1898
        %v1918 = vmul.f32 %v1711, %v1898
        %v1919 = vperm.slane %v797, 2
        %v1920 = vadd.f32 %v1899, %v1919
        %v1921 = vadd.f32 %v1900, %v1919
        %v1922 = vadd.f32 %v1901, %v1919
        %v1923 = vadd.f32 %v1902, %v1919
        %v1924 = vadd.f32 %v1903, %v1919
        %v1925 = vadd.f32 %v1904, %v1919
        %v1926 = vadd.f32 %v1905, %v1919
        %v1927 = vadd.f32 %v1906, %v1919
        %v1928 = vadd.f32 %v1907, %v1919
        %v1929 = vadd.f32 %v1908, %v1919
        %v1930 = vadd.f32 %v1909, %v1919
        %v1931 = vadd.f32 %v1910, %v1919
        %v1932 = vadd.f32 %v1911, %v1919
        %v1933 = vadd.f32 %v1912, %v1919
        %v1934 = vadd.f32 %v1913, %v1919
        %v1935 = vadd.f32 %v1914, %v1919
        %v1936 = vadd.f32 %v1915, %v1919
        %v1937 = vadd.f32 %v1916, %v1919
        %v1938 = vadd.f32 %v1917, %v1919
        %v1939 = vadd.f32 %v1918, %v1919
        %v1940 = vmax.f32 %v1920, 0.0
        %v1941 = vmax.f32 %v1921, 0.0
        %v1942 = vmax.f32 %v1922, 0.0
        %v1943 = vmax.f32 %v1923, 0.0
        %v1944 = vmax.f32 %v1924, 0.0
        %v1945 = vmax.f32 %v1925, 0.0
        %v1946 = vmax.f32 %v1926, 0.0
        %v1947 = vmax.f32 %v1927, 0.0
        %v1948 = vmax.f32 %v1928, 0.0
        %v1949 = vmax.f32 %v1929, 0.0
        %v1950 = vmax.f32 %v1930, 0.0
        %v1951 = vmax.f32 %v1931, 0.0
        %v1952 = vmax.f32 %v1932, 0.0
        %v1953 = vmax.f32 %v1933, 0.0
        %v1954 = vmax.f32 %v1934, 0.0
        %v1955 = vmax.f32 %v1935, 0.0
        %v1956 = vmax.f32 %v1936, 0.0
        %v1957 = vmax.f32 %v1937, 0.0
        %v1958 = vmax.f32 %v1938, 0.0
        %v1959 = vmax.f32 %v1939, 0.0
        %v1960 = vperm.slane %v801, 2
        %v1961 = vmul.f32 %v1960, %v1940
        %v1962 = vmul.f32 %v1960, %v1941
        %v1963 = vmul.f32 %v1960, %v1942
        %v1964 = vmul.f32 %v1960, %v1943
        %v1965 = vmul.f32 %v1960, %v1944
        %v1966 = vmul.f32 %v1960, %v1945
        %v1967 = vmul.f32 %v1960, %v1946
        %v1968 = vmul.f32 %v1960, %v1947
        %v1969 = vmul.f32 %v1960, %v1948
        %v1970 = vmul.f32 %v1960, %v1949
        %v1971 = vmul.f32 %v1960, %v1950
        %v1972 = vmul.f32 %v1960, %v1951
        %v1973 = vmul.f32 %v1960, %v1952
        %v1974 = vmul.f32 %v1960, %v1953
        %v1975 = vmul.f32 %v1960, %v1954
        %v1976 = vmul.f32 %v1960, %v1955
        %v1977 = vmul.f32 %v1960, %v1956
        %v1978 = vmul.f32 %v1960, %v1957
        %v1979 = vmul.f32 %v1960, %v1958
        %v1980 = vmul.f32 %v1960, %v1959
        %v1981 = vadd.f32 %v1878, %v1961
        %v1982 = vadd.f32 %v1879, %v1962
        %v1983 = vadd.f32 %v1880, %v1963
        %v1984 = vadd.f32 %v1881, %v1964
        %v1985 = vadd.f32 %v1882, %v1965
        %v1986 = vadd.f32 %v1883, %v1966
        %v1987 = vadd.f32 %v1884, %v1967
        %v1988 = vadd.f32 %v1885, %v1968
        %v1989 = vadd.f32 %v1886, %v1969
        %v1990 = vadd.f32 %v1887, %v1970
        %v1991 = vadd.f32 %v1888, %v1971
        %v1992 = vadd.f32 %v1889, %v1972
        %v1993 = vadd.f32 %v1890, %v1973
        %v1994 = vadd.f32 %v1891, %v1974
        %v1995 = vadd.f32 %v1892, %v1975
        %v1996 = vadd.f32 %v1893, %v1976
        %v1997 = vadd.f32 %v1894, %v1977
        %v1998 = vadd.f32 %v1895, %v1978
        %v1999 = vadd.f32 %v1896, %v1979
        %v2000 = vadd.f32 %v1897, %v1980
        %v2001 = vperm.slane %v794, 2
        %v2002 = vmul.f32 %v1692, %v2001
        %v2003 = vmul.f32 %v1693, %v2001
        %v2004 = vmul.f32 %v1694, %v2001
        %v2005 = vmul.f32 %v1695, %v2001
        %v2006 = vmul.f32 %v1696, %v2001
        %v2007 = vmul.f32 %v1697, %v2001
        %v2008 = vmul.f32 %v1698, %v2001
        %v2009 = vmul.f32 %v1699, %v2001
        %v2010 = vmul.f32 %v1700, %v2001
        %v2011 = vmul.f32 %v1701, %v2001
        %v2012 = vmul.f32 %v1702, %v2001
        %v2013 = vmul.f32 %v1703, %v2001
        %v2014 = vmul.f32 %v1704, %v2001
        %v2015 = vmul.f32 %v1705, %v2001
        %v2016 = vmul.f32 %v1706, %v2001
        %v2017 = vmul.f32 %v1707, %v2001
        %v2018 = vmul.f32 %v1708, %v2001
        %v2019 = vmul.f32 %v1709, %v2001
        %v2020 = vmul.f32 %v1710, %v2001
        %v2021 = vmul.f32 %v1711, %v2001
        %v2022 = vperm.slane %v798, 2
        %v2023 = vadd.f32 %v2002, %v2022
        %v2024 = vadd.f32 %v2003, %v2022
        %v2025 = vadd.f32 %v2004, %v2022
        %v2026 = vadd.f32 %v2005, %v2022
        %v2027 = vadd.f32 %v2006, %v2022
        %v2028 = vadd.f32 %v2007, %v2022
        %v2029 = vadd.f32 %v2008, %v2022
        %v2030 = vadd.f32 %v2009, %v2022
        %v2031 = vadd.f32 %v2010, %v2022
        %v2032 = vadd.f32 %v2011, %v2022
        %v2033 = vadd.f32 %v2012, %v2022
        %v2034 = vadd.f32 %v2013, %v2022
        %v2035 = vadd.f32 %v2014, %v2022
        %v2036 = vadd.f32 %v2015, %v2022
        %v2037 = vadd.f32 %v2016, %v2022
        %v2038 = vadd.f32 %v2017, %v2022
        %v2039 = vadd.f32 %v2018, %v2022
        %v2040 = vadd.f32 %v2019, %v2022
        %v2041 = vadd.f32 %v2020, %v2022
        %v2042 = vadd.f32 %v2021, %v2022
        %v2043 = vmax.f32 %v2023, 0.0
        %v2044 = vmax.f32 %v2024, 0.0
        %v2045 = vmax.f32 %v2025, 0.0
        %v2046 = vmax.f32 %v2026, 0.0
        %v2047 = vmax.f32 %v2027, 0.0
        %v2048 = vmax.f32 %v2028, 0.0
        %v2049 = vmax.f32 %v2029, 0.0
        %v2050 = vmax.f32 %v2030, 0.0
        %v2051 = vmax.f32 %v2031, 0.0
        %v2052 = vmax.f32 %v2032, 0.0
        %v2053 = vmax.f32 %v2033, 0.0
        %v2054 = vmax.f32 %v2034, 0.0
        %v2055 = vmax.f32 %v2035, 0.0
        %v2056 = vmax.f32 %v2036, 0.0
        %v2057 = vmax.f32 %v2037, 0.0
        %v2058 = vmax.f32 %v2038, 0.0
        %v2059 = vmax.f32 %v2039, 0.0
        %v2060 = vmax.f32 %v2040, 0.0
        %v2061 = vmax.f32 %v2041, 0.0
        %v2062 = vmax.f32 %v2042, 0.0
        %v2063 = vperm.slane %v802, 2
        %v2064 = vmul.f32 %v2063, %v2043
        %v2065 = vmul.f32 %v2063, %v2044
        %v2066 = vmul.f32 %v2063, %v2045
        %v2067 = vmul.f32 %v2063, %v2046
        %v2068 = vmul.f32 %v2063, %v2047
        %v2069 = vmul.f32 %v2063, %v2048
        %v2070 = vmul.f32 %v2063, %v2049
        %v2071 = vmul.f32 %v2063, %v2050
        %v2072 = vmul.f32 %v2063, %v2051
        %v2073 = vmul.f32 %v2063, %v2052
        %v2074 = vmul.f32 %v2063, %v2053
        %v2075 = vmul.f32 %v2063, %v2054
        %v2076 = vmul.f32 %v2063, %v2055
        %v2077 = vmul.f32 %v2063, %v2056
        %v2078 = vmul.f32 %v2063, %v2057
        %v2079 = vmul.f32 %v2063, %v2058
        %v2080 = vmul.f32 %v2063, %v2059
        %v2081 = vmul.f32 %v2063, %v2060
        %v2082 = vmul.f32 %v2063, %v2061
        %v2083 = vmul.f32 %v2063, %v2062
        %v2084 = vadd.f32 %v1981, %v2064
        %v2085 = vadd.f32 %v1982, %v2065
        %v2086 = vadd.f32 %v1983, %v2066
        %v2087 = vadd.f32 %v1984, %v2067
        %v2088 = vadd.f32 %v1985, %v2068
        %v2089 = vadd.f32 %v1986, %v2069
        %v2090 = vadd.f32 %v1987, %v2070
        %v2091 = vadd.f32 %v1988, %v2071
        %v2092 = vadd.f32 %v1989, %v2072
        %v2093 = vadd.f32 %v1990, %v2073
        %v2094 = vadd.f32 %v1991, %v2074
        %v2095 = vadd.f32 %v1992, %v2075
        %v2096 = vadd.f32 %v1993, %v2076
        %v2097 = vadd.f32 %v1994, %v2077
        %v2098 = vadd.f32 %v1995, %v2078
        %v2099 = vadd.f32 %v1996, %v2079
        %v2100 = vadd.f32 %v1997, %v2080
        %v2101 = vadd.f32 %v1998, %v2081
        %v2102 = vadd.f32 %v1999, %v2082
        %v2103 = vadd.f32 %v2000, %v2083
        %v2104 = vperm.slane %v803, 2
        %v2105 = vadd.f32 %v2084, %v2104
        %v2106 = vadd.f32 %v2085, %v2104
        %v2107 = vadd.f32 %v2086, %v2104
        %v2108 = vadd.f32 %v2087, %v2104
        %v2109 = vadd.f32 %v2088, %v2104
        %v2110 = vadd.f32 %v2089, %v2104
        %v2111 = vadd.f32 %v2090, %v2104
        %v2112 = vadd.f32 %v2091, %v2104
        %v2113 = vadd.f32 %v2092, %v2104
        %v2114 = vadd.f32 %v2093, %v2104
        %v2115 = vadd.f32 %v2094, %v2104
        %v2116 = vadd.f32 %v2095, %v2104
        %v2117 = vadd.f32 %v2096, %v2104
        %v2118 = vadd.f32 %v2097, %v2104
        %v2119 = vadd.f32 %v2098, %v2104
        %v2120 = vadd.f32 %v2099, %v2104
        %v2121 = vadd.f32 %v2100, %v2104
        %v2122 = vadd.f32 %v2101, %v2104
        %v2123 = vadd.f32 %v2102, %v2104
        %v2124 = vadd.f32 %v2103, %v2104
        %v2125 = vadd.f32 %v1671, %v2105
        %v2126 = vadd.f32 %v1672, %v2106
        %v2127 = vadd.f32 %v1673, %v2107
        %v2128 = vadd.f32 %v1674, %v2108
        %v2129 = vadd.f32 %v1675, %v2109
        %v2130 = vadd.f32 %v1676, %v2110
        %v2131 = vadd.f32 %v1677, %v2111
        %v2132 = vadd.f32 %v1678, %v2112
        %v2133 = vadd.f32 %v1679, %v2113
        %v2134 = vadd.f32 %v1680, %v2114
        %v2135 = vadd.f32 %v1681, %v2115
        %v2136 = vadd.f32 %v1682, %v2116
        %v2137 = vadd.f32 %v1683, %v2117
        %v2138 = vadd.f32 %v1684, %v2118
        %v2139 = vadd.f32 %v1685, %v2119
        %v2140 = vadd.f32 %v1686, %v2120
        %v2141 = vadd.f32 %v1687, %v2121
        %v2142 = vadd.f32 %v1688, %v2122
        %v2143 = vadd.f32 %v1689, %v2123
        %v2144 = vadd.f32 %v1690, %v2124
        %v2145 = vld [vmem:[%s759] sm:$0x1]
        %v2147 = vperm.slane %v2145, 0
        %v2149 = vadd.f32 %v2125, %v2147
        %v2150 = vadd.f32 %v2126, %v2147
        %v2151 = vadd.f32 %v2127, %v2147
        %v2152 = vadd.f32 %v2128, %v2147
        %v2153 = vadd.f32 %v2129, %v2147
        %v2154 = vadd.f32 %v2130, %v2147
        %v2155 = vadd.f32 %v2131, %v2147
        %v2156 = vadd.f32 %v2132, %v2147
        %v2157 = vadd.f32 %v2133, %v2147
        %v2158 = vadd.f32 %v2134, %v2147
        %v2159 = vadd.f32 %v2135, %v2147
        %v2160 = vadd.f32 %v2136, %v2147
        %v2161 = vadd.f32 %v2137, %v2147
        %v2162 = vadd.f32 %v2138, %v2147
        %v2163 = vadd.f32 %v2139, %v2147
        %v2164 = vadd.f32 %v2140, %v2147
        %v2165 = vadd.f32 %v2141, %v2147
        %v2166 = vadd.f32 %v2142, %v2147
        %v2167 = vadd.f32 %v2143, %v2147
        %v2168 = vadd.f32 %v2144, %v2147
        %v2169 = vld [vmem:[#allocation2] sm:$0xff]
        %v2170 = vld [vmem:[#allocation2 + $0x8] sm:$0xff]
        %v2171 = vld [vmem:[#allocation2 + $0x10] sm:$0xff]
        %v2172 = vld [vmem:[#allocation2 + $0x18] sm:$0xff]
        %v2173 = vld [vmem:[#allocation2 + $0x20] sm:$0xff]
        %v2174 = vld [vmem:[#allocation2 + $0x28] sm:$0xff]
        %v2175 = vld [vmem:[#allocation2 + $0x30] sm:$0xff]
        %v2176 = vld [vmem:[#allocation2 + $0x38] sm:$0xff]
        %v2177 = vld [vmem:[#allocation2 + $0x40] sm:$0xff]
        %v2178 = vld [vmem:[#allocation2 + $0x48] sm:$0xff]
        %v2179 = vld [vmem:[#allocation2 + $0x50] sm:$0xff]
        %v2180 = vld [vmem:[#allocation2 + $0x58] sm:$0xff]
        %v2181 = vld [vmem:[#allocation2 + $0x60] sm:$0xff]
        %v2182 = vld [vmem:[#allocation2 + $0x68] sm:$0xff]
        %v2183 = vld [vmem:[#allocation2 + $0x70] sm:$0xff]
        %v2184 = vld [vmem:[#allocation2 + $0x78] sm:$0xff]
        %v2185 = vld [vmem:[#allocation2 + $0x80] sm:$0xff]
        %v2186 = vld [vmem:[#allocation2 + $0x88] sm:$0xff]
        %v2187 = vld [vmem:[#allocation2 + $0x90] sm:$0xff]
        %v2188 = vld [vmem:[#allocation2 + $0x98] sm:$0xff]
        %v2189 = vpack.c.bf16 %v2150, %v2149
        %v2190 = vpack.c.bf16 %v2152, %v2151
        %v2191 = vpack.c.bf16 %v2154, %v2153
        %v2192 = vpack.c.bf16 %v2156, %v2155
        %v2193 = vpack.c.bf16 %v2158, %v2157
        %v2194 = vpack.c.bf16 %v2160, %v2159
        %v2195 = vpack.c.bf16 %v2162, %v2161
        %v2196 = vpack.c.bf16 %v2164, %v2163
        %v2197 = vpack.c.bf16 %v2166, %v2165
        %v2198 = vpack.c.bf16 %v2168, %v2167
        %v2199 = vld [vmem:[%s683] sm:$0xf]
        %v2200 = vld [vmem:[%s683 + $0x4] sm:$0xf]
        %v2201 = vld [vmem:[%s683 + $0x8] sm:$0xf]
        %v2202 = vld [vmem:[%s683 + $0xc] sm:$0xf]
        %v2203 = vld [vmem:[%s683 + $0x10] sm:$0xf]
        %v2204 = vld [vmem:[%s683 + $0x14] sm:$0xf]
        %v2205 = vld [vmem:[%s683 + $0x18] sm:$0xf]
        %v2206 = vld [vmem:[%s683 + $0x1c] sm:$0xf]
        %v2207 = vld [vmem:[%s683 + $0x20] sm:$0xf]
        %v2208 = vld [vmem:[%s683 + $0x24] sm:$0xf]
        %v2209 = vld [vmem:[%s683 + $0x28] sm:$0xf]
        %v2210 = vld [vmem:[%s683 + $0x2c] sm:$0xf]
        %v2211 = vld [vmem:[%s683 + $0x30] sm:$0xf]
        %v2212 = vld [vmem:[%s683 + $0x34] sm:$0xf]
        %v2213 = vld [vmem:[%s683 + $0x38] sm:$0xf]
        %v2214 = vld [vmem:[%s683 + $0x3c] sm:$0xf]
        %v2231 = vunpack.c.l.b16 %v2199
        %v2232 = vunpack.c.l.b16 %v2200
        %v2233 = vunpack.c.l.b16 %v2201
        %v2234 = vunpack.c.l.b16 %v2202
        %v2235 = vunpack.c.l.b16 %v2203
        %v2236 = vunpack.c.l.b16 %v2204
        %v2237 = vunpack.c.l.b16 %v2205
        %v2238 = vunpack.c.l.b16 %v2206
        %v2239 = vunpack.c.l.b16 %v2207
        %v2240 = vunpack.c.l.b16 %v2208
        %v2241 = vunpack.c.l.b16 %v2209
        %v2242 = vunpack.c.l.b16 %v2210
        %v2243 = vunpack.c.l.b16 %v2211
        %v2244 = vunpack.c.l.b16 %v2212
        %v2245 = vunpack.c.l.b16 %v2213
        %v2246 = vunpack.c.l.b16 %v2214
        %v2247 = vpack.c.b16 %v2232, %v2231
        %v2248 = vpack.c.b16 %v2234, %v2233
        %v2249 = vpack.c.b16 %v2236, %v2235
        %v2250 = vpack.c.b16 %v2238, %v2237
        %v2251 = vpack.c.b16 %v2240, %v2239
        %v2252 = vpack.c.b16 %v2242, %v2241
        %v2253 = vpack.c.b16 %v2244, %v2243
        %v2254 = vpack.c.b16 %v2246, %v2245
        %2263 = vmatpush.bf16.msra.mxu0 %v2254
        %2264 = vmatpush.bf16.msra.mxu0 %v2253
        %2265 = vmatpush.bf16.msra.mxu0 %v2252
        %2266 = vmatpush.bf16.msra.mxu0 %v2251
        %2267 = vmatpush.bf16.msra.mxu0 %v2250
        %2268 = vmatpush.bf16.msra.mxu0 %v2249
        %2269 = vmatpush.bf16.msra.mxu0 %v2248
        %2270 = vmatpush.bf16.msra.mxu0 %v2247
        %2271 = vmatmul.bf16.gmra.mxu0 %v2189
        %v2272 = vpop.f32.mrf.mxu0
        %v2273 = vadd.f32 0.0, %v2272
        %v2274 = vpop.f32.mrf.mxu0
        %v2275 = vadd.f32 0.0, %v2274
        %2276 = vmatmul.bf16.gmra.mxu0 %v2190
        %v2277 = vpop.f32.mrf.mxu0
        %v2278 = vadd.f32 0.0, %v2277
        %v2279 = vpop.f32.mrf.mxu0
        %v2280 = vadd.f32 0.0, %v2279
        %2281 = vmatmul.bf16.gmra.mxu0 %v2191
        %v2282 = vpop.f32.mrf.mxu0
        %v2283 = vadd.f32 0.0, %v2282
        %v2284 = vpop.f32.mrf.mxu0
        %v2285 = vadd.f32 0.0, %v2284
        %2286 = vmatmul.bf16.gmra.mxu0 %v2192
        %v2287 = vpop.f32.mrf.mxu0
        %v2288 = vadd.f32 0.0, %v2287
        %v2289 = vpop.f32.mrf.mxu0
        %v2290 = vadd.f32 0.0, %v2289
        %2291 = vmatmul.bf16.gmra.mxu0 %v2193
        %v2292 = vpop.f32.mrf.mxu0
        %v2293 = vadd.f32 0.0, %v2292
        %v2294 = vpop.f32.mrf.mxu0
        %v2295 = vadd.f32 0.0, %v2294
        %2296 = vmatmul.bf16.gmra.mxu0 %v2194
        %v2297 = vpop.f32.mrf.mxu0
        %v2298 = vadd.f32 0.0, %v2297
        %v2299 = vpop.f32.mrf.mxu0
        %v2300 = vadd.f32 0.0, %v2299
        %2301 = vmatmul.bf16.gmra.mxu0 %v2195
        %v2302 = vpop.f32.mrf.mxu0
        %v2303 = vadd.f32 0.0, %v2302
        %v2304 = vpop.f32.mrf.mxu0
        %v2305 = vadd.f32 0.0, %v2304
        %2306 = vmatmul.bf16.gmra.mxu0 %v2196
        %v2307 = vpop.f32.mrf.mxu0
        %v2308 = vadd.f32 0.0, %v2307
        %v2309 = vpop.f32.mrf.mxu0
        %v2310 = vadd.f32 0.0, %v2309
        %2311 = vmatmul.bf16.gmra.mxu0 %v2197
        %v2312 = vpop.f32.mrf.mxu0
        %v2313 = vadd.f32 0.0, %v2312
        %v2314 = vpop.f32.mrf.mxu0
        %v2315 = vadd.f32 0.0, %v2314
        %2316 = vmatmul.bf16.gmra.mxu0 %v2198
        %v2317 = vpop.f32.mrf.mxu0
        %v2318 = vadd.f32 0.0, %v2317
        %v2319 = vpop.f32.mrf.mxu0
        %v2320 = vadd.f32 0.0, %v2319
        %2321 = vdwg.mxu0
        %v2322 = vadd.f32 %v2169, %v2273
        %v2323 = vadd.f32 %v2170, %v2275
        %v2324 = vadd.f32 %v2171, %v2278
        %v2325 = vadd.f32 %v2172, %v2280
        %v2326 = vadd.f32 %v2173, %v2283
        %v2327 = vadd.f32 %v2174, %v2285
        %v2328 = vadd.f32 %v2175, %v2288
        %v2329 = vadd.f32 %v2176, %v2290
        %v2330 = vadd.f32 %v2177, %v2293
        %v2331 = vadd.f32 %v2178, %v2295
        %v2332 = vadd.f32 %v2179, %v2298
        %v2333 = vadd.f32 %v2180, %v2300
        %v2334 = vadd.f32 %v2181, %v2303
        %v2335 = vadd.f32 %v2182, %v2305
        %v2336 = vadd.f32 %v2183, %v2308
        %v2337 = vadd.f32 %v2184, %v2310
        %v2338 = vadd.f32 %v2185, %v2313
        %v2339 = vadd.f32 %v2186, %v2315
        %v2340 = vadd.f32 %v2187, %v2318
        %v2341 = vadd.f32 %v2188, %v2320
        %2342 = vst [vmem:[#allocation2] sm:$0xff] %v2322
        %2343 = vst [vmem:[#allocation2 + $0x8] sm:$0xff] %v2323
        %2344 = vst [vmem:[#allocation2 + $0x10] sm:$0xff] %v2324
        %2345 = vst [vmem:[#allocation2 + $0x18] sm:$0xff] %v2325
        %2346 = vst [vmem:[#allocation2 + $0x20] sm:$0xff] %v2326
        %2347 = vst [vmem:[#allocation2 + $0x28] sm:$0xff] %v2327
        %2348 = vst [vmem:[#allocation2 + $0x30] sm:$0xff] %v2328
        %2349 = vst [vmem:[#allocation2 + $0x38] sm:$0xff] %v2329
        %2350 = vst [vmem:[#allocation2 + $0x40] sm:$0xff] %v2330
        %2351 = vst [vmem:[#allocation2 + $0x48] sm:$0xff] %v2331
        %2352 = vst [vmem:[#allocation2 + $0x50] sm:$0xff] %v2332
        %2353 = vst [vmem:[#allocation2 + $0x58] sm:$0xff] %v2333
        %2354 = vst [vmem:[#allocation2 + $0x60] sm:$0xff] %v2334
        %2355 = vst [vmem:[#allocation2 + $0x68] sm:$0xff] %v2335
        %2356 = vst [vmem:[#allocation2 + $0x70] sm:$0xff] %v2336
        %2357 = vst [vmem:[#allocation2 + $0x78] sm:$0xff] %v2337
        %2358 = vst [vmem:[#allocation2 + $0x80] sm:$0xff] %v2338
        %2359 = vst [vmem:[#allocation2 + $0x88] sm:$0xff] %v2339
        %2360 = vst [vmem:[#allocation2 + $0x90] sm:$0xff] %v2340
        %2361 = vst [vmem:[#allocation2 + $0x98] sm:$0xff] %v2341
        %p2362 = scmp.eq.s32.totalorder %s33, 1
        // Predicated region
        $region204: #{tpu_custom_call.1} parent=174 // pred_check
          %p2363 = pneg %p2362
        $region205: #{tpu_custom_call.1} parent=174 // pred_check_branch
          %2365 = sbr.rel (%p2363) target = $region207
        $region206: #{tpu_custom_call.1} parent=174 // pred_region
          %v2366 = vld [vmem:[#allocation2] sm:$0xff]
          %v2367 = vld [vmem:[#allocation2 + $0x8] sm:$0xff]
          %v2368 = vld [vmem:[#allocation2 + $0x10] sm:$0xff]
          %v2369 = vld [vmem:[#allocation2 + $0x18] sm:$0xff]
          %v2370 = vld [vmem:[#allocation2 + $0x20] sm:$0xff]
          %v2371 = vld [vmem:[#allocation2 + $0x28] sm:$0xff]
          %v2372 = vld [vmem:[#allocation2 + $0x30] sm:$0xff]
          %v2373 = vld [vmem:[#allocation2 + $0x38] sm:$0xff]
          %v2374 = vld [vmem:[#allocation2 + $0x40] sm:$0xff]
          %v2375 = vld [vmem:[#allocation2 + $0x48] sm:$0xff]
          %v2376 = vld [vmem:[#allocation2 + $0x50] sm:$0xff]
          %v2377 = vld [vmem:[#allocation2 + $0x58] sm:$0xff]
          %v2378 = vld [vmem:[#allocation2 + $0x60] sm:$0xff]
          %v2379 = vld [vmem:[#allocation2 + $0x68] sm:$0xff]
          %v2380 = vld [vmem:[#allocation2 + $0x70] sm:$0xff]
          %v2381 = vld [vmem:[#allocation2 + $0x78] sm:$0xff]
          %v2382 = vld [vmem:[#allocation2 + $0x80] sm:$0xff]
          %v2383 = vld [vmem:[#allocation2 + $0x88] sm:$0xff]
          %v2384 = vld [vmem:[#allocation2 + $0x90] sm:$0xff]
          %v2385 = vld [vmem:[#allocation2 + $0x98] sm:$0xff]
          %v2386 = vld [vmem:[%s7] sm:$0x1]
          %v2388 = vperm.slane %v2386, 0
          %v2390 = vadd.f32 %v2366, %v2388
          %v2391 = vadd.f32 %v2367, %v2388
          %v2392 = vadd.f32 %v2368, %v2388
          %v2393 = vadd.f32 %v2369, %v2388
          %v2394 = vadd.f32 %v2370, %v2388
          %v2395 = vadd.f32 %v2371, %v2388
          %v2396 = vadd.f32 %v2372, %v2388
          %v2397 = vadd.f32 %v2373, %v2388
          %v2398 = vadd.f32 %v2374, %v2388
          %v2399 = vadd.f32 %v2375, %v2388
          %v2400 = vadd.f32 %v2376, %v2388
          %v2401 = vadd.f32 %v2377, %v2388
          %v2402 = vadd.f32 %v2378, %v2388
          %v2403 = vadd.f32 %v2379, %v2388
          %v2404 = vadd.f32 %v2380, %v2388
          %v2405 = vadd.f32 %v2381, %v2388
          %v2406 = vadd.f32 %v2382, %v2388
          %v2407 = vadd.f32 %v2383, %v2388
          %v2408 = vadd.f32 %v2384, %v2388
          %v2409 = vadd.f32 %v2385, %v2388
          %v2410 = vmax.f32 %v2390, 0.0
          %v2411 = vmax.f32 %v2391, 0.0
          %v2412 = vmax.f32 %v2392, 0.0
          %v2413 = vmax.f32 %v2393, 0.0
          %v2414 = vmax.f32 %v2394, 0.0
          %v2415 = vmax.f32 %v2395, 0.0
          %v2416 = vmax.f32 %v2396, 0.0
          %v2417 = vmax.f32 %v2397, 0.0
          %v2418 = vmax.f32 %v2398, 0.0
          %v2419 = vmax.f32 %v2399, 0.0
          %v2420 = vmax.f32 %v2400, 0.0
          %v2421 = vmax.f32 %v2401, 0.0
          %v2422 = vmax.f32 %v2402, 0.0
          %v2423 = vmax.f32 %v2403, 0.0
          %v2424 = vmax.f32 %v2404, 0.0
          %v2425 = vmax.f32 %v2405, 0.0
          %v2426 = vmax.f32 %v2406, 0.0
          %v2427 = vmax.f32 %v2407, 0.0
          %v2428 = vmax.f32 %v2408, 0.0
          %v2429 = vmax.f32 %v2409, 0.0
          %v2430 = vld [vmem:[#allocation10] sm:$0xff]
          %v2431 = vld [vmem:[#allocation10 + $0x8] sm:$0xff]
          %v2432 = vld [vmem:[#allocation10 + $0x10] sm:$0xff]
          %v2433 = vld [vmem:[#allocation10 + $0x18] sm:$0xff]
          %v2434 = vld [vmem:[#allocation10 + $0x20] sm:$0xff]
          %v2435 = vld [vmem:[#allocation10 + $0x28] sm:$0xff]
          %v2436 = vld [vmem:[#allocation10 + $0x30] sm:$0xff]
          %v2437 = vld [vmem:[#allocation10 + $0x38] sm:$0xff]
          %v2438 = vld [vmem:[#allocation10 + $0x40] sm:$0xff]
          %v2439 = vld [vmem:[#allocation10 + $0x48] sm:$0xff]
          %v2440 = vld [vmem:[#allocation10 + $0x50] sm:$0xff]
          %v2441 = vld [vmem:[#allocation10 + $0x58] sm:$0xff]
          %v2442 = vld [vmem:[#allocation10 + $0x60] sm:$0xff]
          %v2443 = vld [vmem:[#allocation10 + $0x68] sm:$0xff]
          %v2444 = vld [vmem:[#allocation10 + $0x70] sm:$0xff]
          %v2445 = vld [vmem:[#allocation10 + $0x78] sm:$0xff]
          %v2446 = vld [vmem:[%s9] sm:$0x1]
          %v2448 = vperm.slane %v2446, 0
          %2450 = vmatpush.msra.mxu0 %v2445
          %2451 = vmatpush.msra.mxu0 %v2444
          %2452 = vmatpush.msra.mxu0 %v2443
          %2453 = vmatpush.msra.mxu0 %v2442
          %2454 = vmatpush.msra.mxu0 %v2441
          %2455 = vmatpush.msra.mxu0 %v2440
          %2456 = vmatpush.msra.mxu0 %v2439
          %2457 = vmatpush.msra.mxu0 %v2438
          %2458 = vmatpush.msra.mxu0 %v2437
          %2459 = vmatpush.msra.mxu0 %v2436
          %2460 = vmatpush.msra.mxu0 %v2435
          %2461 = vmatpush.msra.mxu0 %v2434
          %2462 = vmatpush.msra.mxu0 %v2433
          %2463 = vmatpush.msra.mxu0 %v2432
          %2464 = vmatpush.msra.mxu0 %v2431
          %2465 = vmatpush.msra.mxu0 %v2430
          %2466 = vmatmul.f32.gmra.mxu0 %v2410
          %v2467 = vpop.f32.mrf.mxu0
          %v2468 = vadd.f32 %v2448, %v2467
          %2469 = vmatmul.f32.gmra.mxu0 %v2411
          %v2470 = vpop.f32.mrf.mxu0
          %v2471 = vadd.f32 %v2448, %v2470
          %2472 = vmatmul.f32.gmra.mxu0 %v2412
          %v2473 = vpop.f32.mrf.mxu0
          %v2474 = vadd.f32 %v2448, %v2473
          %2475 = vmatmul.f32.gmra.mxu0 %v2413
          %v2476 = vpop.f32.mrf.mxu0
          %v2477 = vadd.f32 %v2448, %v2476
          %2478 = vmatmul.f32.gmra.mxu0 %v2414
          %v2479 = vpop.f32.mrf.mxu0
          %v2480 = vadd.f32 %v2448, %v2479
          %2481 = vmatmul.f32.gmra.mxu0 %v2415
          %v2482 = vpop.f32.mrf.mxu0
          %v2483 = vadd.f32 %v2448, %v2482
          %2484 = vmatmul.f32.gmra.mxu0 %v2416
          %v2485 = vpop.f32.mrf.mxu0
          %v2486 = vadd.f32 %v2448, %v2485
          %2487 = vmatmul.f32.gmra.mxu0 %v2417
          %v2488 = vpop.f32.mrf.mxu0
          %v2489 = vadd.f32 %v2448, %v2488
          %2490 = vmatmul.f32.gmra.mxu0 %v2418
          %v2491 = vpop.f32.mrf.mxu0
          %v2492 = vadd.f32 %v2448, %v2491
          %2493 = vmatmul.f32.gmra.mxu0 %v2419
          %v2494 = vpop.f32.mrf.mxu0
          %v2495 = vadd.f32 %v2448, %v2494
          %2496 = vmatmul.f32.gmra.mxu0 %v2420
          %v2497 = vpop.f32.mrf.mxu0
          %v2498 = vadd.f32 %v2448, %v2497
          %2499 = vmatmul.f32.gmra.mxu0 %v2421
          %v2500 = vpop.f32.mrf.mxu0
          %v2501 = vadd.f32 %v2448, %v2500
          %2502 = vmatmul.f32.gmra.mxu0 %v2422
          %v2503 = vpop.f32.mrf.mxu0
          %v2504 = vadd.f32 %v2448, %v2503
          %2505 = vmatmul.f32.gmra.mxu0 %v2423
          %v2506 = vpop.f32.mrf.mxu0
          %v2507 = vadd.f32 %v2448, %v2506
          %2508 = vmatmul.f32.gmra.mxu0 %v2424
          %v2509 = vpop.f32.mrf.mxu0
          %v2510 = vadd.f32 %v2448, %v2509
          %2511 = vmatmul.f32.gmra.mxu0 %v2425
          %v2512 = vpop.f32.mrf.mxu0
          %v2513 = vadd.f32 %v2448, %v2512
          %2514 = vmatmul.f32.gmra.mxu0 %v2426
          %v2515 = vpop.f32.mrf.mxu0
          %v2516 = vadd.f32 %v2448, %v2515
          %2517 = vmatmul.f32.gmra.mxu0 %v2427
          %v2518 = vpop.f32.mrf.mxu0
          %v2519 = vadd.f32 %v2448, %v2518
          %2520 = vmatmul.f32.gmra.mxu0 %v2428
          %v2521 = vpop.f32.mrf.mxu0
          %v2522 = vadd.f32 %v2448, %v2521
          %2523 = vmatmul.f32.gmra.mxu0 %v2429
          %v2524 = vpop.f32.mrf.mxu0
          %v2525 = vadd.f32 %v2448, %v2524
          %2526 = vdwg.mxu0
          %v2527 = vmax.f32 %v2468, 0.0
          %v2528 = vmax.f32 %v2471, 0.0
          %v2529 = vmax.f32 %v2474, 0.0
          %v2530 = vmax.f32 %v2477, 0.0
          %v2531 = vmax.f32 %v2480, 0.0
          %v2532 = vmax.f32 %v2483, 0.0
          %v2533 = vmax.f32 %v2486, 0.0
          %v2534 = vmax.f32 %v2489, 0.0
          %v2535 = vmax.f32 %v2492, 0.0
          %v2536 = vmax.f32 %v2495, 0.0
          %v2537 = vmax.f32 %v2498, 0.0
          %v2538 = vmax.f32 %v2501, 0.0
          %v2539 = vmax.f32 %v2504, 0.0
          %v2540 = vmax.f32 %v2507, 0.0
          %v2541 = vmax.f32 %v2510, 0.0
          %v2542 = vmax.f32 %v2513, 0.0
          %v2543 = vmax.f32 %v2516, 0.0
          %v2544 = vmax.f32 %v2519, 0.0
          %v2545 = vmax.f32 %v2522, 0.0
          %v2546 = vmax.f32 %v2525, 0.0
          %v2547 = vld [vmem:[%s10] sm:$0x1]
          %v2549 = vperm.slane %v2547, 0
          %v2551 = vmul.f32 %v2527, %v2549
          %v2552 = vmul.f32 %v2528, %v2549
          %v2553 = vmul.f32 %v2529, %v2549
          %v2554 = vmul.f32 %v2530, %v2549
          %v2555 = vmul.f32 %v2531, %v2549
          %v2556 = vmul.f32 %v2532, %v2549
          %v2557 = vmul.f32 %v2533, %v2549
          %v2558 = vmul.f32 %v2534, %v2549
          %v2559 = vmul.f32 %v2535, %v2549
          %v2560 = vmul.f32 %v2536, %v2549
          %v2561 = vmul.f32 %v2537, %v2549
          %v2562 = vmul.f32 %v2538, %v2549
          %v2563 = vmul.f32 %v2539, %v2549
          %v2564 = vmul.f32 %v2540, %v2549
          %v2565 = vmul.f32 %v2541, %v2549
          %v2566 = vmul.f32 %v2542, %v2549
          %v2567 = vmul.f32 %v2543, %v2549
          %v2568 = vmul.f32 %v2544, %v2549
          %v2569 = vmul.f32 %v2545, %v2549
          %v2570 = vmul.f32 %v2546, %v2549
          %2571 = vadd.xlane.f32.xlu0 %v2551
          %v2572 = vpop.xlane.xlu0 %2571
          %2573 = vadd.xlane.f32.xlu0 %v2552
          %v2574 = vpop.xlane.xlu0 %2573
          %2575 = vadd.xlane.f32.xlu0 %v2553
          %v2576 = vpop.xlane.xlu0 %2575
          %2577 = vadd.xlane.f32.xlu0 %v2554
          %v2578 = vpop.xlane.xlu0 %2577
          %2579 = vadd.xlane.f32.xlu0 %v2555
          %v2580 = vpop.xlane.xlu0 %2579
          %2581 = vadd.xlane.f32.xlu0 %v2556
          %v2582 = vpop.xlane.xlu0 %2581
          %2583 = vadd.xlane.f32.xlu0 %v2557
          %v2584 = vpop.xlane.xlu0 %2583
          %2585 = vadd.xlane.f32.xlu0 %v2558
          %v2586 = vpop.xlane.xlu0 %2585
          %2587 = vadd.xlane.f32.xlu0 %v2559
          %v2588 = vpop.xlane.xlu0 %2587
          %2589 = vadd.xlane.f32.xlu0 %v2560
          %v2590 = vpop.xlane.xlu0 %2589
          %2591 = vadd.xlane.f32.xlu0 %v2561
          %v2592 = vpop.xlane.xlu0 %2591
          %2593 = vadd.xlane.f32.xlu0 %v2562
          %v2594 = vpop.xlane.xlu0 %2593
          %2595 = vadd.xlane.f32.xlu0 %v2563
          %v2596 = vpop.xlane.xlu0 %2595
          %2597 = vadd.xlane.f32.xlu0 %v2564
          %v2598 = vpop.xlane.xlu0 %2597
          %2599 = vadd.xlane.f32.xlu0 %v2565
          %v2600 = vpop.xlane.xlu0 %2599
          %2601 = vadd.xlane.f32.xlu0 %v2566
          %v2602 = vpop.xlane.xlu0 %2601
          %2603 = vadd.xlane.f32.xlu0 %v2567
          %v2604 = vpop.xlane.xlu0 %2603
          %2605 = vadd.xlane.f32.xlu0 %v2568
          %v2606 = vpop.xlane.xlu0 %2605
          %2607 = vadd.xlane.f32.xlu0 %v2569
          %v2608 = vpop.xlane.xlu0 %2607
          %2609 = vadd.xlane.f32.xlu0 %v2570
          %v2610 = vpop.xlane.xlu0 %2609
          %vm2611 = vcmask 7168
          %2612 = vst.msk [vmem:[%s765] sm:$0xff] %vm2611, %v2572
          %2613 = vst.msk [vmem:[%s765 + $0x8] sm:$0xff] %vm2611, %v2574
          %2614 = vst.msk [vmem:[%s765 + $0x10] sm:$0xff] %vm2611, %v2576
          %2615 = vst.msk [vmem:[%s765 + $0x18] sm:$0xff] %vm2611, %v2578
          %2616 = vst.msk [vmem:[%s765 + $0x20] sm:$0xff] %vm2611, %v2580
          %2617 = vst.msk [vmem:[%s765 + $0x28] sm:$0xff] %vm2611, %v2582
          %2618 = vst.msk [vmem:[%s765 + $0x30] sm:$0xff] %vm2611, %v2584
          %2619 = vst.msk [vmem:[%s765 + $0x38] sm:$0xff] %vm2611, %v2586
          %2620 = vst.msk [vmem:[%s765 + $0x40] sm:$0xff] %vm2611, %v2588
          %2621 = vst.msk [vmem:[%s765 + $0x48] sm:$0xff] %vm2611, %v2590
          %2622 = vst.msk [vmem:[%s765 + $0x50] sm:$0xff] %vm2611, %v2592
          %2623 = vst.msk [vmem:[%s765 + $0x58] sm:$0xff] %vm2611, %v2594
          %2624 = vst.msk [vmem:[%s765 + $0x60] sm:$0xff] %vm2611, %v2596
          %2625 = vst.msk [vmem:[%s765 + $0x68] sm:$0xff] %vm2611, %v2598
          %2626 = vst.msk [vmem:[%s765 + $0x70] sm:$0xff] %vm2611, %v2600
          %2627 = vst.msk [vmem:[%s765 + $0x78] sm:$0xff] %vm2611, %v2602
          %2628 = vst.msk [vmem:[%s765 + $0x80] sm:$0xff] %vm2611, %v2604
          %2629 = vst.msk [vmem:[%s765 + $0x88] sm:$0xff] %vm2611, %v2606
          %2630 = vst.msk [vmem:[%s765 + $0x90] sm:$0xff] %vm2611, %v2608
          %2631 = vst.msk [vmem:[%s765 + $0x98] sm:$0xff] %vm2611, %v2610
        $region207: #{tpu_custom_call.1} parent=174 // pred_fallthru
          _
        %s2632 = smul.u32 20, %s32
        %p2633 = scmp.lt.s32.totalorder %s2632, 39
        %s2634 = scalar_select %p2633, %s2632, 39
        %s2635 = smul.addr %s2634, 8
        %s2636 = scalar_lea.vmem %s11, %s2635
        // Predicated region
        $region208: #{tpu_custom_call.1} parent=174 // pred_check
          %p2637 = pneg %p326
        $region209: #{tpu_custom_call.1} parent=174 // pred_check_branch
          %2639 = sbr.rel (%p2637) target = $region211
        $region210: #{tpu_custom_call.1} parent=174 // pred_region
          %s2640 = smul.u32 20, %s32
        $region211: #{tpu_custom_call.1} parent=174 // pred_fallthru
          _
      $region175: #{tpu_custom_call.1} parent=5 // pred_fallthru
        _
      %p2641 = scmp.le.s32.totalorder 2, %s23
      // Predicated region
      $region212: #{tpu_custom_call.1} parent=5 // pred_check
        %p2642 = pneg %p2641
      $region213: #{tpu_custom_call.1} parent=5 // pred_check_branch
        %2644 = sbr.rel (%p2642) target = $region215
      $region214: #{tpu_custom_call.1} parent=5 // pred_region
        %s2645 = ssub.s32 %s23, 2
        // Predicated region
        $region216: #{tpu_custom_call.1} parent=214 // pred_check
          %p2646 = pneg %p332
        $region217: #{tpu_custom_call.1} parent=214 // pred_check_branch
          %2648 = sbr.rel (%p2646) target = $region219
        $region218: #{tpu_custom_call.1} parent=214 // pred_region
          %s2649 = smul.u32 20, %s34
          %p2650 = scmp.lt.s32.totalorder %s2649, 39
          %s2651 = scalar_select %p2650, %s2649, 39
          %s2652 = smul.addr %s2651, 8
          %s2653 = scalar_lea.vmem %s11, %s2652
        $region219: #{tpu_custom_call.1} parent=214 // pred_fallthru
          _
      $region215: #{tpu_custom_call.1} parent=5 // pred_fallthru
        _
    $region6: #{tpu_custom_call.1} parent=1 // loop_footer
      %s27 = sadd.s32 1, %s23
    $region7: #{tpu_custom_call.1} parent=1 // loop_footer_branch
      %22 = sbr.rel target = $region3
    $region8: #{tpu_custom_call.1} parent=1 // loop_exit
      _
    %2654 = vsyncpa [#allocation4], 1
    %s2655 = scalar_lea.sflag [#allocation4], 1
    %2656 = vsyncpa %s2655, 1
    %2657 = vsyncpa [#allocation9], 1
    %s2658 = scalar_lea.sflag [#allocation9], 1
    %2659 = vsyncpa %s2658, 1

</llo_original>
